<compile_context>
chip_gen: v7x
topology: tpu7x:2x2x1
jax: 0.10.0
libtpu: 0.0.40
codegen_flags: <defaults>
</compile_context>

<pallas_src>
import jax
import jax.numpy as jnp
from jax import lax
from jax.experimental import pallas as pl
from jax.experimental.pallas import tpu as pltpu


def _roundup(x, m):
    return (x + m - 1) // m * m


_VMEM_CAP_CACHE = [None]


def _vmem_capacity_bytes():
    """Physical VMEM per TensorCore; conservative 64 MiB fallback (v7x)."""
    if _VMEM_CAP_CACHE[0] is None:
        cap = 64 * 1024 * 1024
        try:
            info = pltpu.get_tpu_info()
            cap = int(getattr(info, "vmem_capacity_bytes", cap)) or cap
        except Exception:
            pass
        _VMEM_CAP_CACHE[0] = cap
    return _VMEM_CAP_CACHE[0]


def _pick_batch_tile(batch, block_bytes_fn, budget):
    """Largest bt dividing batch with block fitting the budget; bt <= batch//2
    so the parallel grid has >= 2 steps (keeps both v7x TensorCores busy)."""
    bt = max(1, batch // 2) if batch >= 2 else 1
    while bt > 1 and (batch % bt or block_bytes_fn(bt) > budget):
        bt -= 1
    return int(bt)


def _vmem_limit(cap, need_bytes):
    lim = int(min(int(0.75 * cap), max(32 * 1024 * 1024, need_bytes + (8 << 20))))
    return int(max(lim, min(cap, need_bytes + (2 << 20))))


# ----------------------------------------------------------------------------
# Kernel 1: fused nearest-2x-upsample + conv3x3 (pad=1, stride=1) + bias
# ----------------------------------------------------------------------------
def _upsample_conv3x3_kernel(x_ref, w_ref, b2_ref, o_ref, xp_ref):
    """One batch tile per grid step.

    x_ref : (bt, H, W, Cin)        unpadded input block
    w_ref : (2, 2, 4*Cin, Cout)    folded sub-pixel weights [a, c, tap*Cin+ci, co]
    b2_ref: (1, 2*Cout)            bias duplicated for both column phases (f32)
    o_ref : (bt, H, 2, W, 2*Cout)  interleaved output:
            o[b, i, a, j, c*Cout+ch] = y[b, 2i+a, 2j+c, ch]
    xp_ref: (bt, H+2, W+2, Cin)    VMEM scratch; 1-px zero halo built here
                                   (replaces the padded HBM copy of the input).
    """
    bt, H, W, Cin = x_ref.shape
    Cout = w_ref.shape[3]
    M = bt * H * W

    # Build the zero halo + copy the block into the padded VMEM scratch.
    zrow = jnp.zeros((bt, 1, W + 2, Cin), dtype=xp_ref.dtype)
    zcol = jnp.zeros((bt, H + 2, 1, Cin), dtype=xp_ref.dtype)
    xp_ref[:, 0:1, :, :] = zrow
    xp_ref[:, H + 1:H + 2, :, :] = zrow
    xp_ref[:, :, 0:1, :] = zcol
    xp_ref[:, :, W + 1:W + 2, :] = zcol
    xp_ref[:, 1:H + 1, 1:W + 1, :] = x_ref[...]

    bias2 = b2_ref[...]                       # (1, 2*Cout), f32
    stack_taps = Cin < 128                    # stacked K only when it helps MXU depth
    taps = [(ky, kx) for ky in range(2) for kx in range(2)]

    for a in range(2):                        # sub-pixel row phase
        cols = []
        for c in range(2):                    # sub-pixel column phase
            if stack_taps:
                patches = [
                    xp_ref[:, a + ky:a + ky + H, c + kx:c + kx + W, :]
                    for ky, kx in taps
                ]
                stacked = jnp.concatenate(patches, axis=-1)      # (bt,H,W,4*Cin)
                acc = jnp.dot(stacked.reshape(M, 4 * Cin), w_ref[a, c],
                              preferred_element_type=jnp.float32)
            else:
                # Cin already fills the MXU: accumulate 4 per-tap dots, no concat copy.
                acc = jnp.zeros((M, Cout), jnp.float32)
                for t, (ky, kx) in enumerate(taps):
                    win = xp_ref[:, a + ky:a + ky + H, c + kx:c + kx + W, :]
                    acc = acc + jnp.dot(
                        win.reshape(M, Cin),
                        w_ref[a, c, t * Cin:(t + 1) * Cin, :],
                        preferred_element_type=jnp.float32)
            cols.append(acc)
        # Column phases side by side on the lane dim; bias added once per row phase.
        row = jnp.concatenate(cols, axis=-1) + bias2             # (M, 2*Cout)
        o_ref[:, :, a:a + 1, :, :] = row.reshape(
            bt, H, 1, W, 2 * Cout).astype(o_ref.dtype)


# ----------------------------------------------------------------------------
# Kernel 2: plain nearest 2x upsample (with_conv=False)
# ----------------------------------------------------------------------------
def _nearest_up2x_kernel(x_ref, o_ref):
    """x_ref: (bt, H, W, C) -> o_ref: (bt, H, 2, W, 2*C), already interleaved."""
    bt, H, W, C = x_ref.shape
    x = x_ref[...]
    if C % 128 == 0:
        # Lane-aligned sub-stores: no (bt,H,W,2C) lane-shifted copy materialized.
        xr = x.reshape(bt, H, 1, W, C)
        for a in range(2):
            o_ref[:, :, a:a + 1, :, 0:C] = xr
            o_ref[:, :, a:a + 1, :, C:2 * C] = xr
    else:
        xx = jnp.concatenate([x, x], axis=-1).reshape(bt, H, 1, W, 2 * C)
        for a in range(2):
            o_ref[:, :, a:a + 1, :, :] = xx


# ----------------------------------------------------------------------------
# Weight folding: 3x3 conv on nearest-2x grid -> 4 sub-pixel 2x2 convs
# ----------------------------------------------------------------------------
def _fold_up2x_conv3x3_weights(w_oihw, dtype):
    """OIHW (Cout,Cin,3,3) -> folded (2, 2, 4*Cin, Cout).

    For output phase (a, c): y[2i+a, 2j+c] only touches the 2x2 source window
    xp[i + a + ky, j + c + kx], ky,kx in {0,1} (xp zero-padded by 1). Taps of
    the 3x3 kernel landing on the same source pixel are summed.
    """
    w = jnp.transpose(w_oihw, (2, 3, 1, 0)).astype(jnp.float32)  # (3,3,Cin,Cout)
    fold = {0: ((0,), (1, 2)), 1: ((0, 1), (2,))}  # phase -> taps per shift idx
    phase_rows = []
    for a in range(2):
        phase_cols = []
        for c in range(2):
            taps = []
            for ky in range(2):
                for kx in range(2):
                    t = 0.0
                    for dy in fold[a][ky]:
                        for dx in fold[c][kx]:
                            t = t + w[dy, dx]
                    taps.append(t)                            # (Cin, Cout)
            phase_cols.append(jnp.concatenate(taps, axis=0))  # (4*Cin, Cout)
        phase_rows.append(jnp.stack(phase_cols, axis=0))      # (2, 4*Cin, Cout)
    return jnp.stack(phase_rows, axis=0).astype(dtype)        # (2,2,4*Cin,Cout)


# ----------------------------------------------------------------------------
# VMEM footprint estimates (include scratch + temporaries + double buffering)
# ----------------------------------------------------------------------------
def _conv_block_bytes(bt, H, W, Cin, Cout, itm):
    lane_in = _roundup(Cin, 128)
    in_blk = bt * H * _roundup(W, 8) * lane_in * itm                      # input block
    pad_blk = bt * (H + 2) * _roundup(W + 2, 8) * lane_in * itm           # xp scratch
    out_blk = bt * H * 2 * _roundup(W, 8) * _roundup(2 * Cout, 128) * itm
    tmp = bt * H * _roundup(W, 8) * (_roundup(4 * Cin, 128) * itm         # windows
                                     + 3 * _roundup(2 * Cout, 128) * 4)   # f32 acc/row
    return 2 * (in_blk + out_blk) + pad_blk + tmp                         # x2: dbl-buf


def _up_block_bytes(bt, H, W, C, itm):
    in_blk = bt * H * _roundup(W, 8) * _roundup(C, 128) * itm
    out_blk = bt * H * 2 * _roundup(W, 8) * _roundup(2 * C, 128) * itm
    return 2 * (in_blk + out_blk) + out_blk // 2


# ----------------------------------------------------------------------------
# NHWC-native entry points (no layout transposes)
# ----------------------------------------------------------------------------
def upsample_layer_conv_nhwc(x_nhwc, w_oihw, bias):
    B, H, W, Cin = x_nhwc.shape
    Cout = w_oihw.shape[0]
    dt = x_nhwc.dtype
    itm = jnp.dtype(dt).itemsize

    wf = _fold_up2x_conv3x3_weights(w_oihw, dt)                 # (2,2,4Cin,Cout)
    b2 = jnp.concatenate([bias, bias]).reshape(1, 2 * Cout).astype(jnp.float32)

    cap = _vmem_capacity_bytes()
    budget = cap // 5                                           # ~25 MiB v5e/v6e, ~13 MiB v7x
    blk = lambda bt: _conv_block_bytes(bt, H, W, Cin, Cout, itm)
    bt = _pick_batch_tile(B, blk, budget)
    need = blk(bt) + wf.size * jnp.dtype(wf.dtype).itemsize + b2.size * 4
    vmem_limit = _vmem_limit(cap, need)

    flops = 2 * B * 4 * H * W * 4 * Cin * Cout                  # folded sub-pixel convs
    bytes_accessed = int(x_nhwc.size * itm
                         + B * H * 2 * W * 2 * Cout * itm
                         + wf.size * jnp.dtype(wf.dtype).itemsize + b2.size * 4)

    out = pl.pallas_call(
        _upsample_conv3x3_kernel,
        out_shape=jax.ShapeDtypeStruct((B, H, 2, W, 2 * Cout), dt),
        grid_spec=pltpu.PrefetchScalarGridSpec(
            num_scalar_prefetch=0,
            grid=(B // bt,),
            in_specs=[
                pl.BlockSpec((bt, H, W, Cin), lambda i: (i, 0, 0, 0)),
                pl.BlockSpec((2, 2, 4 * Cin, Cout), lambda i: (0, 0, 0, 0)),
                pl.BlockSpec((1, 2 * Cout), lambda i: (0, 0)),
            ],
            out_specs=pl.BlockSpec((bt, H, 2, W, 2 * Cout),
                                   lambda i: (i, 0, 0, 0, 0)),
            scratch_shapes=[pltpu.VMEM((bt, H + 2, W + 2, Cin), dt)],
        ),
        compiler_params=pltpu.CompilerParams(
            dimension_semantics=("parallel",),
            vmem_limit_bytes=vmem_limit),
        cost_estimate=pl.CostEstimate(
            flops=flops, transcendentals=0, bytes_accessed=bytes_accessed),
    )(x_nhwc, wf, b2)

    # Free row-major reinterpretation: (B,H,2,W,2*Cout) -> (B,2H,2W,Cout).
    return out.reshape(B, 2 * H, 2 * W, Cout)


def upsample_layer_noconv_nhwc(x_nhwc):
    B, H, W, C = x_nhwc.shape
    dt = x_nhwc.dtype
    itm = jnp.dtype(dt).itemsize

    cap = _vmem_capacity_bytes()
    budget = cap // 5
    blk = lambda bt: _up_block_bytes(bt, H, W, C, itm)
    bt = _pick_batch_tile(B, blk, budget)
    vmem_limit = _vmem_limit(cap, blk(bt))

    out = pl.pallas_call(
        _nearest_up2x_kernel,
        out_shape=jax.ShapeDtypeStruct((B, H, 2, W, 2 * C), dt),
        grid_spec=pltpu.PrefetchScalarGridSpec(
            num_scalar_prefetch=0,
            grid=(B // bt,),
            in_specs=[pl.BlockSpec((bt, H, W, C), lambda i: (i, 0, 0, 0))],
            out_specs=pl.BlockSpec((bt, H, 2, W, 2 * C),
                                   lambda i: (i, 0, 0, 0, 0)),
        ),
        compiler_params=pltpu.CompilerParams(
            dimension_semantics=("parallel",),
            vmem_limit_bytes=vmem_limit),
    )(x_nhwc)
    return out.reshape(B, 2 * H, 2 * W, C)


# ----------------------------------------------------------------------------
# NCHW wrappers (match the PyTorch module's I/O layout)
# ----------------------------------------------------------------------------
@jax.jit
def upsample_layer_conv(x_nchw, w_oihw, bias):
    """UpsampleLayer(fir=False, with_conv=True, dimensions=2).forward."""
    x = jnp.transpose(x_nchw, (0, 2, 3, 1))                    # NHWC
    y = upsample_layer_conv_nhwc(x, w_oihw, bias)
    return jnp.transpose(y, (0, 3, 1, 2))                      # NCHW


@jax.jit
def upsample_layer_noconv(x_nchw):
    """UpsampleLayer(fir=False, with_conv=False, dimensions=2).forward."""
    x = jnp.transpose(x_nchw, (0, 2, 3, 1))                    # NHWC
    y = upsample_layer_noconv_nhwc(x)
    return jnp.transpose(y, (0, 3, 1, 2))                      # NCHW


# ----------------------------------------------------------------------------
# References (pure JAX) for verification
# ----------------------------------------------------------------------------
def _ref_nearest_up2x(x_nchw):
    return jnp.repeat(jnp.repeat(x_nchw, 2, axis=2), 2, axis=3)


def _ref_conv(x_nchw, w_oihw, bias):
    h = _ref_nearest_up2x(x_nchw)
    y = lax.conv_general_dilated(
        h, w_oihw, window_strides=(1, 1),
        padding=((1, 1), (1, 1)),
        dimension_numbers=("NCHW", "OIHW", "NCHW"))
    return y + bias[None, :, None, None]


if __name__ == "__main__":
    B, C_in, H, W = 2, 4, 16, 16
    C_out = 8

    key = jax.random.PRNGKey(0)
    kx, kw, kb = jax.random.split(key, 3)
    x = jax.random.normal(kx, (B, C_in, H, W), jnp.float32)
    # conv3x3 params (PyTorch OIHW layout)
    w = jax.random.normal(kw, (C_out, C_in, 3, 3), jnp.float32)
    w = w / jnp.sqrt(jnp.float32(C_in * 9))
    b = 0.01 * jax.random.normal(kb, (C_out,), jnp.float32)

    # Path 1: fir=False, with_conv=True
    out_conv = jax.block_until_ready(upsample_layer_conv(x, w, b))
    ref_conv = _ref_conv(x, w, b)
    assert out_conv.shape == (B, C_out, 2 * H, 2 * W)
    assert jnp.allclose(out_conv, ref_conv, atol=1e-4, rtol=1e-4), (
        float(jnp.max(jnp.abs(out_conv - ref_conv))))

    # Path 2: fir=False, with_conv=False
    out_up = jax.block_until_ready(upsample_layer_noconv(x))
    ref_up = _ref_nearest_up2x(x)
    assert out_up.shape == (B, C_in, 2 * H, 2 * W)
    assert jnp.allclose(out_up, ref_up)

    print("KERNEL_OK")
</pallas_src>

<mosaic_0001>
module attributes {stable_mosaic.version = 11 : i64} {
  func.func @_upsample_conv3x3_kernel(%arg0: i32, %arg1: memref<1x16x16x4xf32, #tpu.memory_space<vmem>>, %arg2: memref<2x2x16x8xf32, #tpu.memory_space<vmem>>, %arg3: memref<1x16xf32, #tpu.memory_space<vmem>>, %arg4: memref<1x16x2x16x16xf32, #tpu.memory_space<vmem>>, %arg5: memref<1x18x18x4xf32, #tpu.memory_space<vmem>>) attributes {dimension_semantics = [#tpu.dimension_semantics<parallel>], iteration_bounds = array<i64: 2>, scalar_prefetch = 0 : i64, scratch_operands = 1 : i64, tpu.core_type = #tpu.core_type<tc>, window_params = [{transform_indices = @transform_0, window_bounds = array<i64: 1, 16, 16, 4>}, {pipeline_mode = #tpu.pipeline_mode<synchronous>, transform_indices = @transform_1, window_bounds = array<i64: 2, 2, 16, 8>}, {pipeline_mode = #tpu.pipeline_mode<synchronous>, transform_indices = @transform_2, window_bounds = array<i64: 1, 16>}, {transform_indices = @transform_3, window_bounds = array<i64: 1, 16, 2, 16, 16>}]} {
    %cst = arith.constant 0.000000e+00 : f32
    %0 = vector.broadcast %cst : f32 to vector<1x1x18x4xf32>
    %cst_0 = arith.constant 0.000000e+00 : f32
    %1 = vector.broadcast %cst_0 : f32 to vector<1x18x1x4xf32>
    %c0 = arith.constant 0 : index
    %c0_1 = arith.constant 0 : index
    %c0_2 = arith.constant 0 : index
    %c0_3 = arith.constant 0 : index
    %2 = vector.load %arg5[%c0, %c0_1, %c0_2, %c0_3] : memref<1x18x18x4xf32, #tpu.memory_space<vmem>>, vector<1x1x18x4xf32>
    tpu.vector_store %arg5[%c0, %c0_1, %c0_2, %c0_3], %0 {strides = array<i32>} : memref<1x18x18x4xf32, #tpu.memory_space<vmem>>, vector<1x1x18x4xf32>,
    %c0_4 = arith.constant 0 : index
    %c17 = arith.constant 17 : index
    %c0_5 = arith.constant 0 : index
    %c0_6 = arith.constant 0 : index
    %3 = vector.load %arg5[%c0_4, %c17, %c0_5, %c0_6] : memref<1x18x18x4xf32, #tpu.memory_space<vmem>>, vector<1x1x18x4xf32>
    tpu.vector_store %arg5[%c0_4, %c17, %c0_5, %c0_6], %0 {strides = array<i32>} : memref<1x18x18x4xf32, #tpu.memory_space<vmem>>, vector<1x1x18x4xf32>,
    %c0_7 = arith.constant 0 : index
    %c0_8 = arith.constant 0 : index
    %c0_9 = arith.constant 0 : index
    %c0_10 = arith.constant 0 : index
    %4 = vector.load %arg5[%c0_7, %c0_8, %c0_9, %c0_10] : memref<1x18x18x4xf32, #tpu.memory_space<vmem>>, vector<1x18x1x4xf32>
    tpu.vector_store %arg5[%c0_7, %c0_8, %c0_9, %c0_10], %1 {strides = array<i32>} : memref<1x18x18x4xf32, #tpu.memory_space<vmem>>, vector<1x18x1x4xf32>,
    %c0_11 = arith.constant 0 : index
    %c0_12 = arith.constant 0 : index
    %c17_13 = arith.constant 17 : index
    %c0_14 = arith.constant 0 : index
    %5 = vector.load %arg5[%c0_11, %c0_12, %c17_13, %c0_14] : memref<1x18x18x4xf32, #tpu.memory_space<vmem>>, vector<1x18x1x4xf32>
    tpu.vector_store %arg5[%c0_11, %c0_12, %c17_13, %c0_14], %1 {strides = array<i32>} : memref<1x18x18x4xf32, #tpu.memory_space<vmem>>, vector<1x18x1x4xf32>,
    %c0_15 = arith.constant 0 : index
    %c0_16 = arith.constant 0 : index
    %c0_17 = arith.constant 0 : index
    %c0_18 = arith.constant 0 : index
    %6 = vector.load %arg1[%c0_15, %c0_16, %c0_17, %c0_18] : memref<1x16x16x4xf32, #tpu.memory_space<vmem>>, vector<1x16x16x4xf32>
    %c0_19 = arith.constant 0 : index
    %c1 = arith.constant 1 : index
    %c1_20 = arith.constant 1 : index
    %c0_21 = arith.constant 0 : index
    %7 = vector.load %arg5[%c0_19, %c1, %c1_20, %c0_21] : memref<1x18x18x4xf32, #tpu.memory_space<vmem>>, vector<1x16x16x4xf32>
    tpu.vector_store %arg5[%c0_19, %c1, %c1_20, %c0_21], %6 {strides = array<i32>} : memref<1x18x18x4xf32, #tpu.memory_space<vmem>>, vector<1x16x16x4xf32>,
    %c0_22 = arith.constant 0 : index
    %c0_23 = arith.constant 0 : index
    %8 = vector.load %arg3[%c0_22, %c0_23] : memref<1x16xf32, #tpu.memory_space<vmem>>, vector<1x16xf32>
    %c0_24 = arith.constant 0 : index
    %c0_25 = arith.constant 0 : index
    %c0_26 = arith.constant 0 : index
    %c0_27 = arith.constant 0 : index
    %9 = vector.load %arg5[%c0_24, %c0_25, %c0_26, %c0_27] : memref<1x18x18x4xf32, #tpu.memory_space<vmem>>, vector<1x16x16x4xf32>
    %c0_28 = arith.constant 0 : index
    %c0_29 = arith.constant 0 : index
    %c1_30 = arith.constant 1 : index
    %c0_31 = arith.constant 0 : index
    %10 = vector.load %arg5[%c0_28, %c0_29, %c1_30, %c0_31] : memref<1x18x18x4xf32, #tpu.memory_space<vmem>>, vector<1x16x16x4xf32>
    %c0_32 = arith.constant 0 : index
    %c1_33 = arith.constant 1 : index
    %c0_34 = arith.constant 0 : index
    %c0_35 = arith.constant 0 : index
    %11 = vector.load %arg5[%c0_32, %c1_33, %c0_34, %c0_35] : memref<1x18x18x4xf32, #tpu.memory_space<vmem>>, vector<1x16x16x4xf32>
    %c0_36 = arith.constant 0 : index
    %c1_37 = arith.constant 1 : index
    %c1_38 = arith.constant 1 : index
    %c0_39 = arith.constant 0 : index
    %12 = vector.load %arg5[%c0_36, %c1_37, %c1_38, %c0_39] : memref<1x18x18x4xf32, #tpu.memory_space<vmem>>, vector<1x16x16x4xf32>
    %13 = tpu.concatenate %9, %10, %11, %12 in 3 : vector<1x16x16x4xf32>, vector<1x16x16x4xf32>, vector<1x16x16x4xf32>, vector<1x16x16x4xf32> -> vector<1x16x16x16xf32>
    %14 = vector.shape_cast %13 : vector<1x16x16x16xf32> to vector<256x16xf32>
    %c0_40 = arith.constant 0 : index
    %c0_41 = arith.constant 0 : index
    %c0_42 = arith.constant 0 : index
    %c0_43 = arith.constant 0 : index
    %15 = vector.load %arg2[%c0_40, %c0_41, %c0_42, %c0_43] : memref<2x2x16x8xf32, #tpu.memory_space<vmem>>, vector<1x1x16x8xf32>
    %16 = vector.shape_cast %15 : vector<1x1x16x8xf32> to vector<16x8xf32>
    %cst_44 = arith.constant dense<0.000000e+00> : vector<256x8xf32>
    %17 = tpu.matmul %14, %16, %cst_44 {dimension_numbers = #tpu.dot_dimension_numbers<[1], [0], [0], [1], [0, 0, 1, 1], [], []>} : vector<256x16xf32>, vector<16x8xf32>, vector<256x8xf32> -> vector<256x8xf32>
    %c0_45 = arith.constant 0 : index
    %c0_46 = arith.constant 0 : index
    %c1_47 = arith.constant 1 : index
    %c0_48 = arith.constant 0 : index
    %18 = vector.load %arg5[%c0_45, %c0_46, %c1_47, %c0_48] : memref<1x18x18x4xf32, #tpu.memory_space<vmem>>, vector<1x16x16x4xf32>
    %c0_49 = arith.constant 0 : index
    %c0_50 = arith.constant 0 : index
    %c2 = arith.constant 2 : index
    %c0_51 = arith.constant 0 : index
    %19 = vector.load %arg5[%c0_49, %c0_50, %c2, %c0_51] : memref<1x18x18x4xf32, #tpu.memory_space<vmem>>, vector<1x16x16x4xf32>
    %c0_52 = arith.constant 0 : index
    %c1_53 = arith.constant 1 : index
    %c1_54 = arith.constant 1 : index
    %c0_55 = arith.constant 0 : index
    %20 = vector.load %arg5[%c0_52, %c1_53, %c1_54, %c0_55] : memref<1x18x18x4xf32, #tpu.memory_space<vmem>>, vector<1x16x16x4xf32>
    %c0_56 = arith.constant 0 : index
    %c1_57 = arith.constant 1 : index
    %c2_58 = arith.constant 2 : index
    %c0_59 = arith.constant 0 : index
    %21 = vector.load %arg5[%c0_56, %c1_57, %c2_58, %c0_59] : memref<1x18x18x4xf32, #tpu.memory_space<vmem>>, vector<1x16x16x4xf32>
    %22 = tpu.concatenate %18, %19, %20, %21 in 3 : vector<1x16x16x4xf32>, vector<1x16x16x4xf32>, vector<1x16x16x4xf32>, vector<1x16x16x4xf32> -> vector<1x16x16x16xf32>
    %23 = vector.shape_cast %22 : vector<1x16x16x16xf32> to vector<256x16xf32>
    %c0_60 = arith.constant 0 : index
    %c1_61 = arith.constant 1 : index
    %c0_62 = arith.constant 0 : index
    %c0_63 = arith.constant 0 : index
    %24 = vector.load %arg2[%c0_60, %c1_61, %c0_62, %c0_63] : memref<2x2x16x8xf32, #tpu.memory_space<vmem>>, vector<1x1x16x8xf32>
    %25 = vector.shape_cast %24 : vector<1x1x16x8xf32> to vector<16x8xf32>
    %cst_64 = arith.constant dense<0.000000e+00> : vector<256x8xf32>
    %26 = tpu.matmul %23, %25, %cst_64 {dimension_numbers = #tpu.dot_dimension_numbers<[1], [0], [0], [1], [0, 0, 1, 1], [], []>} : vector<256x16xf32>, vector<16x8xf32>, vector<256x8xf32> -> vector<256x8xf32>
    %27 = tpu.concatenate %17, %26 in 1 : vector<256x8xf32>, vector<256x8xf32> -> vector<256x16xf32>
    %28 = vector.broadcast %8 : vector<1x16xf32> to vector<256x16xf32>
    %29 = arith.addf %27, %28 : vector<256x16xf32>
    %30 = vector.shape_cast %29 : vector<256x16xf32> to vector<1x16x1x16x16xf32>
    %c0_65 = arith.constant 0 : index
    %c0_66 = arith.constant 0 : index
    %c0_67 = arith.constant 0 : index
    %c0_68 = arith.constant 0 : index
    %c0_69 = arith.constant 0 : index
    %31 = vector.load %arg4[%c0_65, %c0_66, %c0_67, %c0_68, %c0_69] : memref<1x16x2x16x16xf32, #tpu.memory_space<vmem>>, vector<1x16x1x16x16xf32>
    tpu.vector_store %arg4[%c0_65, %c0_66, %c0_67, %c0_68, %c0_69], %30 {strides = array<i32>} : memref<1x16x2x16x16xf32, #tpu.memory_space<vmem>>, vector<1x16x1x16x16xf32>,
    %c0_70 = arith.constant 0 : index
    %c1_71 = arith.constant 1 : index
    %c0_72 = arith.constant 0 : index
    %c0_73 = arith.constant 0 : index
    %32 = vector.load %arg5[%c0_70, %c1_71, %c0_72, %c0_73] : memref<1x18x18x4xf32, #tpu.memory_space<vmem>>, vector<1x16x16x4xf32>
    %c0_74 = arith.constant 0 : index
    %c1_75 = arith.constant 1 : index
    %c1_76 = arith.constant 1 : index
    %c0_77 = arith.constant 0 : index
    %33 = vector.load %arg5[%c0_74, %c1_75, %c1_76, %c0_77] : memref<1x18x18x4xf32, #tpu.memory_space<vmem>>, vector<1x16x16x4xf32>
    %c0_78 = arith.constant 0 : index
    %c2_79 = arith.constant 2 : index
    %c0_80 = arith.constant 0 : index
    %c0_81 = arith.constant 0 : index
    %34 = vector.load %arg5[%c0_78, %c2_79, %c0_80, %c0_81] : memref<1x18x18x4xf32, #tpu.memory_space<vmem>>, vector<1x16x16x4xf32>
    %c0_82 = arith.constant 0 : index
    %c2_83 = arith.constant 2 : index
    %c1_84 = arith.constant 1 : index
    %c0_85 = arith.constant 0 : index
    %35 = vector.load %arg5[%c0_82, %c2_83, %c1_84, %c0_85] : memref<1x18x18x4xf32, #tpu.memory_space<vmem>>, vector<1x16x16x4xf32>
    %36 = tpu.concatenate %32, %33, %34, %35 in 3 : vector<1x16x16x4xf32>, vector<1x16x16x4xf32>, vector<1x16x16x4xf32>, vector<1x16x16x4xf32> -> vector<1x16x16x16xf32>
    %37 = vector.shape_cast %36 : vector<1x16x16x16xf32> to vector<256x16xf32>
    %c1_86 = arith.constant 1 : index
    %c0_87 = arith.constant 0 : index
    %c0_88 = arith.constant 0 : index
    %c0_89 = arith.constant 0 : index
    %38 = vector.load %arg2[%c1_86, %c0_87, %c0_88, %c0_89] : memref<2x2x16x8xf32, #tpu.memory_space<vmem>>, vector<1x1x16x8xf32>
    %39 = vector.shape_cast %38 : vector<1x1x16x8xf32> to vector<16x8xf32>
    %cst_90 = arith.constant dense<0.000000e+00> : vector<256x8xf32>
    %40 = tpu.matmul %37, %39, %cst_90 {dimension_numbers = #tpu.dot_dimension_numbers<[1], [0], [0], [1], [0, 0, 1, 1], [], []>} : vector<256x16xf32>, vector<16x8xf32>, vector<256x8xf32> -> vector<256x8xf32>
    %c0_91 = arith.constant 0 : index
    %c1_92 = arith.constant 1 : index
    %c1_93 = arith.constant 1 : index
    %c0_94 = arith.constant 0 : index
    %41 = vector.load %arg5[%c0_91, %c1_92, %c1_93, %c0_94] : memref<1x18x18x4xf32, #tpu.memory_space<vmem>>, vector<1x16x16x4xf32>
    %c0_95 = arith.constant 0 : index
    %c1_96 = arith.constant 1 : index
    %c2_97 = arith.constant 2 : index
    %c0_98 = arith.constant 0 : index
    %42 = vector.load %arg5[%c0_95, %c1_96, %c2_97, %c0_98] : memref<1x18x18x4xf32, #tpu.memory_space<vmem>>, vector<1x16x16x4xf32>
    %c0_99 = arith.constant 0 : index
    %c2_100 = arith.constant 2 : index
    %c1_101 = arith.constant 1 : index
    %c0_102 = arith.constant 0 : index
    %43 = vector.load %arg5[%c0_99, %c2_100, %c1_101, %c0_102] : memref<1x18x18x4xf32, #tpu.memory_space<vmem>>, vector<1x16x16x4xf32>
    %c0_103 = arith.constant 0 : index
    %c2_104 = arith.constant 2 : index
    %c2_105 = arith.constant 2 : index
    %c0_106 = arith.constant 0 : index
    %44 = vector.load %arg5[%c0_103, %c2_104, %c2_105, %c0_106] : memref<1x18x18x4xf32, #tpu.memory_space<vmem>>, vector<1x16x16x4xf32>
    %45 = tpu.concatenate %41, %42, %43, %44 in 3 : vector<1x16x16x4xf32>, vector<1x16x16x4xf32>, vector<1x16x16x4xf32>, vector<1x16x16x4xf32> -> vector<1x16x16x16xf32>
    %46 = vector.shape_cast %45 : vector<1x16x16x16xf32> to vector<256x16xf32>
    %c1_107 = arith.constant 1 : index
    %c1_108 = arith.constant 1 : index
    %c0_109 = arith.constant 0 : index
    %c0_110 = arith.constant 0 : index
    %47 = vector.load %arg2[%c1_107, %c1_108, %c0_109, %c0_110] : memref<2x2x16x8xf32, #tpu.memory_space<vmem>>, vector<1x1x16x8xf32>
    %48 = vector.shape_cast %47 : vector<1x1x16x8xf32> to vector<16x8xf32>
    %cst_111 = arith.constant dense<0.000000e+00> : vector<256x8xf32>
    %49 = tpu.matmul %46, %48, %cst_111 {dimension_numbers = #tpu.dot_dimension_numbers<[1], [0], [0], [1], [0, 0, 1, 1], [], []>} : vector<256x16xf32>, vector<16x8xf32>, vector<256x8xf32> -> vector<256x8xf32>
    %50 = tpu.concatenate %40, %49 in 1 : vector<256x8xf32>, vector<256x8xf32> -> vector<256x16xf32>
    %51 = vector.broadcast %8 : vector<1x16xf32> to vector<256x16xf32>
    %52 = arith.addf %50, %51 : vector<256x16xf32>
    %53 = vector.shape_cast %52 : vector<256x16xf32> to vector<1x16x1x16x16xf32>
    %c0_112 = arith.constant 0 : index
    %c0_113 = arith.constant 0 : index
    %c1_114 = arith.constant 1 : index
    %c0_115 = arith.constant 0 : index
    %c0_116 = arith.constant 0 : index
    %54 = vector.load %arg4[%c0_112, %c0_113, %c1_114, %c0_115, %c0_116] : memref<1x16x2x16x16xf32, #tpu.memory_space<vmem>>, vector<1x16x1x16x16xf32>
    tpu.vector_store %arg4[%c0_112, %c0_113, %c1_114, %c0_115, %c0_116], %53 {strides = array<i32>} : memref<1x16x2x16x16xf32, #tpu.memory_space<vmem>>, vector<1x16x1x16x16xf32>,
    return
  }
  func.func @transform_0(%arg0: i32) -> (i32, i32, i32, i32) {
    %c0_i32 = arith.constant 0 : i32
    %c0_i32_0 = arith.constant 0 : i32
    %c0_i32_1 = arith.constant 0 : i32
    %c0_i32_2 = arith.constant 0 : i32
    return %arg0, %c0_i32, %c0_i32_0, %c0_i32_1 : i32, i32, i32, i32
  }
  func.func @transform_1(%arg0: i32) -> (i32, i32, i32, i32) {
    %c0_i32 = arith.constant 0 : i32
    %c0_i32_0 = arith.constant 0 : i32
    %c0_i32_1 = arith.constant 0 : i32
    %c0_i32_2 = arith.constant 0 : i32
    %c0_i32_3 = arith.constant 0 : i32
    return %c0_i32, %c0_i32_0, %c0_i32_1, %c0_i32_2 : i32, i32, i32, i32
  }
  func.func @transform_2(%arg0: i32) -> (i32, i32) {
    %c0_i32 = arith.constant 0 : i32
    %c0_i32_0 = arith.constant 0 : i32
    %c0_i32_1 = arith.constant 0 : i32
    return %c0_i32, %c0_i32_0 : i32, i32
  }
  func.func @transform_3(%arg0: i32) -> (i32, i32, i32, i32, i32) {
    %c0_i32 = arith.constant 0 : i32
    %c0_i32_0 = arith.constant 0 : i32
    %c0_i32_1 = arith.constant 0 : i32
    %c0_i32_2 = arith.constant 0 : i32
    %c0_i32_3 = arith.constant 0 : i32
    return %arg0, %c0_i32, %c0_i32_0, %c0_i32_1, %c0_i32_2 : i32, i32, i32, i32, i32
  }
}

</mosaic_0001>

<llo_original>
// kernel: upsample_layer_conv.1
$region0: #{upsample_layer_conv.1}
  #allocation0 [shape = 'u32[]', space=smem, size = 0x4, offset = 0x4, fixed_abs, tag = 'smem constant byte address 0x4 - core index']
  #allocation1 [shape = 'u32[144,128]{1,0:T(1,128)}', space=vmem, size = 0x12000, scoped, tag = 'internal scratch']
  #allocation2 [shape = 'f32[1,18,18,4]{3,2,1,0:T(8,128)}', space=vmem, size = 0x36000, scoped, tag = 'scratch operand']
  %s0 = inlined_call_operand.vmem [shape: f32[2,16,16,4], index: 0, kind: input, shape index: {}]
  %s1 = inlined_call_operand.vmem [shape: f32[2,2,16,8], index: 1, kind: input, shape index: {}]
  %s2 = inlined_call_operand.vmem [shape: f32[1,16], index: 2, kind: input, shape index: {}]
  %s3 = inlined_call_operand.vmem [shape: f32[2,16,2,16,16], index: 3, kind: output, shape index: {}]
  %s4 = sld [smem:[#allocation0]]
  $region45: #{upsample_layer_conv.1} parent=0
    _
  %s6 = ssub.s32 1, %s4
  %s7 = scalar_select 0, %s6, %s4
  loop: start=0, step=1, limit=4
  $region2: #{upsample_layer_conv.1} parent=0 // loop_pre_header
    _
  $region3: #{upsample_layer_conv.1} parent=0 // loop_header
    %s9 = sphi 0, %s13
    %p10 = scmp.ge.s32.totalorder %s9, 4
    %s19 = sphi 0, %s21
    %s22 = sphi 0, %s19
    %s23 = sphi 0, %s22
    %s39 = sphi 0, %s23
    %s43 = sphi 0, %s43
    %s45 = sphi 0, %s43
    %s46 = sphi 0, %s45
    %s60 = sphi 0, %s46
    %s64 = sphi 0, %s64
    %s66 = sphi 0, %s64
    %s67 = sphi 0, %s66
    %s81 = sphi 0, %s67
    %s87 = sphi 0, %s89
    %s90 = sphi 0, %s87
    %s91 = sphi 0, %s90
    %s107 = sphi 0, %s91
  $region4: #{upsample_layer_conv.1} parent=0 // loop_header_branch
    %12 = sbr.rel (%p10) target = $region8
  $region5: #{upsample_layer_conv.1} parent=0 // loop_body
    %s14 = ssub.s32 %s9, 1
    %s15 = ssub.s32 %s9, 2
    %s16 = sadd.s32 %s9, 1
    %s17 = ssub.s32 %s9, %s16
    %p18 = scmp.eq.s32.totalorder %s17, 0
    %s20 = sadd.s32 %s19, 1
    %s21 = scalar_select %p18, %s19, %s20
    %p24 = pneg %p18
    %p25 = scmp.eq.s32.totalorder %s9, 1
    %p26 = por %p24, %p25
    %p27 = scmp.ne.s32.totalorder %s19, %s22
    %p28 = scmp.eq.s32.totalorder %s9, 0
    %p29 = por %p27, %p28
    %p30 = scmp.ne.s32.totalorder %s19, %s22
    %p31 = scmp.eq.s32.totalorder %s14, 1
    %p32 = por %p30, %p31
    %p33 = scmp.ne.s32.totalorder %s22, %s23
    %p34 = scmp.eq.s32.totalorder %s14, 0
    %p35 = por %p33, %p34
    %p36 = scmp.ne.s32.totalorder %s22, %s23
    %p37 = scmp.eq.s32.totalorder %s15, 1
    %p38 = por %p36, %p37
    %p40 = scmp.ne.s32.totalorder %s23, %s39
    %p41 = scmp.eq.s32.totalorder %s15, 0
    %p42 = por %p40, %p41
    %s44 = sadd.s32 %s43, 1
    %p47 = scmp.eq.s32.totalorder %s9, 1
    %p48 = scmp.ne.s32.totalorder %s43, %s45
    %p49 = scmp.eq.s32.totalorder %s9, 0
    %p50 = por %p48, %p49
    %p51 = scmp.ne.s32.totalorder %s43, %s45
    %p52 = scmp.eq.s32.totalorder %s14, 1
    %p53 = por %p51, %p52
    %p54 = scmp.ne.s32.totalorder %s45, %s46
    %p55 = scmp.eq.s32.totalorder %s14, 0
    %p56 = por %p54, %p55
    %p57 = scmp.ne.s32.totalorder %s45, %s46
    %p58 = scmp.eq.s32.totalorder %s15, 1
    %p59 = por %p57, %p58
    %p61 = scmp.ne.s32.totalorder %s46, %s60
    %p62 = scmp.eq.s32.totalorder %s15, 0
    %p63 = por %p61, %p62
    %s65 = sadd.s32 %s64, 1
    %p68 = scmp.eq.s32.totalorder %s9, 1
    %p69 = scmp.ne.s32.totalorder %s64, %s66
    %p70 = scmp.eq.s32.totalorder %s9, 0
    %p71 = por %p69, %p70
    %p72 = scmp.ne.s32.totalorder %s64, %s66
    %p73 = scmp.eq.s32.totalorder %s14, 1
    %p74 = por %p72, %p73
    %p75 = scmp.ne.s32.totalorder %s66, %s67
    %p76 = scmp.eq.s32.totalorder %s14, 0
    %p77 = por %p75, %p76
    %p78 = scmp.ne.s32.totalorder %s66, %s67
    %p79 = scmp.eq.s32.totalorder %s15, 1
    %p80 = por %p78, %p79
    %p82 = scmp.ne.s32.totalorder %s67, %s81
    %p83 = scmp.eq.s32.totalorder %s15, 0
    %p84 = por %p82, %p83
    %s85 = ssub.s32 %s9, %s16
    %p86 = scmp.eq.s32.totalorder %s85, 0
    %s88 = sadd.s32 %s87, 1
    %s89 = scalar_select %p86, %s87, %s88
    %p92 = pneg %p86
    %p93 = scmp.eq.s32.totalorder %s9, 1
    %p94 = por %p92, %p93
    %p95 = scmp.ne.s32.totalorder %s87, %s90
    %p96 = scmp.eq.s32.totalorder %s9, 0
    %p97 = por %p95, %p96
    %p98 = scmp.ne.s32.totalorder %s87, %s90
    %p99 = scmp.eq.s32.totalorder %s14, 1
    %p100 = por %p98, %p99
    %p101 = scmp.ne.s32.totalorder %s90, %s91
    %p102 = scmp.eq.s32.totalorder %s14, 0
    %p103 = por %p101, %p102
    %p104 = scmp.ne.s32.totalorder %s90, %s91
    %p105 = scmp.eq.s32.totalorder %s15, 1
    %p106 = por %p104, %p105
    %p108 = scmp.ne.s32.totalorder %s91, %s107
    %p109 = scmp.eq.s32.totalorder %s15, 0
    %p110 = por %p108, %p109
    %p111 = scmp.le.s32.totalorder 1, %s9
    %p112 = scmp.lt.s32.totalorder %s9, 3
    %p113 = pnand %p111, %p112
    %p114 = pneg %p113
    // Predicated region
    $region9: #{upsample_layer_conv.1} parent=5 // pred_check
      _
    $region10: #{upsample_layer_conv.1} parent=5 // pred_check_branch
      %116 = sbr.rel (%p113) target = $region12
    $region11: #{upsample_layer_conv.1} parent=5 // pred_region
      %s117 = ssub.s32 %s9, 1
      // Predicated region
      $region13: #{upsample_layer_conv.1} parent=11 // pred_check
        %p118 = pneg %p56
      $region14: #{upsample_layer_conv.1} parent=11 // pred_check_branch
        %120 = sbr.rel (%p118) target = $region16
      $region15: #{upsample_layer_conv.1} parent=11 // pred_region
        _
      $region16: #{upsample_layer_conv.1} parent=11 // pred_fallthru
        _
      // Predicated region
      $region17: #{upsample_layer_conv.1} parent=11 // pred_check
        %p121 = pneg %p77
      $region18: #{upsample_layer_conv.1} parent=11 // pred_check_branch
        %123 = sbr.rel (%p121) target = $region20
      $region19: #{upsample_layer_conv.1} parent=11 // pred_region
        _
      $region20: #{upsample_layer_conv.1} parent=11 // pred_fallthru
        _
    $region12: #{upsample_layer_conv.1} parent=5 // pred_fallthru
      _
    %p124 = scmp.lt.s32.totalorder %s9, 2
    // Predicated region
    $region21: #{upsample_layer_conv.1} parent=5 // pred_check
      %p125 = pneg %p124
    $region22: #{upsample_layer_conv.1} parent=5 // pred_check_branch
      %127 = sbr.rel (%p125) target = $region24
    $region23: #{upsample_layer_conv.1} parent=5 // pred_region
      // Predicated region
      $region25: #{upsample_layer_conv.1} parent=23 // pred_check
        %p128 = pneg %p29
      $region26: #{upsample_layer_conv.1} parent=23 // pred_check_branch
        %130 = sbr.rel (%p128) target = $region28
      $region27: #{upsample_layer_conv.1} parent=23 // pred_region
        %p131 = scmp.lt.s32.totalorder %s9, 1
        %s132 = scalar_select %p131, %s9, 1
        %s133 = smul.addr %s132, 32
        %s134 = smul.addr %s133, 8
        %s135 = scalar_lea.vmem %s0, %s134
      $region28: #{upsample_layer_conv.1} parent=23 // pred_fallthru
        _
    $region24: #{upsample_layer_conv.1} parent=5 // pred_fallthru
      _
    %p136 = scmp.le.s32.totalorder 1, %s9
    %p137 = scmp.lt.s32.totalorder %s9, 3
    %p138 = pnand %p136, %p137
    %p139 = pneg %p138
    // Predicated region
    $region29: #{upsample_layer_conv.1} parent=5 // pred_check
      _
    $region30: #{upsample_layer_conv.1} parent=5 // pred_check_branch
      %141 = sbr.rel (%p138) target = $region32
    $region31: #{upsample_layer_conv.1} parent=5 // pred_region
      %s142 = ssub.s32 %s9, 1
      %p143 = scmp.lt.s32.totalorder %s14, 1
      %s144 = scalar_select %p143, %s14, 1
      %s145 = smul.addr %s144, 32
      %s146 = smul.addr %s145, 8
      %s147 = scalar_lea.vmem %s0, %s146
      %p148 = pneg %p35
      %p149 = pneg %p32
      %p150 = pneg %p56
      %p151 = pneg %p53
      %p152 = pneg %p77
      %p153 = pneg %p74
      %p154 = pneg %p103
      %p155 = pneg %p100
      %p156 = scmp.lt.s32.totalorder %s14, 1
      %s157 = scalar_select %p156, %s14, 1
      %s158 = smul.addr %s157, 64
      %s159 = smul.addr %s158, 8
      %s160 = scalar_lea.vmem %s3, %s159
      %p161 = scmp.lt.s32.totalorder %s14, 1
      %s162 = scalar_select %p161, %s14, 1
      %s163 = smul.addr %s162, 32
      %s164 = smul.addr %s163, 8
      %s165 = scalar_lea.vmem %s0, %s164
      %p166 = scmp.lt.s32.totalorder %s14, 1
      %s167 = scalar_select %p166, %s14, 1
      %s168 = smul.addr %s167, 64
      %s169 = smul.addr %s168, 8
      %s170 = scalar_lea.vmem %s3, %s169
      %vm171 = vcmask 31744
      %172 = vst.msk [vmem:[#allocation2] sm:$0xff] %vm171, 0.0
      %173 = vst.msk [vmem:[#allocation2 + $0x8] sm:$0xff] %vm171, 0.0
      %vm174 = vcmask 25600
      %175 = vst.msk [vmem:[#allocation2 + $0x10] sm:$0x3] %vm174, 0.0
      %s176 = scalar_lea.vmem [#allocation2], 408
      %177 = vst.msk [vmem:[%s176] sm:$0xff] %vm171, 0.0
      %178 = vst.msk [vmem:[%s176 + $0x8] sm:$0xff] %vm171, 0.0
      %179 = vst.msk [vmem:[%s176 + $0x10] sm:$0x3] %vm174, 0.0
      %vm180 = vcmask 24576
      %181 = vst.msk [vmem:[#allocation2] sm:$0x1] %vm180, 0.0
      %182 = vst.msk [vmem:[#allocation2 + $0x18] sm:$0x1] %vm180, 0.0
      %183 = vst.msk [vmem:[#allocation2 + $0x30] sm:$0x1] %vm180, 0.0
      %184 = vst.msk [vmem:[#allocation2 + $0x48] sm:$0x1] %vm180, 0.0
      %185 = vst.msk [vmem:[#allocation2 + $0x60] sm:$0x1] %vm180, 0.0
      %186 = vst.msk [vmem:[#allocation2 + $0x78] sm:$0x1] %vm180, 0.0
      %187 = vst.msk [vmem:[#allocation2 + $0x90] sm:$0x1] %vm180, 0.0
      %188 = vst.msk [vmem:[#allocation2 + $0xa8] sm:$0x1] %vm180, 0.0
      %189 = vst.msk [vmem:[#allocation2 + $0xc0] sm:$0x1] %vm180, 0.0
      %190 = vst.msk [vmem:[#allocation2 + $0xd8] sm:$0x1] %vm180, 0.0
      %191 = vst.msk [vmem:[#allocation2 + $0xf0] sm:$0x1] %vm180, 0.0
      %192 = vst.msk [vmem:[#allocation2 + $0x108] sm:$0x1] %vm180, 0.0
      %193 = vst.msk [vmem:[#allocation2 + $0x120] sm:$0x1] %vm180, 0.0
      %194 = vst.msk [vmem:[#allocation2 + $0x138] sm:$0x1] %vm180, 0.0
      %195 = vst.msk [vmem:[#allocation2 + $0x150] sm:$0x1] %vm180, 0.0
      %196 = vst.msk [vmem:[#allocation2 + $0x168] sm:$0x1] %vm180, 0.0
      %197 = vst.msk [vmem:[#allocation2 + $0x180] sm:$0x1] %vm180, 0.0
      %198 = vst.msk [vmem:[#allocation2 + $0x198] sm:$0x1] %vm180, 0.0
      %199 = vst.msk [vmem:[#allocation2 + $0x11] sm:$0x1] %vm180, 0.0
      %200 = vst.msk [vmem:[#allocation2 + $0x29] sm:$0x1] %vm180, 0.0
      %201 = vst.msk [vmem:[#allocation2 + $0x41] sm:$0x1] %vm180, 0.0
      %202 = vst.msk [vmem:[#allocation2 + $0x59] sm:$0x1] %vm180, 0.0
      %203 = vst.msk [vmem:[#allocation2 + $0x71] sm:$0x1] %vm180, 0.0
      %204 = vst.msk [vmem:[#allocation2 + $0x89] sm:$0x1] %vm180, 0.0
      %205 = vst.msk [vmem:[#allocation2 + $0xa1] sm:$0x1] %vm180, 0.0
      %206 = vst.msk [vmem:[#allocation2 + $0xb9] sm:$0x1] %vm180, 0.0
      %207 = vst.msk [vmem:[#allocation2 + $0xd1] sm:$0x1] %vm180, 0.0
      %208 = vst.msk [vmem:[#allocation2 + $0xe9] sm:$0x1] %vm180, 0.0
      %209 = vst.msk [vmem:[#allocation2 + $0x101] sm:$0x1] %vm180, 0.0
      %210 = vst.msk [vmem:[#allocation2 + $0x119] sm:$0x1] %vm180, 0.0
      %211 = vst.msk [vmem:[#allocation2 + $0x131] sm:$0x1] %vm180, 0.0
      %212 = vst.msk [vmem:[#allocation2 + $0x149] sm:$0x1] %vm180, 0.0
      %213 = vst.msk [vmem:[#allocation2 + $0x161] sm:$0x1] %vm180, 0.0
      %214 = vst.msk [vmem:[#allocation2 + $0x179] sm:$0x1] %vm180, 0.0
      %215 = vst.msk [vmem:[#allocation2 + $0x191] sm:$0x1] %vm180, 0.0
      %216 = vst.msk [vmem:[#allocation2 + $0x1a9] sm:$0x1] %vm180, 0.0
      %v217 = vld [vmem:[%s165] sm:$0xff]
      %v218 = vld [vmem:[%s165 + $0x8] sm:$0xff]
      %v219 = vld [vmem:[%s165 + $0x10] sm:$0xff]
      %v220 = vld [vmem:[%s165 + $0x18] sm:$0xff]
      %v221 = vld [vmem:[%s165 + $0x20] sm:$0xff]
      %v222 = vld [vmem:[%s165 + $0x28] sm:$0xff]
      %v223 = vld [vmem:[%s165 + $0x30] sm:$0xff]
      %v224 = vld [vmem:[%s165 + $0x38] sm:$0xff]
      %v225 = vld [vmem:[%s165 + $0x40] sm:$0xff]
      %v226 = vld [vmem:[%s165 + $0x48] sm:$0xff]
      %v227 = vld [vmem:[%s165 + $0x50] sm:$0xff]
      %v228 = vld [vmem:[%s165 + $0x58] sm:$0xff]
      %v229 = vld [vmem:[%s165 + $0x60] sm:$0xff]
      %v230 = vld [vmem:[%s165 + $0x68] sm:$0xff]
      %v231 = vld [vmem:[%s165 + $0x70] sm:$0xff]
      %v232 = vld [vmem:[%s165 + $0x78] sm:$0xff]
      %v233 = vld [vmem:[%s165 + $0x80] sm:$0xff]
      %v234 = vld [vmem:[%s165 + $0x88] sm:$0xff]
      %v235 = vld [vmem:[%s165 + $0x90] sm:$0xff]
      %v236 = vld [vmem:[%s165 + $0x98] sm:$0xff]
      %v237 = vld [vmem:[%s165 + $0xa0] sm:$0xff]
      %v238 = vld [vmem:[%s165 + $0xa8] sm:$0xff]
      %v239 = vld [vmem:[%s165 + $0xb0] sm:$0xff]
      %v240 = vld [vmem:[%s165 + $0xb8] sm:$0xff]
      %v241 = vld [vmem:[%s165 + $0xc0] sm:$0xff]
      %v242 = vld [vmem:[%s165 + $0xc8] sm:$0xff]
      %v243 = vld [vmem:[%s165 + $0xd0] sm:$0xff]
      %v244 = vld [vmem:[%s165 + $0xd8] sm:$0xff]
      %v245 = vld [vmem:[%s165 + $0xe0] sm:$0xff]
      %v246 = vld [vmem:[%s165 + $0xe8] sm:$0xff]
      %v247 = vld [vmem:[%s165 + $0xf0] sm:$0xff]
      %v248 = vld [vmem:[%s165 + $0xf8] sm:$0xff]
      %s249 = scalar_lea.vmem [#allocation2], 24
      %250 = vst.msk [vmem:[%s249 + $0x1] sm:$0xff] %vm171, %v217
      %251 = vst.msk [vmem:[%s249 + $0x9] sm:$0xff] %vm171, %v218
      %252 = vst.msk [vmem:[%s249 + $0x19] sm:$0xff] %vm171, %v219
      %253 = vst.msk [vmem:[%s249 + $0x21] sm:$0xff] %vm171, %v220
      %254 = vst.msk [vmem:[%s249 + $0x31] sm:$0xff] %vm171, %v221
      %255 = vst.msk [vmem:[%s249 + $0x39] sm:$0xff] %vm171, %v222
      %256 = vst.msk [vmem:[%s249 + $0x49] sm:$0xff] %vm171, %v223
      %257 = vst.msk [vmem:[%s249 + $0x51] sm:$0xff] %vm171, %v224
      %258 = vst.msk [vmem:[%s249 + $0x61] sm:$0xff] %vm171, %v225
      %259 = vst.msk [vmem:[%s249 + $0x69] sm:$0xff] %vm171, %v226
      %260 = vst.msk [vmem:[%s249 + $0x79] sm:$0xff] %vm171, %v227
      %261 = vst.msk [vmem:[%s249 + $0x81] sm:$0xff] %vm171, %v228
      %262 = vst.msk [vmem:[%s249 + $0x91] sm:$0xff] %vm171, %v229
      %263 = vst.msk [vmem:[%s249 + $0x99] sm:$0xff] %vm171, %v230
      %264 = vst.msk [vmem:[%s249 + $0xa9] sm:$0xff] %vm171, %v231
      %265 = vst.msk [vmem:[%s249 + $0xb1] sm:$0xff] %vm171, %v232
      %266 = vst.msk [vmem:[%s249 + $0xc1] sm:$0xff] %vm171, %v233
      %267 = vst.msk [vmem:[%s249 + $0xc9] sm:$0xff] %vm171, %v234
      %268 = vst.msk [vmem:[%s249 + $0xd9] sm:$0xff] %vm171, %v235
      %269 = vst.msk [vmem:[%s249 + $0xe1] sm:$0xff] %vm171, %v236
      %270 = vst.msk [vmem:[%s249 + $0xf1] sm:$0xff] %vm171, %v237
      %271 = vst.msk [vmem:[%s249 + $0xf9] sm:$0xff] %vm171, %v238
      %272 = vst.msk [vmem:[%s249 + $0x109] sm:$0xff] %vm171, %v239
      %273 = vst.msk [vmem:[%s249 + $0x111] sm:$0xff] %vm171, %v240
      %274 = vst.msk [vmem:[%s249 + $0x121] sm:$0xff] %vm171, %v241
      %275 = vst.msk [vmem:[%s249 + $0x129] sm:$0xff] %vm171, %v242
      %276 = vst.msk [vmem:[%s249 + $0x139] sm:$0xff] %vm171, %v243
      %277 = vst.msk [vmem:[%s249 + $0x141] sm:$0xff] %vm171, %v244
      %278 = vst.msk [vmem:[%s249 + $0x151] sm:$0xff] %vm171, %v245
      %279 = vst.msk [vmem:[%s249 + $0x159] sm:$0xff] %vm171, %v246
      %280 = vst.msk [vmem:[%s249 + $0x169] sm:$0xff] %vm171, %v247
      %281 = vst.msk [vmem:[%s249 + $0x171] sm:$0xff] %vm171, %v248
      %v282 = vld [vmem:[%s2] sm:$0x1]
      %v283 = vld [vmem:[#allocation2] sm:$0xff]
      %v284 = vld [vmem:[#allocation2 + $0x8] sm:$0xff]
      %v285 = vld [vmem:[#allocation2 + $0x18] sm:$0xff]
      %v286 = vld [vmem:[#allocation2 + $0x20] sm:$0xff]
      %v287 = vld [vmem:[#allocation2 + $0x30] sm:$0xff]
      %v288 = vld [vmem:[#allocation2 + $0x38] sm:$0xff]
      %v289 = vld [vmem:[#allocation2 + $0x48] sm:$0xff]
      %v290 = vld [vmem:[#allocation2 + $0x50] sm:$0xff]
      %v291 = vld [vmem:[#allocation2 + $0x60] sm:$0xff]
      %v292 = vld [vmem:[#allocation2 + $0x68] sm:$0xff]
      %v293 = vld [vmem:[#allocation2 + $0x78] sm:$0xff]
      %v294 = vld [vmem:[#allocation2 + $0x80] sm:$0xff]
      %v295 = vld [vmem:[#allocation2 + $0x90] sm:$0xff]
      %v296 = vld [vmem:[#allocation2 + $0x98] sm:$0xff]
      %v297 = vld [vmem:[#allocation2 + $0xa8] sm:$0xff]
      %v298 = vld [vmem:[#allocation2 + $0xb0] sm:$0xff]
      %v299 = vld [vmem:[#allocation2 + $0xc0] sm:$0xff]
      %v300 = vld [vmem:[#allocation2 + $0xc8] sm:$0xff]
      %v301 = vld [vmem:[#allocation2 + $0xd8] sm:$0xff]
      %v302 = vld [vmem:[#allocation2 + $0xe0] sm:$0xff]
      %v303 = vld [vmem:[#allocation2 + $0xf0] sm:$0xff]
      %v304 = vld [vmem:[#allocation2 + $0xf8] sm:$0xff]
      %v305 = vld [vmem:[#allocation2 + $0x108] sm:$0xff]
      %v306 = vld [vmem:[#allocation2 + $0x110] sm:$0xff]
      %v307 = vld [vmem:[#allocation2 + $0x120] sm:$0xff]
      %v308 = vld [vmem:[#allocation2 + $0x128] sm:$0xff]
      %v309 = vld [vmem:[#allocation2 + $0x138] sm:$0xff]
      %v310 = vld [vmem:[#allocation2 + $0x140] sm:$0xff]
      %v311 = vld [vmem:[#allocation2 + $0x150] sm:$0xff]
      %v312 = vld [vmem:[#allocation2 + $0x158] sm:$0xff]
      %v313 = vld [vmem:[#allocation2 + $0x168] sm:$0xff]
      %v314 = vld [vmem:[#allocation2 + $0x170] sm:$0xff]
      %v315 = vld [vmem:[#allocation2 + $0x1] sm:$0xff]
      %v316 = vld [vmem:[#allocation2 + $0x9] sm:$0xff]
      %v317 = vld [vmem:[#allocation2 + $0x19] sm:$0xff]
      %v318 = vld [vmem:[#allocation2 + $0x21] sm:$0xff]
      %v319 = vld [vmem:[#allocation2 + $0x31] sm:$0xff]
      %v320 = vld [vmem:[#allocation2 + $0x39] sm:$0xff]
      %v321 = vld [vmem:[#allocation2 + $0x49] sm:$0xff]
      %v322 = vld [vmem:[#allocation2 + $0x51] sm:$0xff]
      %v323 = vld [vmem:[#allocation2 + $0x61] sm:$0xff]
      %v324 = vld [vmem:[#allocation2 + $0x69] sm:$0xff]
      %v325 = vld [vmem:[#allocation2 + $0x79] sm:$0xff]
      %v326 = vld [vmem:[#allocation2 + $0x81] sm:$0xff]
      %v327 = vld [vmem:[#allocation2 + $0x91] sm:$0xff]
      %v328 = vld [vmem:[#allocation2 + $0x99] sm:$0xff]
      %v329 = vld [vmem:[#allocation2 + $0xa9] sm:$0xff]
      %v330 = vld [vmem:[#allocation2 + $0xb1] sm:$0xff]
      %v331 = vld [vmem:[#allocation2 + $0xc1] sm:$0xff]
      %v332 = vld [vmem:[#allocation2 + $0xc9] sm:$0xff]
      %v333 = vld [vmem:[#allocation2 + $0xd9] sm:$0xff]
      %v334 = vld [vmem:[#allocation2 + $0xe1] sm:$0xff]
      %v335 = vld [vmem:[#allocation2 + $0xf1] sm:$0xff]
      %v336 = vld [vmem:[#allocation2 + $0xf9] sm:$0xff]
      %v337 = vld [vmem:[#allocation2 + $0x109] sm:$0xff]
      %v338 = vld [vmem:[#allocation2 + $0x111] sm:$0xff]
      %v339 = vld [vmem:[#allocation2 + $0x121] sm:$0xff]
      %v340 = vld [vmem:[#allocation2 + $0x129] sm:$0xff]
      %v341 = vld [vmem:[#allocation2 + $0x139] sm:$0xff]
      %v342 = vld [vmem:[#allocation2 + $0x141] sm:$0xff]
      %v343 = vld [vmem:[#allocation2 + $0x151] sm:$0xff]
      %v344 = vld [vmem:[#allocation2 + $0x159] sm:$0xff]
      %v345 = vld [vmem:[#allocation2 + $0x169] sm:$0xff]
      %v346 = vld [vmem:[#allocation2 + $0x171] sm:$0xff]
      %v347 = vld [vmem:[%s249] sm:$0xff]
      %v348 = vld [vmem:[%s249 + $0x8] sm:$0xff]
      %v349 = vld [vmem:[%s249 + $0x18] sm:$0xff]
      %v350 = vld [vmem:[%s249 + $0x20] sm:$0xff]
      %v351 = vld [vmem:[%s249 + $0x30] sm:$0xff]
      %v352 = vld [vmem:[%s249 + $0x38] sm:$0xff]
      %v353 = vld [vmem:[%s249 + $0x48] sm:$0xff]
      %v354 = vld [vmem:[%s249 + $0x50] sm:$0xff]
      %v355 = vld [vmem:[%s249 + $0x60] sm:$0xff]
      %v356 = vld [vmem:[%s249 + $0x68] sm:$0xff]
      %v357 = vld [vmem:[%s249 + $0x78] sm:$0xff]
      %v358 = vld [vmem:[%s249 + $0x80] sm:$0xff]
      %v359 = vld [vmem:[%s249 + $0x90] sm:$0xff]
      %v360 = vld [vmem:[%s249 + $0x98] sm:$0xff]
      %v361 = vld [vmem:[%s249 + $0xa8] sm:$0xff]
      %v362 = vld [vmem:[%s249 + $0xb0] sm:$0xff]
      %v363 = vld [vmem:[%s249 + $0xc0] sm:$0xff]
      %v364 = vld [vmem:[%s249 + $0xc8] sm:$0xff]
      %v365 = vld [vmem:[%s249 + $0xd8] sm:$0xff]
      %v366 = vld [vmem:[%s249 + $0xe0] sm:$0xff]
      %v367 = vld [vmem:[%s249 + $0xf0] sm:$0xff]
      %v368 = vld [vmem:[%s249 + $0xf8] sm:$0xff]
      %v369 = vld [vmem:[%s249 + $0x108] sm:$0xff]
      %v370 = vld [vmem:[%s249 + $0x110] sm:$0xff]
      %v371 = vld [vmem:[%s249 + $0x120] sm:$0xff]
      %v372 = vld [vmem:[%s249 + $0x128] sm:$0xff]
      %v373 = vld [vmem:[%s249 + $0x138] sm:$0xff]
      %v374 = vld [vmem:[%s249 + $0x140] sm:$0xff]
      %v375 = vld [vmem:[%s249 + $0x150] sm:$0xff]
      %v376 = vld [vmem:[%s249 + $0x158] sm:$0xff]
      %v377 = vld [vmem:[%s249 + $0x168] sm:$0xff]
      %v378 = vld [vmem:[%s249 + $0x170] sm:$0xff]
      %v379 = vld [vmem:[%s249 + $0x1] sm:$0xff]
      %v380 = vld [vmem:[%s249 + $0x9] sm:$0xff]
      %v381 = vld [vmem:[%s249 + $0x19] sm:$0xff]
      %v382 = vld [vmem:[%s249 + $0x21] sm:$0xff]
      %v383 = vld [vmem:[%s249 + $0x31] sm:$0xff]
      %v384 = vld [vmem:[%s249 + $0x39] sm:$0xff]
      %v385 = vld [vmem:[%s249 + $0x49] sm:$0xff]
      %v386 = vld [vmem:[%s249 + $0x51] sm:$0xff]
      %v387 = vld [vmem:[%s249 + $0x61] sm:$0xff]
      %v388 = vld [vmem:[%s249 + $0x69] sm:$0xff]
      %v389 = vld [vmem:[%s249 + $0x79] sm:$0xff]
      %v390 = vld [vmem:[%s249 + $0x81] sm:$0xff]
      %v391 = vld [vmem:[%s249 + $0x91] sm:$0xff]
      %v392 = vld [vmem:[%s249 + $0x99] sm:$0xff]
      %v393 = vld [vmem:[%s249 + $0xa9] sm:$0xff]
      %v394 = vld [vmem:[%s249 + $0xb1] sm:$0xff]
      %v395 = vld [vmem:[%s249 + $0xc1] sm:$0xff]
      %v396 = vld [vmem:[%s249 + $0xc9] sm:$0xff]
      %v397 = vld [vmem:[%s249 + $0xd9] sm:$0xff]
      %v398 = vld [vmem:[%s249 + $0xe1] sm:$0xff]
      %v399 = vld [vmem:[%s249 + $0xf1] sm:$0xff]
      %v400 = vld [vmem:[%s249 + $0xf9] sm:$0xff]
      %v401 = vld [vmem:[%s249 + $0x109] sm:$0xff]
      %v402 = vld [vmem:[%s249 + $0x111] sm:$0xff]
      %v403 = vld [vmem:[%s249 + $0x121] sm:$0xff]
      %v404 = vld [vmem:[%s249 + $0x129] sm:$0xff]
      %v405 = vld [vmem:[%s249 + $0x139] sm:$0xff]
      %v406 = vld [vmem:[%s249 + $0x141] sm:$0xff]
      %v407 = vld [vmem:[%s249 + $0x151] sm:$0xff]
      %v408 = vld [vmem:[%s249 + $0x159] sm:$0xff]
      %v409 = vld [vmem:[%s249 + $0x169] sm:$0xff]
      %v410 = vld [vmem:[%s249 + $0x171] sm:$0xff]
      %443 = vrot.lane.b32.xlu0 %v315, 4
      %v444 = vpop.permute.xlu0 %443
      %445 = vrot.lane.b32.xlu0 %v316, 4
      %v446 = vpop.permute.xlu0 %445
      %447 = vrot.lane.b32.xlu0 %v317, 4
      %v448 = vpop.permute.xlu0 %447
      %449 = vrot.lane.b32.xlu0 %v318, 4
      %v450 = vpop.permute.xlu0 %449
      %451 = vrot.lane.b32.xlu0 %v319, 4
      %v452 = vpop.permute.xlu0 %451
      %453 = vrot.lane.b32.xlu0 %v320, 4
      %v454 = vpop.permute.xlu0 %453
      %455 = vrot.lane.b32.xlu0 %v321, 4
      %v456 = vpop.permute.xlu0 %455
      %457 = vrot.lane.b32.xlu0 %v322, 4
      %v458 = vpop.permute.xlu0 %457
      %459 = vrot.lane.b32.xlu0 %v323, 4
      %v460 = vpop.permute.xlu0 %459
      %461 = vrot.lane.b32.xlu0 %v324, 4
      %v462 = vpop.permute.xlu0 %461
      %463 = vrot.lane.b32.xlu0 %v325, 4
      %v464 = vpop.permute.xlu0 %463
      %465 = vrot.lane.b32.xlu0 %v326, 4
      %v466 = vpop.permute.xlu0 %465
      %467 = vrot.lane.b32.xlu0 %v327, 4
      %v468 = vpop.permute.xlu0 %467
      %469 = vrot.lane.b32.xlu0 %v328, 4
      %v470 = vpop.permute.xlu0 %469
      %471 = vrot.lane.b32.xlu0 %v329, 4
      %v472 = vpop.permute.xlu0 %471
      %473 = vrot.lane.b32.xlu0 %v330, 4
      %v474 = vpop.permute.xlu0 %473
      %475 = vrot.lane.b32.xlu0 %v331, 4
      %v476 = vpop.permute.xlu0 %475
      %477 = vrot.lane.b32.xlu0 %v332, 4
      %v478 = vpop.permute.xlu0 %477
      %479 = vrot.lane.b32.xlu0 %v333, 4
      %v480 = vpop.permute.xlu0 %479
      %481 = vrot.lane.b32.xlu0 %v334, 4
      %v482 = vpop.permute.xlu0 %481
      %483 = vrot.lane.b32.xlu0 %v335, 4
      %v484 = vpop.permute.xlu0 %483
      %485 = vrot.lane.b32.xlu0 %v336, 4
      %v486 = vpop.permute.xlu0 %485
      %487 = vrot.lane.b32.xlu0 %v337, 4
      %v488 = vpop.permute.xlu0 %487
      %489 = vrot.lane.b32.xlu0 %v338, 4
      %v490 = vpop.permute.xlu0 %489
      %491 = vrot.lane.b32.xlu0 %v339, 4
      %v492 = vpop.permute.xlu0 %491
      %493 = vrot.lane.b32.xlu0 %v340, 4
      %v494 = vpop.permute.xlu0 %493
      %495 = vrot.lane.b32.xlu0 %v341, 4
      %v496 = vpop.permute.xlu0 %495
      %497 = vrot.lane.b32.xlu0 %v342, 4
      %v498 = vpop.permute.xlu0 %497
      %499 = vrot.lane.b32.xlu0 %v343, 4
      %v500 = vpop.permute.xlu0 %499
      %501 = vrot.lane.b32.xlu0 %v344, 4
      %v502 = vpop.permute.xlu0 %501
      %503 = vrot.lane.b32.xlu0 %v345, 4
      %v504 = vpop.permute.xlu0 %503
      %505 = vrot.lane.b32.xlu0 %v346, 4
      %v506 = vpop.permute.xlu0 %505
      %571 = vrot.lane.b32.xlu0 %v347, 8
      %v572 = vpop.permute.xlu0 %571
      %573 = vrot.lane.b32.xlu0 %v348, 8
      %v574 = vpop.permute.xlu0 %573
      %575 = vrot.lane.b32.xlu0 %v349, 8
      %v576 = vpop.permute.xlu0 %575
      %577 = vrot.lane.b32.xlu0 %v350, 8
      %v578 = vpop.permute.xlu0 %577
      %579 = vrot.lane.b32.xlu0 %v351, 8
      %v580 = vpop.permute.xlu0 %579
      %581 = vrot.lane.b32.xlu0 %v352, 8
      %v582 = vpop.permute.xlu0 %581
      %583 = vrot.lane.b32.xlu0 %v353, 8
      %v584 = vpop.permute.xlu0 %583
      %585 = vrot.lane.b32.xlu0 %v354, 8
      %v586 = vpop.permute.xlu0 %585
      %587 = vrot.lane.b32.xlu0 %v355, 8
      %v588 = vpop.permute.xlu0 %587
      %589 = vrot.lane.b32.xlu0 %v356, 8
      %v590 = vpop.permute.xlu0 %589
      %591 = vrot.lane.b32.xlu0 %v357, 8
      %v592 = vpop.permute.xlu0 %591
      %593 = vrot.lane.b32.xlu0 %v358, 8
      %v594 = vpop.permute.xlu0 %593
      %595 = vrot.lane.b32.xlu0 %v359, 8
      %v596 = vpop.permute.xlu0 %595
      %597 = vrot.lane.b32.xlu0 %v360, 8
      %v598 = vpop.permute.xlu0 %597
      %599 = vrot.lane.b32.xlu0 %v361, 8
      %v600 = vpop.permute.xlu0 %599
      %601 = vrot.lane.b32.xlu0 %v362, 8
      %v602 = vpop.permute.xlu0 %601
      %603 = vrot.lane.b32.xlu0 %v363, 8
      %v604 = vpop.permute.xlu0 %603
      %605 = vrot.lane.b32.xlu0 %v364, 8
      %v606 = vpop.permute.xlu0 %605
      %607 = vrot.lane.b32.xlu0 %v365, 8
      %v608 = vpop.permute.xlu0 %607
      %609 = vrot.lane.b32.xlu0 %v366, 8
      %v610 = vpop.permute.xlu0 %609
      %611 = vrot.lane.b32.xlu0 %v367, 8
      %v612 = vpop.permute.xlu0 %611
      %613 = vrot.lane.b32.xlu0 %v368, 8
      %v614 = vpop.permute.xlu0 %613
      %615 = vrot.lane.b32.xlu0 %v369, 8
      %v616 = vpop.permute.xlu0 %615
      %617 = vrot.lane.b32.xlu0 %v370, 8
      %v618 = vpop.permute.xlu0 %617
      %619 = vrot.lane.b32.xlu0 %v371, 8
      %v620 = vpop.permute.xlu0 %619
      %621 = vrot.lane.b32.xlu0 %v372, 8
      %v622 = vpop.permute.xlu0 %621
      %623 = vrot.lane.b32.xlu0 %v373, 8
      %v624 = vpop.permute.xlu0 %623
      %625 = vrot.lane.b32.xlu0 %v374, 8
      %v626 = vpop.permute.xlu0 %625
      %627 = vrot.lane.b32.xlu0 %v375, 8
      %v628 = vpop.permute.xlu0 %627
      %629 = vrot.lane.b32.xlu0 %v376, 8
      %v630 = vpop.permute.xlu0 %629
      %631 = vrot.lane.b32.xlu0 %v377, 8
      %v632 = vpop.permute.xlu0 %631
      %633 = vrot.lane.b32.xlu0 %v378, 8
      %v634 = vpop.permute.xlu0 %633
      %699 = vrot.lane.b32.xlu0 %v379, 12
      %v700 = vpop.permute.xlu0 %699
      %701 = vrot.lane.b32.xlu0 %v380, 12
      %v702 = vpop.permute.xlu0 %701
      %703 = vrot.lane.b32.xlu0 %v381, 12
      %v704 = vpop.permute.xlu0 %703
      %705 = vrot.lane.b32.xlu0 %v382, 12
      %v706 = vpop.permute.xlu0 %705
      %707 = vrot.lane.b32.xlu0 %v383, 12
      %v708 = vpop.permute.xlu0 %707
      %709 = vrot.lane.b32.xlu0 %v384, 12
      %v710 = vpop.permute.xlu0 %709
      %711 = vrot.lane.b32.xlu0 %v385, 12
      %v712 = vpop.permute.xlu0 %711
      %713 = vrot.lane.b32.xlu0 %v386, 12
      %v714 = vpop.permute.xlu0 %713
      %715 = vrot.lane.b32.xlu0 %v387, 12
      %v716 = vpop.permute.xlu0 %715
      %717 = vrot.lane.b32.xlu0 %v388, 12
      %v718 = vpop.permute.xlu0 %717
      %719 = vrot.lane.b32.xlu0 %v389, 12
      %v720 = vpop.permute.xlu0 %719
      %721 = vrot.lane.b32.xlu0 %v390, 12
      %v722 = vpop.permute.xlu0 %721
      %723 = vrot.lane.b32.xlu0 %v391, 12
      %v724 = vpop.permute.xlu0 %723
      %725 = vrot.lane.b32.xlu0 %v392, 12
      %v726 = vpop.permute.xlu0 %725
      %727 = vrot.lane.b32.xlu0 %v393, 12
      %v728 = vpop.permute.xlu0 %727
      %729 = vrot.lane.b32.xlu0 %v394, 12
      %v730 = vpop.permute.xlu0 %729
      %731 = vrot.lane.b32.xlu0 %v395, 12
      %v732 = vpop.permute.xlu0 %731
      %733 = vrot.lane.b32.xlu0 %v396, 12
      %v734 = vpop.permute.xlu0 %733
      %735 = vrot.lane.b32.xlu0 %v397, 12
      %v736 = vpop.permute.xlu0 %735
      %737 = vrot.lane.b32.xlu0 %v398, 12
      %v738 = vpop.permute.xlu0 %737
      %739 = vrot.lane.b32.xlu0 %v399, 12
      %v740 = vpop.permute.xlu0 %739
      %741 = vrot.lane.b32.xlu0 %v400, 12
      %v742 = vpop.permute.xlu0 %741
      %743 = vrot.lane.b32.xlu0 %v401, 12
      %v744 = vpop.permute.xlu0 %743
      %745 = vrot.lane.b32.xlu0 %v402, 12
      %v746 = vpop.permute.xlu0 %745
      %747 = vrot.lane.b32.xlu0 %v403, 12
      %v748 = vpop.permute.xlu0 %747
      %749 = vrot.lane.b32.xlu0 %v404, 12
      %v750 = vpop.permute.xlu0 %749
      %751 = vrot.lane.b32.xlu0 %v405, 12
      %v752 = vpop.permute.xlu0 %751
      %753 = vrot.lane.b32.xlu0 %v406, 12
      %v754 = vpop.permute.xlu0 %753
      %755 = vrot.lane.b32.xlu0 %v407, 12
      %v756 = vpop.permute.xlu0 %755
      %757 = vrot.lane.b32.xlu0 %v408, 12
      %v758 = vpop.permute.xlu0 %757
      %759 = vrot.lane.b32.xlu0 %v409, 12
      %v760 = vpop.permute.xlu0 %759
      %761 = vrot.lane.b32.xlu0 %v410, 12
      %v762 = vpop.permute.xlu0 %761
      %v795 = vsel %vm171, %v283, %v444
      %v796 = vsel %vm171, %v284, %v446
      %v797 = vsel %vm171, %v285, %v448
      %v798 = vsel %vm171, %v286, %v450
      %v799 = vsel %vm171, %v287, %v452
      %v800 = vsel %vm171, %v288, %v454
      %v801 = vsel %vm171, %v289, %v456
      %v802 = vsel %vm171, %v290, %v458
      %v803 = vsel %vm171, %v291, %v460
      %v804 = vsel %vm171, %v292, %v462
      %v805 = vsel %vm171, %v293, %v464
      %v806 = vsel %vm171, %v294, %v466
      %v807 = vsel %vm171, %v295, %v468
      %v808 = vsel %vm171, %v296, %v470
      %v809 = vsel %vm171, %v297, %v472
      %v810 = vsel %vm171, %v298, %v474
      %v811 = vsel %vm171, %v299, %v476
      %v812 = vsel %vm171, %v300, %v478
      %v813 = vsel %vm171, %v301, %v480
      %v814 = vsel %vm171, %v302, %v482
      %v815 = vsel %vm171, %v303, %v484
      %v816 = vsel %vm171, %v304, %v486
      %v817 = vsel %vm171, %v305, %v488
      %v818 = vsel %vm171, %v306, %v490
      %v819 = vsel %vm171, %v307, %v492
      %v820 = vsel %vm171, %v308, %v494
      %v821 = vsel %vm171, %v309, %v496
      %v822 = vsel %vm171, %v310, %v498
      %v823 = vsel %vm171, %v311, %v500
      %v824 = vsel %vm171, %v312, %v502
      %v825 = vsel %vm171, %v313, %v504
      %v826 = vsel %vm171, %v314, %v506
      %vm827 = vcmask 64512
      %v828 = vsel %vm827, %v795, %v572
      %v829 = vsel %vm827, %v796, %v574
      %v830 = vsel %vm827, %v797, %v576
      %v831 = vsel %vm827, %v798, %v578
      %v832 = vsel %vm827, %v799, %v580
      %v833 = vsel %vm827, %v800, %v582
      %v834 = vsel %vm827, %v801, %v584
      %v835 = vsel %vm827, %v802, %v586
      %v836 = vsel %vm827, %v803, %v588
      %v837 = vsel %vm827, %v804, %v590
      %v838 = vsel %vm827, %v805, %v592
      %v839 = vsel %vm827, %v806, %v594
      %v840 = vsel %vm827, %v807, %v596
      %v841 = vsel %vm827, %v808, %v598
      %v842 = vsel %vm827, %v809, %v600
      %v843 = vsel %vm827, %v810, %v602
      %v844 = vsel %vm827, %v811, %v604
      %v845 = vsel %vm827, %v812, %v606
      %v846 = vsel %vm827, %v813, %v608
      %v847 = vsel %vm827, %v814, %v610
      %v848 = vsel %vm827, %v815, %v612
      %v849 = vsel %vm827, %v816, %v614
      %v850 = vsel %vm827, %v817, %v616
      %v851 = vsel %vm827, %v818, %v618
      %v852 = vsel %vm827, %v819, %v620
      %v853 = vsel %vm827, %v820, %v622
      %v854 = vsel %vm827, %v821, %v624
      %v855 = vsel %vm827, %v822, %v626
      %v856 = vsel %vm827, %v823, %v628
      %v857 = vsel %vm827, %v824, %v630
      %v858 = vsel %vm827, %v825, %v632
      %v859 = vsel %vm827, %v826, %v634
      %vm860 = vcmask 97280
      %v861 = vsel %vm860, %v828, %v700
      %v862 = vsel %vm860, %v829, %v702
      %v863 = vsel %vm860, %v830, %v704
      %v864 = vsel %vm860, %v831, %v706
      %v865 = vsel %vm860, %v832, %v708
      %v866 = vsel %vm860, %v833, %v710
      %v867 = vsel %vm860, %v834, %v712
      %v868 = vsel %vm860, %v835, %v714
      %v869 = vsel %vm860, %v836, %v716
      %v870 = vsel %vm860, %v837, %v718
      %v871 = vsel %vm860, %v838, %v720
      %v872 = vsel %vm860, %v839, %v722
      %v873 = vsel %vm860, %v840, %v724
      %v874 = vsel %vm860, %v841, %v726
      %v875 = vsel %vm860, %v842, %v728
      %v876 = vsel %vm860, %v843, %v730
      %v877 = vsel %vm860, %v844, %v732
      %v878 = vsel %vm860, %v845, %v734
      %v879 = vsel %vm860, %v846, %v736
      %v880 = vsel %vm860, %v847, %v738
      %v881 = vsel %vm860, %v848, %v740
      %v882 = vsel %vm860, %v849, %v742
      %v883 = vsel %vm860, %v850, %v744
      %v884 = vsel %vm860, %v851, %v746
      %v885 = vsel %vm860, %v852, %v748
      %v886 = vsel %vm860, %v853, %v750
      %v887 = vsel %vm860, %v854, %v752
      %v888 = vsel %vm860, %v855, %v754
      %v889 = vsel %vm860, %v856, %v756
      %v890 = vsel %vm860, %v857, %v758
      %v891 = vsel %vm860, %v858, %v760
      %v892 = vsel %vm860, %v859, %v762
      %v893 = vld [vmem:[%s1] sm:$0xff]
      %v894 = vld [vmem:[%s1 + $0x8] sm:$0xff]
      %vm895 = vcmask 130048
      %v897 = vsel %vm895, %v861, 0
      %v900 = vsel %vm895, %v862, 0
      %v903 = vsel %vm895, %v863, 0
      %v906 = vsel %vm895, %v864, 0
      %v909 = vsel %vm895, %v865, 0
      %v912 = vsel %vm895, %v866, 0
      %v915 = vsel %vm895, %v867, 0
      %v918 = vsel %vm895, %v868, 0
      %v921 = vsel %vm895, %v869, 0
      %v924 = vsel %vm895, %v870, 0
      %v927 = vsel %vm895, %v871, 0
      %v930 = vsel %vm895, %v872, 0
      %v933 = vsel %vm895, %v873, 0
      %v936 = vsel %vm895, %v874, 0
      %v939 = vsel %vm895, %v875, 0
      %v942 = vsel %vm895, %v876, 0
      %v945 = vsel %vm895, %v877, 0
      %v948 = vsel %vm895, %v878, 0
      %v951 = vsel %vm895, %v879, 0
      %v954 = vsel %vm895, %v880, 0
      %v957 = vsel %vm895, %v881, 0
      %v960 = vsel %vm895, %v882, 0
      %v963 = vsel %vm895, %v883, 0
      %v966 = vsel %vm895, %v884, 0
      %v969 = vsel %vm895, %v885, 0
      %v972 = vsel %vm895, %v886, 0
      %v975 = vsel %vm895, %v887, 0
      %v978 = vsel %vm895, %v888, 0
      %v981 = vsel %vm895, %v889, 0
      %v984 = vsel %vm895, %v890, 0
      %v987 = vsel %vm895, %v891, 0
      %v990 = vsel %vm895, %v892, 0
      %992 = vmatprep.subr.mxu0 0.0
      %993 = vmatpush1.msra.mxu0 %v893
      %994 = vmatprep.subr.mxu0 0.0
      %995 = vmatpush1.msra.mxu0 %v894
      %996 = vmatprep.subr.mxu0 0.0
      %997 = vmatpush1.msra.mxu0 0.0
      %998 = vmatprep.subr.mxu0 0.0
      %999 = vmatpush1.msra.mxu0 0.0
      %1000 = vmatprep.subr.mxu0 0.0
      %1001 = vmatpush1.msra.mxu0 0.0
      %1002 = vmatprep.subr.mxu0 0.0
      %1003 = vmatpush1.msra.mxu0 0.0
      %1004 = vmatprep.subr.mxu0 0.0
      %1005 = vmatpush1.msra.mxu0 0.0
      %1006 = vmatprep.subr.mxu0 0.0
      %1007 = vmatpush1.msra.mxu0 0.0
      %1008 = vmatprep.subr.mxu0 0.0
      %1009 = vmatpush1.msra.mxu0 0.0
      %1010 = vmatprep.subr.mxu0 0.0
      %1011 = vmatpush1.msra.mxu0 0.0
      %1012 = vmatprep.subr.mxu0 0.0
      %1013 = vmatpush1.msra.mxu0 0.0
      %1014 = vmatprep.subr.mxu0 0.0
      %1015 = vmatpush1.msra.mxu0 0.0
      %1016 = vmatprep.subr.mxu0 0.0
      %1017 = vmatpush1.msra.mxu0 0.0
      %1018 = vmatprep.subr.mxu0 0.0
      %1019 = vmatpush1.msra.mxu0 0.0
      %1020 = vmatprep.subr.mxu0 0.0
      %1021 = vmatpush1.msra.mxu0 0.0
      %1022 = vmatprep.subr.mxu0 0.0
      %1023 = vmatpush1.msra.mxu0 0.0
      %1024 = vmatprep.subr.mxu0 0.0
      %1025 = vmatpush1.msra.mxu0 0.0
      %1026 = vmatprep.subr.mxu0 0.0
      %1027 = vmatpush1.msra.mxu0 0.0
      %1028 = vmatprep.subr.mxu0 0.0
      %1029 = vmatpush1.msra.mxu0 0.0
      %1030 = vmatprep.subr.mxu0 0.0
      %1031 = vmatpush1.msra.mxu0 0.0
      %1032 = vmatprep.subr.mxu0 0.0
      %1033 = vmatpush1.msra.mxu0 0.0
      %1034 = vmatprep.subr.mxu0 0.0
      %1035 = vmatpush1.msra.mxu0 0.0
      %1036 = vmatprep.subr.mxu0 0.0
      %1037 = vmatpush1.msra.mxu0 0.0
      %1038 = vmatprep.subr.mxu0 0.0
      %1039 = vmatpush1.msra.mxu0 0.0
      %1040 = vmatprep.subr.mxu0 0.0
      %1041 = vmatpush1.msra.mxu0 0.0
      %1042 = vmatprep.subr.mxu0 0.0
      %1043 = vmatpush1.msra.mxu0 0.0
      %1044 = vmatprep.subr.mxu0 0.0
      %1045 = vmatpush1.msra.mxu0 0.0
      %1046 = vmatprep.subr.mxu0 0.0
      %1047 = vmatpush1.msra.mxu0 0.0
      %1048 = vmatprep.subr.mxu0 0.0
      %1049 = vmatpush1.msra.mxu0 0.0
      %1050 = vmatprep.subr.mxu0 0.0
      %1051 = vmatpush1.msra.mxu0 0.0
      %1052 = vmatprep.subr.mxu0 0.0
      %1053 = vmatpush1.msra.mxu0 0.0
      %1054 = vmatprep.subr.mxu0 0.0
      %1055 = vmatpush1.msra.mxu0 0.0
      %1056 = vmatprep.mubr.f32.mxu0 0.0
      %1057 = vmatmul.mubr.f32.gmra.mrb[0].mxu0 %v897
      %v1058 = vpop.f32.mrb[0].mxu0
      %v1059 = vadd.f32 0.0, %v1058
      %v1060 = vpop.f32.mrb[0].mxu0
      %1061 = vmatprep.mubr.f32.mxu0 0.0
      %1062 = vmatmul.mubr.f32.gmra.mrb[0].mxu0 %v900
      %v1063 = vpop.f32.mrb[0].mxu0
      %v1064 = vadd.f32 0.0, %v1063
      %v1065 = vpop.f32.mrb[0].mxu0
      %1066 = vmatprep.mubr.f32.mxu0 0.0
      %1067 = vmatmul.mubr.f32.gmra.mrb[0].mxu0 %v903
      %v1068 = vpop.f32.mrb[0].mxu0
      %v1069 = vadd.f32 0.0, %v1068
      %v1070 = vpop.f32.mrb[0].mxu0
      %1071 = vmatprep.mubr.f32.mxu0 0.0
      %1072 = vmatmul.mubr.f32.gmra.mrb[0].mxu0 %v906
      %v1073 = vpop.f32.mrb[0].mxu0
      %v1074 = vadd.f32 0.0, %v1073
      %v1075 = vpop.f32.mrb[0].mxu0
      %1076 = vmatprep.mubr.f32.mxu0 0.0
      %1077 = vmatmul.mubr.f32.gmra.mrb[0].mxu0 %v909
      %v1078 = vpop.f32.mrb[0].mxu0
      %v1079 = vadd.f32 0.0, %v1078
      %v1080 = vpop.f32.mrb[0].mxu0
      %1081 = vmatprep.mubr.f32.mxu0 0.0
      %1082 = vmatmul.mubr.f32.gmra.mrb[0].mxu0 %v912
      %v1083 = vpop.f32.mrb[0].mxu0
      %v1084 = vadd.f32 0.0, %v1083
      %v1085 = vpop.f32.mrb[0].mxu0
      %1086 = vmatprep.mubr.f32.mxu0 0.0
      %1087 = vmatmul.mubr.f32.gmra.mrb[0].mxu0 %v915
      %v1088 = vpop.f32.mrb[0].mxu0
      %v1089 = vadd.f32 0.0, %v1088
      %v1090 = vpop.f32.mrb[0].mxu0
      %1091 = vmatprep.mubr.f32.mxu0 0.0
      %1092 = vmatmul.mubr.f32.gmra.mrb[0].mxu0 %v918
      %v1093 = vpop.f32.mrb[0].mxu0
      %v1094 = vadd.f32 0.0, %v1093
      %v1095 = vpop.f32.mrb[0].mxu0
      %1096 = vmatprep.mubr.f32.mxu0 0.0
      %1097 = vmatmul.mubr.f32.gmra.mrb[0].mxu0 %v921
      %v1098 = vpop.f32.mrb[0].mxu0
      %v1099 = vadd.f32 0.0, %v1098
      %v1100 = vpop.f32.mrb[0].mxu0
      %1101 = vmatprep.mubr.f32.mxu0 0.0
      %1102 = vmatmul.mubr.f32.gmra.mrb[0].mxu0 %v924
      %v1103 = vpop.f32.mrb[0].mxu0
      %v1104 = vadd.f32 0.0, %v1103
      %v1105 = vpop.f32.mrb[0].mxu0
      %1106 = vmatprep.mubr.f32.mxu0 0.0
      %1107 = vmatmul.mubr.f32.gmra.mrb[0].mxu0 %v927
      %v1108 = vpop.f32.mrb[0].mxu0
      %v1109 = vadd.f32 0.0, %v1108
      %v1110 = vpop.f32.mrb[0].mxu0
      %1111 = vmatprep.mubr.f32.mxu0 0.0
      %1112 = vmatmul.mubr.f32.gmra.mrb[0].mxu0 %v930
      %v1113 = vpop.f32.mrb[0].mxu0
      %v1114 = vadd.f32 0.0, %v1113
      %v1115 = vpop.f32.mrb[0].mxu0
      %1116 = vmatprep.mubr.f32.mxu0 0.0
      %1117 = vmatmul.mubr.f32.gmra.mrb[0].mxu0 %v933
      %v1118 = vpop.f32.mrb[0].mxu0
      %v1119 = vadd.f32 0.0, %v1118
      %v1120 = vpop.f32.mrb[0].mxu0
      %1121 = vmatprep.mubr.f32.mxu0 0.0
      %1122 = vmatmul.mubr.f32.gmra.mrb[0].mxu0 %v936
      %v1123 = vpop.f32.mrb[0].mxu0
      %v1124 = vadd.f32 0.0, %v1123
      %v1125 = vpop.f32.mrb[0].mxu0
      %1126 = vmatprep.mubr.f32.mxu0 0.0
      %1127 = vmatmul.mubr.f32.gmra.mrb[0].mxu0 %v939
      %v1128 = vpop.f32.mrb[0].mxu0
      %v1129 = vadd.f32 0.0, %v1128
      %v1130 = vpop.f32.mrb[0].mxu0
      %1131 = vmatprep.mubr.f32.mxu0 0.0
      %1132 = vmatmul.mubr.f32.gmra.mrb[0].mxu0 %v942
      %v1133 = vpop.f32.mrb[0].mxu0
      %v1134 = vadd.f32 0.0, %v1133
      %v1135 = vpop.f32.mrb[0].mxu0
      %1136 = vmatprep.mubr.f32.mxu0 0.0
      %1137 = vmatmul.mubr.f32.gmra.mrb[0].mxu0 %v945
      %v1138 = vpop.f32.mrb[0].mxu0
      %v1139 = vadd.f32 0.0, %v1138
      %v1140 = vpop.f32.mrb[0].mxu0
      %1141 = vmatprep.mubr.f32.mxu0 0.0
      %1142 = vmatmul.mubr.f32.gmra.mrb[0].mxu0 %v948
      %v1143 = vpop.f32.mrb[0].mxu0
      %v1144 = vadd.f32 0.0, %v1143
      %v1145 = vpop.f32.mrb[0].mxu0
      %1146 = vmatprep.mubr.f32.mxu0 0.0
      %1147 = vmatmul.mubr.f32.gmra.mrb[0].mxu0 %v951
      %v1148 = vpop.f32.mrb[0].mxu0
      %v1149 = vadd.f32 0.0, %v1148
      %v1150 = vpop.f32.mrb[0].mxu0
      %1151 = vmatprep.mubr.f32.mxu0 0.0
      %1152 = vmatmul.mubr.f32.gmra.mrb[0].mxu0 %v954
      %v1153 = vpop.f32.mrb[0].mxu0
      %v1154 = vadd.f32 0.0, %v1153
      %v1155 = vpop.f32.mrb[0].mxu0
      %1156 = vmatprep.mubr.f32.mxu0 0.0
      %1157 = vmatmul.mubr.f32.gmra.mrb[0].mxu0 %v957
      %v1158 = vpop.f32.mrb[0].mxu0
      %v1159 = vadd.f32 0.0, %v1158
      %v1160 = vpop.f32.mrb[0].mxu0
      %1161 = vmatprep.mubr.f32.mxu0 0.0
      %1162 = vmatmul.mubr.f32.gmra.mrb[0].mxu0 %v960
      %v1163 = vpop.f32.mrb[0].mxu0
      %v1164 = vadd.f32 0.0, %v1163
      %v1165 = vpop.f32.mrb[0].mxu0
      %1166 = vmatprep.mubr.f32.mxu0 0.0
      %1167 = vmatmul.mubr.f32.gmra.mrb[0].mxu0 %v963
      %v1168 = vpop.f32.mrb[0].mxu0
      %v1169 = vadd.f32 0.0, %v1168
      %v1170 = vpop.f32.mrb[0].mxu0
      %1171 = vmatprep.mubr.f32.mxu0 0.0
      %1172 = vmatmul.mubr.f32.gmra.mrb[0].mxu0 %v966
      %v1173 = vpop.f32.mrb[0].mxu0
      %v1174 = vadd.f32 0.0, %v1173
      %v1175 = vpop.f32.mrb[0].mxu0
      %1176 = vmatprep.mubr.f32.mxu0 0.0
      %1177 = vmatmul.mubr.f32.gmra.mrb[0].mxu0 %v969
      %v1178 = vpop.f32.mrb[0].mxu0
      %v1179 = vadd.f32 0.0, %v1178
      %v1180 = vpop.f32.mrb[0].mxu0
      %1181 = vmatprep.mubr.f32.mxu0 0.0
      %1182 = vmatmul.mubr.f32.gmra.mrb[0].mxu0 %v972
      %v1183 = vpop.f32.mrb[0].mxu0
      %v1184 = vadd.f32 0.0, %v1183
      %v1185 = vpop.f32.mrb[0].mxu0
      %1186 = vmatprep.mubr.f32.mxu0 0.0
      %1187 = vmatmul.mubr.f32.gmra.mrb[0].mxu0 %v975
      %v1188 = vpop.f32.mrb[0].mxu0
      %v1189 = vadd.f32 0.0, %v1188
      %v1190 = vpop.f32.mrb[0].mxu0
      %1191 = vmatprep.mubr.f32.mxu0 0.0
      %1192 = vmatmul.mubr.f32.gmra.mrb[0].mxu0 %v978
      %v1193 = vpop.f32.mrb[0].mxu0
      %v1194 = vadd.f32 0.0, %v1193
      %v1195 = vpop.f32.mrb[0].mxu0
      %1196 = vmatprep.mubr.f32.mxu0 0.0
      %1197 = vmatmul.mubr.f32.gmra.mrb[0].mxu0 %v981
      %v1198 = vpop.f32.mrb[0].mxu0
      %v1199 = vadd.f32 0.0, %v1198
      %v1200 = vpop.f32.mrb[0].mxu0
      %1201 = vmatprep.mubr.f32.mxu0 0.0
      %1202 = vmatmul.mubr.f32.gmra.mrb[0].mxu0 %v984
      %v1203 = vpop.f32.mrb[0].mxu0
      %v1204 = vadd.f32 0.0, %v1203
      %v1205 = vpop.f32.mrb[0].mxu0
      %1206 = vmatprep.mubr.f32.mxu0 0.0
      %1207 = vmatmul.mubr.f32.gmra.mrb[0].mxu0 %v987
      %v1208 = vpop.f32.mrb[0].mxu0
      %v1209 = vadd.f32 0.0, %v1208
      %v1210 = vpop.f32.mrb[0].mxu0
      %1211 = vmatprep.mubr.f32.mxu0 0.0
      %1212 = vmatmul.mubr.f32.gmra.mrb[0].mxu0 %v990
      %v1213 = vpop.f32.mrb[0].mxu0
      %v1214 = vadd.f32 0.0, %v1213
      %v1215 = vpop.f32.mrb[0].mxu0
      %1216 = vdwg.mxu0
      %v1217 = vld [vmem:[#allocation2 + $0x2] sm:$0xff]
      %v1218 = vld [vmem:[#allocation2 + $0xa] sm:$0xff]
      %v1219 = vld [vmem:[#allocation2 + $0x1a] sm:$0xff]
      %v1220 = vld [vmem:[#allocation2 + $0x22] sm:$0xff]
      %v1221 = vld [vmem:[#allocation2 + $0x32] sm:$0xff]
      %v1222 = vld [vmem:[#allocation2 + $0x3a] sm:$0xff]
      %v1223 = vld [vmem:[#allocation2 + $0x4a] sm:$0xff]
      %v1224 = vld [vmem:[#allocation2 + $0x52] sm:$0xff]
      %v1225 = vld [vmem:[#allocation2 + $0x62] sm:$0xff]
      %v1226 = vld [vmem:[#allocation2 + $0x6a] sm:$0xff]
      %v1227 = vld [vmem:[#allocation2 + $0x7a] sm:$0xff]
      %v1228 = vld [vmem:[#allocation2 + $0x82] sm:$0xff]
      %v1229 = vld [vmem:[#allocation2 + $0x92] sm:$0xff]
      %v1230 = vld [vmem:[#allocation2 + $0x9a] sm:$0xff]
      %v1231 = vld [vmem:[#allocation2 + $0xaa] sm:$0xff]
      %v1232 = vld [vmem:[#allocation2 + $0xb2] sm:$0xff]
      %v1233 = vld [vmem:[#allocation2 + $0xc2] sm:$0xff]
      %v1234 = vld [vmem:[#allocation2 + $0xca] sm:$0xff]
      %v1235 = vld [vmem:[#allocation2 + $0xda] sm:$0xff]
      %v1236 = vld [vmem:[#allocation2 + $0xe2] sm:$0xff]
      %v1237 = vld [vmem:[#allocation2 + $0xf2] sm:$0xff]
      %v1238 = vld [vmem:[#allocation2 + $0xfa] sm:$0xff]
      %v1239 = vld [vmem:[#allocation2 + $0x10a] sm:$0xff]
      %v1240 = vld [vmem:[#allocation2 + $0x112] sm:$0xff]
      %v1241 = vld [vmem:[#allocation2 + $0x122] sm:$0xff]
      %v1242 = vld [vmem:[#allocation2 + $0x12a] sm:$0xff]
      %v1243 = vld [vmem:[#allocation2 + $0x13a] sm:$0xff]
      %v1244 = vld [vmem:[#allocation2 + $0x142] sm:$0xff]
      %v1245 = vld [vmem:[#allocation2 + $0x152] sm:$0xff]
      %v1246 = vld [vmem:[#allocation2 + $0x15a] sm:$0xff]
      %v1247 = vld [vmem:[#allocation2 + $0x16a] sm:$0xff]
      %v1248 = vld [vmem:[#allocation2 + $0x172] sm:$0xff]
      %v1249 = vld [vmem:[%s249 + $0x2] sm:$0xff]
      %v1250 = vld [vmem:[%s249 + $0xa] sm:$0xff]
      %v1251 = vld [vmem:[%s249 + $0x1a] sm:$0xff]
      %v1252 = vld [vmem:[%s249 + $0x22] sm:$0xff]
      %v1253 = vld [vmem:[%s249 + $0x32] sm:$0xff]
      %v1254 = vld [vmem:[%s249 + $0x3a] sm:$0xff]
      %v1255 = vld [vmem:[%s249 + $0x4a] sm:$0xff]
      %v1256 = vld [vmem:[%s249 + $0x52] sm:$0xff]
      %v1257 = vld [vmem:[%s249 + $0x62] sm:$0xff]
      %v1258 = vld [vmem:[%s249 + $0x6a] sm:$0xff]
      %v1259 = vld [vmem:[%s249 + $0x7a] sm:$0xff]
      %v1260 = vld [vmem:[%s249 + $0x82] sm:$0xff]
      %v1261 = vld [vmem:[%s249 + $0x92] sm:$0xff]
      %v1262 = vld [vmem:[%s249 + $0x9a] sm:$0xff]
      %v1263 = vld [vmem:[%s249 + $0xaa] sm:$0xff]
      %v1264 = vld [vmem:[%s249 + $0xb2] sm:$0xff]
      %v1265 = vld [vmem:[%s249 + $0xc2] sm:$0xff]
      %v1266 = vld [vmem:[%s249 + $0xca] sm:$0xff]
      %v1267 = vld [vmem:[%s249 + $0xda] sm:$0xff]
      %v1268 = vld [vmem:[%s249 + $0xe2] sm:$0xff]
      %v1269 = vld [vmem:[%s249 + $0xf2] sm:$0xff]
      %v1270 = vld [vmem:[%s249 + $0xfa] sm:$0xff]
      %v1271 = vld [vmem:[%s249 + $0x10a] sm:$0xff]
      %v1272 = vld [vmem:[%s249 + $0x112] sm:$0xff]
      %v1273 = vld [vmem:[%s249 + $0x122] sm:$0xff]
      %v1274 = vld [vmem:[%s249 + $0x12a] sm:$0xff]
      %v1275 = vld [vmem:[%s249 + $0x13a] sm:$0xff]
      %v1276 = vld [vmem:[%s249 + $0x142] sm:$0xff]
      %v1277 = vld [vmem:[%s249 + $0x152] sm:$0xff]
      %v1278 = vld [vmem:[%s249 + $0x15a] sm:$0xff]
      %v1279 = vld [vmem:[%s249 + $0x16a] sm:$0xff]
      %v1280 = vld [vmem:[%s249 + $0x172] sm:$0xff]
      %1313 = vrot.lane.b32.xlu0 %v1217, 4
      %v1314 = vpop.permute.xlu0 %1313
      %1315 = vrot.lane.b32.xlu0 %v1218, 4
      %v1316 = vpop.permute.xlu0 %1315
      %1317 = vrot.lane.b32.xlu0 %v1219, 4
      %v1318 = vpop.permute.xlu0 %1317
      %1319 = vrot.lane.b32.xlu0 %v1220, 4
      %v1320 = vpop.permute.xlu0 %1319
      %1321 = vrot.lane.b32.xlu0 %v1221, 4
      %v1322 = vpop.permute.xlu0 %1321
      %1323 = vrot.lane.b32.xlu0 %v1222, 4
      %v1324 = vpop.permute.xlu0 %1323
      %1325 = vrot.lane.b32.xlu0 %v1223, 4
      %v1326 = vpop.permute.xlu0 %1325
      %1327 = vrot.lane.b32.xlu0 %v1224, 4
      %v1328 = vpop.permute.xlu0 %1327
      %1329 = vrot.lane.b32.xlu0 %v1225, 4
      %v1330 = vpop.permute.xlu0 %1329
      %1331 = vrot.lane.b32.xlu0 %v1226, 4
      %v1332 = vpop.permute.xlu0 %1331
      %1333 = vrot.lane.b32.xlu0 %v1227, 4
      %v1334 = vpop.permute.xlu0 %1333
      %1335 = vrot.lane.b32.xlu0 %v1228, 4
      %v1336 = vpop.permute.xlu0 %1335
      %1337 = vrot.lane.b32.xlu0 %v1229, 4
      %v1338 = vpop.permute.xlu0 %1337
      %1339 = vrot.lane.b32.xlu0 %v1230, 4
      %v1340 = vpop.permute.xlu0 %1339
      %1341 = vrot.lane.b32.xlu0 %v1231, 4
      %v1342 = vpop.permute.xlu0 %1341
      %1343 = vrot.lane.b32.xlu0 %v1232, 4
      %v1344 = vpop.permute.xlu0 %1343
      %1345 = vrot.lane.b32.xlu0 %v1233, 4
      %v1346 = vpop.permute.xlu0 %1345
      %1347 = vrot.lane.b32.xlu0 %v1234, 4
      %v1348 = vpop.permute.xlu0 %1347
      %1349 = vrot.lane.b32.xlu0 %v1235, 4
      %v1350 = vpop.permute.xlu0 %1349
      %1351 = vrot.lane.b32.xlu0 %v1236, 4
      %v1352 = vpop.permute.xlu0 %1351
      %1353 = vrot.lane.b32.xlu0 %v1237, 4
      %v1354 = vpop.permute.xlu0 %1353
      %1355 = vrot.lane.b32.xlu0 %v1238, 4
      %v1356 = vpop.permute.xlu0 %1355
      %1357 = vrot.lane.b32.xlu0 %v1239, 4
      %v1358 = vpop.permute.xlu0 %1357
      %1359 = vrot.lane.b32.xlu0 %v1240, 4
      %v1360 = vpop.permute.xlu0 %1359
      %1361 = vrot.lane.b32.xlu0 %v1241, 4
      %v1362 = vpop.permute.xlu0 %1361
      %1363 = vrot.lane.b32.xlu0 %v1242, 4
      %v1364 = vpop.permute.xlu0 %1363
      %1365 = vrot.lane.b32.xlu0 %v1243, 4
      %v1366 = vpop.permute.xlu0 %1365
      %1367 = vrot.lane.b32.xlu0 %v1244, 4
      %v1368 = vpop.permute.xlu0 %1367
      %1369 = vrot.lane.b32.xlu0 %v1245, 4
      %v1370 = vpop.permute.xlu0 %1369
      %1371 = vrot.lane.b32.xlu0 %v1246, 4
      %v1372 = vpop.permute.xlu0 %1371
      %1373 = vrot.lane.b32.xlu0 %v1247, 4
      %v1374 = vpop.permute.xlu0 %1373
      %1375 = vrot.lane.b32.xlu0 %v1248, 4
      %v1376 = vpop.permute.xlu0 %1375
      %1409 = vrot.lane.b32.xlu0 %v379, 8
      %v1410 = vpop.permute.xlu0 %1409
      %1411 = vrot.lane.b32.xlu0 %v380, 8
      %v1412 = vpop.permute.xlu0 %1411
      %1413 = vrot.lane.b32.xlu0 %v381, 8
      %v1414 = vpop.permute.xlu0 %1413
      %1415 = vrot.lane.b32.xlu0 %v382, 8
      %v1416 = vpop.permute.xlu0 %1415
      %1417 = vrot.lane.b32.xlu0 %v383, 8
      %v1418 = vpop.permute.xlu0 %1417
      %1419 = vrot.lane.b32.xlu0 %v384, 8
      %v1420 = vpop.permute.xlu0 %1419
      %1421 = vrot.lane.b32.xlu0 %v385, 8
      %v1422 = vpop.permute.xlu0 %1421
      %1423 = vrot.lane.b32.xlu0 %v386, 8
      %v1424 = vpop.permute.xlu0 %1423
      %1425 = vrot.lane.b32.xlu0 %v387, 8
      %v1426 = vpop.permute.xlu0 %1425
      %1427 = vrot.lane.b32.xlu0 %v388, 8
      %v1428 = vpop.permute.xlu0 %1427
      %1429 = vrot.lane.b32.xlu0 %v389, 8
      %v1430 = vpop.permute.xlu0 %1429
      %1431 = vrot.lane.b32.xlu0 %v390, 8
      %v1432 = vpop.permute.xlu0 %1431
      %1433 = vrot.lane.b32.xlu0 %v391, 8
      %v1434 = vpop.permute.xlu0 %1433
      %1435 = vrot.lane.b32.xlu0 %v392, 8
      %v1436 = vpop.permute.xlu0 %1435
      %1437 = vrot.lane.b32.xlu0 %v393, 8
      %v1438 = vpop.permute.xlu0 %1437
      %1439 = vrot.lane.b32.xlu0 %v394, 8
      %v1440 = vpop.permute.xlu0 %1439
      %1441 = vrot.lane.b32.xlu0 %v395, 8
      %v1442 = vpop.permute.xlu0 %1441
      %1443 = vrot.lane.b32.xlu0 %v396, 8
      %v1444 = vpop.permute.xlu0 %1443
      %1445 = vrot.lane.b32.xlu0 %v397, 8
      %v1446 = vpop.permute.xlu0 %1445
      %1447 = vrot.lane.b32.xlu0 %v398, 8
      %v1448 = vpop.permute.xlu0 %1447
      %1449 = vrot.lane.b32.xlu0 %v399, 8
      %v1450 = vpop.permute.xlu0 %1449
      %1451 = vrot.lane.b32.xlu0 %v400, 8
      %v1452 = vpop.permute.xlu0 %1451
      %1453 = vrot.lane.b32.xlu0 %v401, 8
      %v1454 = vpop.permute.xlu0 %1453
      %1455 = vrot.lane.b32.xlu0 %v402, 8
      %v1456 = vpop.permute.xlu0 %1455
      %1457 = vrot.lane.b32.xlu0 %v403, 8
      %v1458 = vpop.permute.xlu0 %1457
      %1459 = vrot.lane.b32.xlu0 %v404, 8
      %v1460 = vpop.permute.xlu0 %1459
      %1461 = vrot.lane.b32.xlu0 %v405, 8
      %v1462 = vpop.permute.xlu0 %1461
      %1463 = vrot.lane.b32.xlu0 %v406, 8
      %v1464 = vpop.permute.xlu0 %1463
      %1465 = vrot.lane.b32.xlu0 %v407, 8
      %v1466 = vpop.permute.xlu0 %1465
      %1467 = vrot.lane.b32.xlu0 %v408, 8
      %v1468 = vpop.permute.xlu0 %1467
      %1469 = vrot.lane.b32.xlu0 %v409, 8
      %v1470 = vpop.permute.xlu0 %1469
      %1471 = vrot.lane.b32.xlu0 %v410, 8
      %v1472 = vpop.permute.xlu0 %1471
      %1537 = vrot.lane.b32.xlu0 %v1249, 12
      %v1538 = vpop.permute.xlu0 %1537
      %1539 = vrot.lane.b32.xlu0 %v1250, 12
      %v1540 = vpop.permute.xlu0 %1539
      %1541 = vrot.lane.b32.xlu0 %v1251, 12
      %v1542 = vpop.permute.xlu0 %1541
      %1543 = vrot.lane.b32.xlu0 %v1252, 12
      %v1544 = vpop.permute.xlu0 %1543
      %1545 = vrot.lane.b32.xlu0 %v1253, 12
      %v1546 = vpop.permute.xlu0 %1545
      %1547 = vrot.lane.b32.xlu0 %v1254, 12
      %v1548 = vpop.permute.xlu0 %1547
      %1549 = vrot.lane.b32.xlu0 %v1255, 12
      %v1550 = vpop.permute.xlu0 %1549
      %1551 = vrot.lane.b32.xlu0 %v1256, 12
      %v1552 = vpop.permute.xlu0 %1551
      %1553 = vrot.lane.b32.xlu0 %v1257, 12
      %v1554 = vpop.permute.xlu0 %1553
      %1555 = vrot.lane.b32.xlu0 %v1258, 12
      %v1556 = vpop.permute.xlu0 %1555
      %1557 = vrot.lane.b32.xlu0 %v1259, 12
      %v1558 = vpop.permute.xlu0 %1557
      %1559 = vrot.lane.b32.xlu0 %v1260, 12
      %v1560 = vpop.permute.xlu0 %1559
      %1561 = vrot.lane.b32.xlu0 %v1261, 12
      %v1562 = vpop.permute.xlu0 %1561
      %1563 = vrot.lane.b32.xlu0 %v1262, 12
      %v1564 = vpop.permute.xlu0 %1563
      %1565 = vrot.lane.b32.xlu0 %v1263, 12
      %v1566 = vpop.permute.xlu0 %1565
      %1567 = vrot.lane.b32.xlu0 %v1264, 12
      %v1568 = vpop.permute.xlu0 %1567
      %1569 = vrot.lane.b32.xlu0 %v1265, 12
      %v1570 = vpop.permute.xlu0 %1569
      %1571 = vrot.lane.b32.xlu0 %v1266, 12
      %v1572 = vpop.permute.xlu0 %1571
      %1573 = vrot.lane.b32.xlu0 %v1267, 12
      %v1574 = vpop.permute.xlu0 %1573
      %1575 = vrot.lane.b32.xlu0 %v1268, 12
      %v1576 = vpop.permute.xlu0 %1575
      %1577 = vrot.lane.b32.xlu0 %v1269, 12
      %v1578 = vpop.permute.xlu0 %1577
      %1579 = vrot.lane.b32.xlu0 %v1270, 12
      %v1580 = vpop.permute.xlu0 %1579
      %1581 = vrot.lane.b32.xlu0 %v1271, 12
      %v1582 = vpop.permute.xlu0 %1581
      %1583 = vrot.lane.b32.xlu0 %v1272, 12
      %v1584 = vpop.permute.xlu0 %1583
      %1585 = vrot.lane.b32.xlu0 %v1273, 12
      %v1586 = vpop.permute.xlu0 %1585
      %1587 = vrot.lane.b32.xlu0 %v1274, 12
      %v1588 = vpop.permute.xlu0 %1587
      %1589 = vrot.lane.b32.xlu0 %v1275, 12
      %v1590 = vpop.permute.xlu0 %1589
      %1591 = vrot.lane.b32.xlu0 %v1276, 12
      %v1592 = vpop.permute.xlu0 %1591
      %1593 = vrot.lane.b32.xlu0 %v1277, 12
      %v1594 = vpop.permute.xlu0 %1593
      %1595 = vrot.lane.b32.xlu0 %v1278, 12
      %v1596 = vpop.permute.xlu0 %1595
      %1597 = vrot.lane.b32.xlu0 %v1279, 12
      %v1598 = vpop.permute.xlu0 %1597
      %1599 = vrot.lane.b32.xlu0 %v1280, 12
      %v1600 = vpop.permute.xlu0 %1599
      %v1633 = vsel %vm171, %v315, %v1314
      %v1634 = vsel %vm171, %v316, %v1316
      %v1635 = vsel %vm171, %v317, %v1318
      %v1636 = vsel %vm171, %v318, %v1320
      %v1637 = vsel %vm171, %v319, %v1322
      %v1638 = vsel %vm171, %v320, %v1324
      %v1639 = vsel %vm171, %v321, %v1326
      %v1640 = vsel %vm171, %v322, %v1328
      %v1641 = vsel %vm171, %v323, %v1330
      %v1642 = vsel %vm171, %v324, %v1332
      %v1643 = vsel %vm171, %v325, %v1334
      %v1644 = vsel %vm171, %v326, %v1336
      %v1645 = vsel %vm171, %v327, %v1338
      %v1646 = vsel %vm171, %v328, %v1340
      %v1647 = vsel %vm171, %v329, %v1342
      %v1648 = vsel %vm171, %v330, %v1344
      %v1649 = vsel %vm171, %v331, %v1346
      %v1650 = vsel %vm171, %v332, %v1348
      %v1651 = vsel %vm171, %v333, %v1350
      %v1652 = vsel %vm171, %v334, %v1352
      %v1653 = vsel %vm171, %v335, %v1354
      %v1654 = vsel %vm171, %v336, %v1356
      %v1655 = vsel %vm171, %v337, %v1358
      %v1656 = vsel %vm171, %v338, %v1360
      %v1657 = vsel %vm171, %v339, %v1362
      %v1658 = vsel %vm171, %v340, %v1364
      %v1659 = vsel %vm171, %v341, %v1366
      %v1660 = vsel %vm171, %v342, %v1368
      %v1661 = vsel %vm171, %v343, %v1370
      %v1662 = vsel %vm171, %v344, %v1372
      %v1663 = vsel %vm171, %v345, %v1374
      %v1664 = vsel %vm171, %v346, %v1376
      %v1665 = vsel %vm827, %v1633, %v1410
      %v1666 = vsel %vm827, %v1634, %v1412
      %v1667 = vsel %vm827, %v1635, %v1414
      %v1668 = vsel %vm827, %v1636, %v1416
      %v1669 = vsel %vm827, %v1637, %v1418
      %v1670 = vsel %vm827, %v1638, %v1420
      %v1671 = vsel %vm827, %v1639, %v1422
      %v1672 = vsel %vm827, %v1640, %v1424
      %v1673 = vsel %vm827, %v1641, %v1426
      %v1674 = vsel %vm827, %v1642, %v1428
      %v1675 = vsel %vm827, %v1643, %v1430
      %v1676 = vsel %vm827, %v1644, %v1432
      %v1677 = vsel %vm827, %v1645, %v1434
      %v1678 = vsel %vm827, %v1646, %v1436
      %v1679 = vsel %vm827, %v1647, %v1438
      %v1680 = vsel %vm827, %v1648, %v1440
      %v1681 = vsel %vm827, %v1649, %v1442
      %v1682 = vsel %vm827, %v1650, %v1444
      %v1683 = vsel %vm827, %v1651, %v1446
      %v1684 = vsel %vm827, %v1652, %v1448
      %v1685 = vsel %vm827, %v1653, %v1450
      %v1686 = vsel %vm827, %v1654, %v1452
      %v1687 = vsel %vm827, %v1655, %v1454
      %v1688 = vsel %vm827, %v1656, %v1456
      %v1689 = vsel %vm827, %v1657, %v1458
      %v1690 = vsel %vm827, %v1658, %v1460
      %v1691 = vsel %vm827, %v1659, %v1462
      %v1692 = vsel %vm827, %v1660, %v1464
      %v1693 = vsel %vm827, %v1661, %v1466
      %v1694 = vsel %vm827, %v1662, %v1468
      %v1695 = vsel %vm827, %v1663, %v1470
      %v1696 = vsel %vm827, %v1664, %v1472
      %v1697 = vsel %vm860, %v1665, %v1538
      %v1698 = vsel %vm860, %v1666, %v1540
      %v1699 = vsel %vm860, %v1667, %v1542
      %v1700 = vsel %vm860, %v1668, %v1544
      %v1701 = vsel %vm860, %v1669, %v1546
      %v1702 = vsel %vm860, %v1670, %v1548
      %v1703 = vsel %vm860, %v1671, %v1550
      %v1704 = vsel %vm860, %v1672, %v1552
      %v1705 = vsel %vm860, %v1673, %v1554
      %v1706 = vsel %vm860, %v1674, %v1556
      %v1707 = vsel %vm860, %v1675, %v1558
      %v1708 = vsel %vm860, %v1676, %v1560
      %v1709 = vsel %vm860, %v1677, %v1562
      %v1710 = vsel %vm860, %v1678, %v1564
      %v1711 = vsel %vm860, %v1679, %v1566
      %v1712 = vsel %vm860, %v1680, %v1568
      %v1713 = vsel %vm860, %v1681, %v1570
      %v1714 = vsel %vm860, %v1682, %v1572
      %v1715 = vsel %vm860, %v1683, %v1574
      %v1716 = vsel %vm860, %v1684, %v1576
      %v1717 = vsel %vm860, %v1685, %v1578
      %v1718 = vsel %vm860, %v1686, %v1580
      %v1719 = vsel %vm860, %v1687, %v1582
      %v1720 = vsel %vm860, %v1688, %v1584
      %v1721 = vsel %vm860, %v1689, %v1586
      %v1722 = vsel %vm860, %v1690, %v1588
      %v1723 = vsel %vm860, %v1691, %v1590
      %v1724 = vsel %vm860, %v1692, %v1592
      %v1725 = vsel %vm860, %v1693, %v1594
      %v1726 = vsel %vm860, %v1694, %v1596
      %v1727 = vsel %vm860, %v1695, %v1598
      %v1728 = vsel %vm860, %v1696, %v1600
      %s1729 = scalar_lea.vmem %s1, 16
      %v1730 = vld [vmem:[%s1729] sm:$0xff]
      %v1731 = vld [vmem:[%s1729 + $0x8] sm:$0xff]
      %v1733 = vsel %vm895, %v1697, 0
      %v1736 = vsel %vm895, %v1698, 0
      %v1739 = vsel %vm895, %v1699, 0
      %v1742 = vsel %vm895, %v1700, 0
      %v1745 = vsel %vm895, %v1701, 0
      %v1748 = vsel %vm895, %v1702, 0
      %v1751 = vsel %vm895, %v1703, 0
      %v1754 = vsel %vm895, %v1704, 0
      %v1757 = vsel %vm895, %v1705, 0
      %v1760 = vsel %vm895, %v1706, 0
      %v1763 = vsel %vm895, %v1707, 0
      %v1766 = vsel %vm895, %v1708, 0
      %v1769 = vsel %vm895, %v1709, 0
      %v1772 = vsel %vm895, %v1710, 0
      %v1775 = vsel %vm895, %v1711, 0
      %v1778 = vsel %vm895, %v1712, 0
      %v1781 = vsel %vm895, %v1713, 0
      %v1784 = vsel %vm895, %v1714, 0
      %v1787 = vsel %vm895, %v1715, 0
      %v1790 = vsel %vm895, %v1716, 0
      %v1793 = vsel %vm895, %v1717, 0
      %v1796 = vsel %vm895, %v1718, 0
      %v1799 = vsel %vm895, %v1719, 0
      %v1802 = vsel %vm895, %v1720, 0
      %v1805 = vsel %vm895, %v1721, 0
      %v1808 = vsel %vm895, %v1722, 0
      %v1811 = vsel %vm895, %v1723, 0
      %v1814 = vsel %vm895, %v1724, 0
      %v1817 = vsel %vm895, %v1725, 0
      %v1820 = vsel %vm895, %v1726, 0
      %v1823 = vsel %vm895, %v1727, 0
      %v1826 = vsel %vm895, %v1728, 0
      %1828 = vmatprep.subr.mxu0 0.0
      %1829 = vmatpush1.msra.mxu0 %v1730
      %1830 = vmatprep.subr.mxu0 0.0
      %1831 = vmatpush1.msra.mxu0 %v1731
      %1832 = vmatprep.subr.mxu0 0.0
      %1833 = vmatpush1.msra.mxu0 0.0
      %1834 = vmatprep.subr.mxu0 0.0
      %1835 = vmatpush1.msra.mxu0 0.0
      %1836 = vmatprep.subr.mxu0 0.0
      %1837 = vmatpush1.msra.mxu0 0.0
      %1838 = vmatprep.subr.mxu0 0.0
      %1839 = vmatpush1.msra.mxu0 0.0
      %1840 = vmatprep.subr.mxu0 0.0
      %1841 = vmatpush1.msra.mxu0 0.0
      %1842 = vmatprep.subr.mxu0 0.0
      %1843 = vmatpush1.msra.mxu0 0.0
      %1844 = vmatprep.subr.mxu0 0.0
      %1845 = vmatpush1.msra.mxu0 0.0
      %1846 = vmatprep.subr.mxu0 0.0
      %1847 = vmatpush1.msra.mxu0 0.0
      %1848 = vmatprep.subr.mxu0 0.0
      %1849 = vmatpush1.msra.mxu0 0.0
      %1850 = vmatprep.subr.mxu0 0.0
      %1851 = vmatpush1.msra.mxu0 0.0
      %1852 = vmatprep.subr.mxu0 0.0
      %1853 = vmatpush1.msra.mxu0 0.0
      %1854 = vmatprep.subr.mxu0 0.0
      %1855 = vmatpush1.msra.mxu0 0.0
      %1856 = vmatprep.subr.mxu0 0.0
      %1857 = vmatpush1.msra.mxu0 0.0
      %1858 = vmatprep.subr.mxu0 0.0
      %1859 = vmatpush1.msra.mxu0 0.0
      %1860 = vmatprep.subr.mxu0 0.0
      %1861 = vmatpush1.msra.mxu0 0.0
      %1862 = vmatprep.subr.mxu0 0.0
      %1863 = vmatpush1.msra.mxu0 0.0
      %1864 = vmatprep.subr.mxu0 0.0
      %1865 = vmatpush1.msra.mxu0 0.0
      %1866 = vmatprep.subr.mxu0 0.0
      %1867 = vmatpush1.msra.mxu0 0.0
      %1868 = vmatprep.subr.mxu0 0.0
      %1869 = vmatpush1.msra.mxu0 0.0
      %1870 = vmatprep.subr.mxu0 0.0
      %1871 = vmatpush1.msra.mxu0 0.0
      %1872 = vmatprep.subr.mxu0 0.0
      %1873 = vmatpush1.msra.mxu0 0.0
      %1874 = vmatprep.subr.mxu0 0.0
      %1875 = vmatpush1.msra.mxu0 0.0
      %1876 = vmatprep.subr.mxu0 0.0
      %1877 = vmatpush1.msra.mxu0 0.0
      %1878 = vmatprep.subr.mxu0 0.0
      %1879 = vmatpush1.msra.mxu0 0.0
      %1880 = vmatprep.subr.mxu0 0.0
      %1881 = vmatpush1.msra.mxu0 0.0
      %1882 = vmatprep.subr.mxu0 0.0
      %1883 = vmatpush1.msra.mxu0 0.0
      %1884 = vmatprep.subr.mxu0 0.0
      %1885 = vmatpush1.msra.mxu0 0.0
      %1886 = vmatprep.subr.mxu0 0.0
      %1887 = vmatpush1.msra.mxu0 0.0
      %1888 = vmatprep.subr.mxu0 0.0
      %1889 = vmatpush1.msra.mxu0 0.0
      %1890 = vmatprep.subr.mxu0 0.0
      %1891 = vmatpush1.msra.mxu0 0.0
      %1892 = vmatprep.mubr.f32.mxu0 0.0
      %1893 = vmatmul.mubr.f32.gmra.mrb[0].mxu0 %v1733
      %v1894 = vpop.f32.mrb[0].mxu0
      %v1895 = vadd.f32 0.0, %v1894
      %v1896 = vpop.f32.mrb[0].mxu0
      %1897 = vmatprep.mubr.f32.mxu0 0.0
      %1898 = vmatmul.mubr.f32.gmra.mrb[0].mxu0 %v1736
      %v1899 = vpop.f32.mrb[0].mxu0
      %v1900 = vadd.f32 0.0, %v1899
      %v1901 = vpop.f32.mrb[0].mxu0
      %1902 = vmatprep.mubr.f32.mxu0 0.0
      %1903 = vmatmul.mubr.f32.gmra.mrb[0].mxu0 %v1739
      %v1904 = vpop.f32.mrb[0].mxu0
      %v1905 = vadd.f32 0.0, %v1904
      %v1906 = vpop.f32.mrb[0].mxu0
      %1907 = vmatprep.mubr.f32.mxu0 0.0
      %1908 = vmatmul.mubr.f32.gmra.mrb[0].mxu0 %v1742
      %v1909 = vpop.f32.mrb[0].mxu0
      %v1910 = vadd.f32 0.0, %v1909
      %v1911 = vpop.f32.mrb[0].mxu0
      %1912 = vmatprep.mubr.f32.mxu0 0.0
      %1913 = vmatmul.mubr.f32.gmra.mrb[0].mxu0 %v1745
      %v1914 = vpop.f32.mrb[0].mxu0
      %v1915 = vadd.f32 0.0, %v1914
      %v1916 = vpop.f32.mrb[0].mxu0
      %1917 = vmatprep.mubr.f32.mxu0 0.0
      %1918 = vmatmul.mubr.f32.gmra.mrb[0].mxu0 %v1748
      %v1919 = vpop.f32.mrb[0].mxu0
      %v1920 = vadd.f32 0.0, %v1919
      %v1921 = vpop.f32.mrb[0].mxu0
      %1922 = vmatprep.mubr.f32.mxu0 0.0
      %1923 = vmatmul.mubr.f32.gmra.mrb[0].mxu0 %v1751
      %v1924 = vpop.f32.mrb[0].mxu0
      %v1925 = vadd.f32 0.0, %v1924
      %v1926 = vpop.f32.mrb[0].mxu0
      %1927 = vmatprep.mubr.f32.mxu0 0.0
      %1928 = vmatmul.mubr.f32.gmra.mrb[0].mxu0 %v1754
      %v1929 = vpop.f32.mrb[0].mxu0
      %v1930 = vadd.f32 0.0, %v1929
      %v1931 = vpop.f32.mrb[0].mxu0
      %1932 = vmatprep.mubr.f32.mxu0 0.0
      %1933 = vmatmul.mubr.f32.gmra.mrb[0].mxu0 %v1757
      %v1934 = vpop.f32.mrb[0].mxu0
      %v1935 = vadd.f32 0.0, %v1934
      %v1936 = vpop.f32.mrb[0].mxu0
      %1937 = vmatprep.mubr.f32.mxu0 0.0
      %1938 = vmatmul.mubr.f32.gmra.mrb[0].mxu0 %v1760
      %v1939 = vpop.f32.mrb[0].mxu0
      %v1940 = vadd.f32 0.0, %v1939
      %v1941 = vpop.f32.mrb[0].mxu0
      %1942 = vmatprep.mubr.f32.mxu0 0.0
      %1943 = vmatmul.mubr.f32.gmra.mrb[0].mxu0 %v1763
      %v1944 = vpop.f32.mrb[0].mxu0
      %v1945 = vadd.f32 0.0, %v1944
      %v1946 = vpop.f32.mrb[0].mxu0
      %1947 = vmatprep.mubr.f32.mxu0 0.0
      %1948 = vmatmul.mubr.f32.gmra.mrb[0].mxu0 %v1766
      %v1949 = vpop.f32.mrb[0].mxu0
      %v1950 = vadd.f32 0.0, %v1949
      %v1951 = vpop.f32.mrb[0].mxu0
      %1952 = vmatprep.mubr.f32.mxu0 0.0
      %1953 = vmatmul.mubr.f32.gmra.mrb[0].mxu0 %v1769
      %v1954 = vpop.f32.mrb[0].mxu0
      %v1955 = vadd.f32 0.0, %v1954
      %v1956 = vpop.f32.mrb[0].mxu0
      %1957 = vmatprep.mubr.f32.mxu0 0.0
      %1958 = vmatmul.mubr.f32.gmra.mrb[0].mxu0 %v1772
      %v1959 = vpop.f32.mrb[0].mxu0
      %v1960 = vadd.f32 0.0, %v1959
      %v1961 = vpop.f32.mrb[0].mxu0
      %1962 = vmatprep.mubr.f32.mxu0 0.0
      %1963 = vmatmul.mubr.f32.gmra.mrb[0].mxu0 %v1775
      %v1964 = vpop.f32.mrb[0].mxu0
      %v1965 = vadd.f32 0.0, %v1964
      %v1966 = vpop.f32.mrb[0].mxu0
      %1967 = vmatprep.mubr.f32.mxu0 0.0
      %1968 = vmatmul.mubr.f32.gmra.mrb[0].mxu0 %v1778
      %v1969 = vpop.f32.mrb[0].mxu0
      %v1970 = vadd.f32 0.0, %v1969
      %v1971 = vpop.f32.mrb[0].mxu0
      %1972 = vmatprep.mubr.f32.mxu0 0.0
      %1973 = vmatmul.mubr.f32.gmra.mrb[0].mxu0 %v1781
      %v1974 = vpop.f32.mrb[0].mxu0
      %v1975 = vadd.f32 0.0, %v1974
      %v1976 = vpop.f32.mrb[0].mxu0
      %1977 = vmatprep.mubr.f32.mxu0 0.0
      %1978 = vmatmul.mubr.f32.gmra.mrb[0].mxu0 %v1784
      %v1979 = vpop.f32.mrb[0].mxu0
      %v1980 = vadd.f32 0.0, %v1979
      %v1981 = vpop.f32.mrb[0].mxu0
      %1982 = vmatprep.mubr.f32.mxu0 0.0
      %1983 = vmatmul.mubr.f32.gmra.mrb[0].mxu0 %v1787
      %v1984 = vpop.f32.mrb[0].mxu0
      %v1985 = vadd.f32 0.0, %v1984
      %v1986 = vpop.f32.mrb[0].mxu0
      %1987 = vmatprep.mubr.f32.mxu0 0.0
      %1988 = vmatmul.mubr.f32.gmra.mrb[0].mxu0 %v1790
      %v1989 = vpop.f32.mrb[0].mxu0
      %v1990 = vadd.f32 0.0, %v1989
      %v1991 = vpop.f32.mrb[0].mxu0
      %1992 = vmatprep.mubr.f32.mxu0 0.0
      %1993 = vmatmul.mubr.f32.gmra.mrb[0].mxu0 %v1793
      %v1994 = vpop.f32.mrb[0].mxu0
      %v1995 = vadd.f32 0.0, %v1994
      %v1996 = vpop.f32.mrb[0].mxu0
      %1997 = vmatprep.mubr.f32.mxu0 0.0
      %1998 = vmatmul.mubr.f32.gmra.mrb[0].mxu0 %v1796
      %v1999 = vpop.f32.mrb[0].mxu0
      %v2000 = vadd.f32 0.0, %v1999
      %v2001 = vpop.f32.mrb[0].mxu0
      %2002 = vmatprep.mubr.f32.mxu0 0.0
      %2003 = vmatmul.mubr.f32.gmra.mrb[0].mxu0 %v1799
      %v2004 = vpop.f32.mrb[0].mxu0
      %v2005 = vadd.f32 0.0, %v2004
      %v2006 = vpop.f32.mrb[0].mxu0
      %2007 = vmatprep.mubr.f32.mxu0 0.0
      %2008 = vmatmul.mubr.f32.gmra.mrb[0].mxu0 %v1802
      %v2009 = vpop.f32.mrb[0].mxu0
      %v2010 = vadd.f32 0.0, %v2009
      %v2011 = vpop.f32.mrb[0].mxu0
      %2012 = vmatprep.mubr.f32.mxu0 0.0
      %2013 = vmatmul.mubr.f32.gmra.mrb[0].mxu0 %v1805
      %v2014 = vpop.f32.mrb[0].mxu0
      %v2015 = vadd.f32 0.0, %v2014
      %v2016 = vpop.f32.mrb[0].mxu0
      %2017 = vmatprep.mubr.f32.mxu0 0.0
      %2018 = vmatmul.mubr.f32.gmra.mrb[0].mxu0 %v1808
      %v2019 = vpop.f32.mrb[0].mxu0
      %v2020 = vadd.f32 0.0, %v2019
      %v2021 = vpop.f32.mrb[0].mxu0
      %2022 = vmatprep.mubr.f32.mxu0 0.0
      %2023 = vmatmul.mubr.f32.gmra.mrb[0].mxu0 %v1811
      %v2024 = vpop.f32.mrb[0].mxu0
      %v2025 = vadd.f32 0.0, %v2024
      %v2026 = vpop.f32.mrb[0].mxu0
      %2027 = vmatprep.mubr.f32.mxu0 0.0
      %2028 = vmatmul.mubr.f32.gmra.mrb[0].mxu0 %v1814
      %v2029 = vpop.f32.mrb[0].mxu0
      %v2030 = vadd.f32 0.0, %v2029
      %v2031 = vpop.f32.mrb[0].mxu0
      %2032 = vmatprep.mubr.f32.mxu0 0.0
      %2033 = vmatmul.mubr.f32.gmra.mrb[0].mxu0 %v1817
      %v2034 = vpop.f32.mrb[0].mxu0
      %v2035 = vadd.f32 0.0, %v2034
      %v2036 = vpop.f32.mrb[0].mxu0
      %2037 = vmatprep.mubr.f32.mxu0 0.0
      %2038 = vmatmul.mubr.f32.gmra.mrb[0].mxu0 %v1820
      %v2039 = vpop.f32.mrb[0].mxu0
      %v2040 = vadd.f32 0.0, %v2039
      %v2041 = vpop.f32.mrb[0].mxu0
      %2042 = vmatprep.mubr.f32.mxu0 0.0
      %2043 = vmatmul.mubr.f32.gmra.mrb[0].mxu0 %v1823
      %v2044 = vpop.f32.mrb[0].mxu0
      %v2045 = vadd.f32 0.0, %v2044
      %v2046 = vpop.f32.mrb[0].mxu0
      %2047 = vmatprep.mubr.f32.mxu0 0.0
      %2048 = vmatmul.mubr.f32.gmra.mrb[0].mxu0 %v1826
      %v2049 = vpop.f32.mrb[0].mxu0
      %v2050 = vadd.f32 0.0, %v2049
      %v2051 = vpop.f32.mrb[0].mxu0
      %2052 = vdwg.mxu0
      %2085 = vrot.lane.b32.xlu0 %v1895, 8
      %v2086 = vpop.permute.xlu0 %2085
      %2087 = vrot.lane.b32.xlu0 %v1900, 8
      %v2088 = vpop.permute.xlu0 %2087
      %2089 = vrot.lane.b32.xlu0 %v1905, 8
      %v2090 = vpop.permute.xlu0 %2089
      %2091 = vrot.lane.b32.xlu0 %v1910, 8
      %v2092 = vpop.permute.xlu0 %2091
      %2093 = vrot.lane.b32.xlu0 %v1915, 8
      %v2094 = vpop.permute.xlu0 %2093
      %2095 = vrot.lane.b32.xlu0 %v1920, 8
      %v2096 = vpop.permute.xlu0 %2095
      %2097 = vrot.lane.b32.xlu0 %v1925, 8
      %v2098 = vpop.permute.xlu0 %2097
      %2099 = vrot.lane.b32.xlu0 %v1930, 8
      %v2100 = vpop.permute.xlu0 %2099
      %2101 = vrot.lane.b32.xlu0 %v1935, 8
      %v2102 = vpop.permute.xlu0 %2101
      %2103 = vrot.lane.b32.xlu0 %v1940, 8
      %v2104 = vpop.permute.xlu0 %2103
      %2105 = vrot.lane.b32.xlu0 %v1945, 8
      %v2106 = vpop.permute.xlu0 %2105
      %2107 = vrot.lane.b32.xlu0 %v1950, 8
      %v2108 = vpop.permute.xlu0 %2107
      %2109 = vrot.lane.b32.xlu0 %v1955, 8
      %v2110 = vpop.permute.xlu0 %2109
      %2111 = vrot.lane.b32.xlu0 %v1960, 8
      %v2112 = vpop.permute.xlu0 %2111
      %2113 = vrot.lane.b32.xlu0 %v1965, 8
      %v2114 = vpop.permute.xlu0 %2113
      %2115 = vrot.lane.b32.xlu0 %v1970, 8
      %v2116 = vpop.permute.xlu0 %2115
      %2117 = vrot.lane.b32.xlu0 %v1975, 8
      %v2118 = vpop.permute.xlu0 %2117
      %2119 = vrot.lane.b32.xlu0 %v1980, 8
      %v2120 = vpop.permute.xlu0 %2119
      %2121 = vrot.lane.b32.xlu0 %v1985, 8
      %v2122 = vpop.permute.xlu0 %2121
      %2123 = vrot.lane.b32.xlu0 %v1990, 8
      %v2124 = vpop.permute.xlu0 %2123
      %2125 = vrot.lane.b32.xlu0 %v1995, 8
      %v2126 = vpop.permute.xlu0 %2125
      %2127 = vrot.lane.b32.xlu0 %v2000, 8
      %v2128 = vpop.permute.xlu0 %2127
      %2129 = vrot.lane.b32.xlu0 %v2005, 8
      %v2130 = vpop.permute.xlu0 %2129
      %2131 = vrot.lane.b32.xlu0 %v2010, 8
      %v2132 = vpop.permute.xlu0 %2131
      %2133 = vrot.lane.b32.xlu0 %v2015, 8
      %v2134 = vpop.permute.xlu0 %2133
      %2135 = vrot.lane.b32.xlu0 %v2020, 8
      %v2136 = vpop.permute.xlu0 %2135
      %2137 = vrot.lane.b32.xlu0 %v2025, 8
      %v2138 = vpop.permute.xlu0 %2137
      %2139 = vrot.lane.b32.xlu0 %v2030, 8
      %v2140 = vpop.permute.xlu0 %2139
      %2141 = vrot.lane.b32.xlu0 %v2035, 8
      %v2142 = vpop.permute.xlu0 %2141
      %2143 = vrot.lane.b32.xlu0 %v2040, 8
      %v2144 = vpop.permute.xlu0 %2143
      %2145 = vrot.lane.b32.xlu0 %v2045, 8
      %v2146 = vpop.permute.xlu0 %2145
      %2147 = vrot.lane.b32.xlu0 %v2050, 8
      %v2148 = vpop.permute.xlu0 %2147
      %v2181 = vsel %vm827, %v1059, %v2086
      %v2182 = vsel %vm827, %v1064, %v2088
      %v2183 = vsel %vm827, %v1069, %v2090
      %v2184 = vsel %vm827, %v1074, %v2092
      %v2185 = vsel %vm827, %v1079, %v2094
      %v2186 = vsel %vm827, %v1084, %v2096
      %v2187 = vsel %vm827, %v1089, %v2098
      %v2188 = vsel %vm827, %v1094, %v2100
      %v2189 = vsel %vm827, %v1099, %v2102
      %v2190 = vsel %vm827, %v1104, %v2104
      %v2191 = vsel %vm827, %v1109, %v2106
      %v2192 = vsel %vm827, %v1114, %v2108
      %v2193 = vsel %vm827, %v1119, %v2110
      %v2194 = vsel %vm827, %v1124, %v2112
      %v2195 = vsel %vm827, %v1129, %v2114
      %v2196 = vsel %vm827, %v1134, %v2116
      %v2197 = vsel %vm827, %v1139, %v2118
      %v2198 = vsel %vm827, %v1144, %v2120
      %v2199 = vsel %vm827, %v1149, %v2122
      %v2200 = vsel %vm827, %v1154, %v2124
      %v2201 = vsel %vm827, %v1159, %v2126
      %v2202 = vsel %vm827, %v1164, %v2128
      %v2203 = vsel %vm827, %v1169, %v2130
      %v2204 = vsel %vm827, %v1174, %v2132
      %v2205 = vsel %vm827, %v1179, %v2134
      %v2206 = vsel %vm827, %v1184, %v2136
      %v2207 = vsel %vm827, %v1189, %v2138
      %v2208 = vsel %vm827, %v1194, %v2140
      %v2209 = vsel %vm827, %v1199, %v2142
      %v2210 = vsel %vm827, %v1204, %v2144
      %v2211 = vsel %vm827, %v1209, %v2146
      %v2212 = vsel %vm827, %v1214, %v2148
      %v2214 = vlaneseq
      %v2215 = vshrl.u32 %v2214, 7
      %v2216 = vsub.s32 0, %v2215
      %v2217 = vrot.slane %v282, %v2216
      %v2219 = vadd.f32 %v2181, %v2217
      %v2220 = vadd.f32 %v2182, %v2217
      %v2221 = vadd.f32 %v2183, %v2217
      %v2222 = vadd.f32 %v2184, %v2217
      %v2223 = vadd.f32 %v2185, %v2217
      %v2224 = vadd.f32 %v2186, %v2217
      %v2225 = vadd.f32 %v2187, %v2217
      %v2226 = vadd.f32 %v2188, %v2217
      %v2227 = vadd.f32 %v2189, %v2217
      %v2228 = vadd.f32 %v2190, %v2217
      %v2229 = vadd.f32 %v2191, %v2217
      %v2230 = vadd.f32 %v2192, %v2217
      %v2231 = vadd.f32 %v2193, %v2217
      %v2232 = vadd.f32 %v2194, %v2217
      %v2233 = vadd.f32 %v2195, %v2217
      %v2234 = vadd.f32 %v2196, %v2217
      %v2235 = vadd.f32 %v2197, %v2217
      %v2236 = vadd.f32 %v2198, %v2217
      %v2237 = vadd.f32 %v2199, %v2217
      %v2238 = vadd.f32 %v2200, %v2217
      %v2239 = vadd.f32 %v2201, %v2217
      %v2240 = vadd.f32 %v2202, %v2217
      %v2241 = vadd.f32 %v2203, %v2217
      %v2242 = vadd.f32 %v2204, %v2217
      %v2243 = vadd.f32 %v2205, %v2217
      %v2244 = vadd.f32 %v2206, %v2217
      %v2245 = vadd.f32 %v2207, %v2217
      %v2246 = vadd.f32 %v2208, %v2217
      %v2247 = vadd.f32 %v2209, %v2217
      %v2248 = vadd.f32 %v2210, %v2217
      %v2249 = vadd.f32 %v2211, %v2217
      %v2250 = vadd.f32 %v2212, %v2217
      %2251 = vst.msk [vmem:[%s170] sm:$0xff] %vm895, %v2219
      %2252 = vst.msk [vmem:[%s170 + $0x8] sm:$0xff] %vm895, %v2220
      %2253 = vst.msk [vmem:[%s170 + $0x20] sm:$0xff] %vm895, %v2221
      %2254 = vst.msk [vmem:[%s170 + $0x28] sm:$0xff] %vm895, %v2222
      %2255 = vst.msk [vmem:[%s170 + $0x40] sm:$0xff] %vm895, %v2223
      %2256 = vst.msk [vmem:[%s170 + $0x48] sm:$0xff] %vm895, %v2224
      %2257 = vst.msk [vmem:[%s170 + $0x60] sm:$0xff] %vm895, %v2225
      %2258 = vst.msk [vmem:[%s170 + $0x68] sm:$0xff] %vm895, %v2226
      %2259 = vst.msk [vmem:[%s170 + $0x80] sm:$0xff] %vm895, %v2227
      %2260 = vst.msk [vmem:[%s170 + $0x88] sm:$0xff] %vm895, %v2228
      %2261 = vst.msk [vmem:[%s170 + $0xa0] sm:$0xff] %vm895, %v2229
      %2262 = vst.msk [vmem:[%s170 + $0xa8] sm:$0xff] %vm895, %v2230
      %2263 = vst.msk [vmem:[%s170 + $0xc0] sm:$0xff] %vm895, %v2231
      %2264 = vst.msk [vmem:[%s170 + $0xc8] sm:$0xff] %vm895, %v2232
      %2265 = vst.msk [vmem:[%s170 + $0xe0] sm:$0xff] %vm895, %v2233
      %2266 = vst.msk [vmem:[%s170 + $0xe8] sm:$0xff] %vm895, %v2234
      %2267 = vst.msk [vmem:[%s170 + $0x100] sm:$0xff] %vm895, %v2235
      %2268 = vst.msk [vmem:[%s170 + $0x108] sm:$0xff] %vm895, %v2236
      %2269 = vst.msk [vmem:[%s170 + $0x120] sm:$0xff] %vm895, %v2237
      %2270 = vst.msk [vmem:[%s170 + $0x128] sm:$0xff] %vm895, %v2238
      %2271 = vst.msk [vmem:[%s170 + $0x140] sm:$0xff] %vm895, %v2239
      %2272 = vst.msk [vmem:[%s170 + $0x148] sm:$0xff] %vm895, %v2240
      %2273 = vst.msk [vmem:[%s170 + $0x160] sm:$0xff] %vm895, %v2241
      %2274 = vst.msk [vmem:[%s170 + $0x168] sm:$0xff] %vm895, %v2242
      %2275 = vst.msk [vmem:[%s170 + $0x180] sm:$0xff] %vm895, %v2243
      %2276 = vst.msk [vmem:[%s170 + $0x188] sm:$0xff] %vm895, %v2244
      %2277 = vst.msk [vmem:[%s170 + $0x1a0] sm:$0xff] %vm895, %v2245
      %2278 = vst.msk [vmem:[%s170 + $0x1a8] sm:$0xff] %vm895, %v2246
      %2279 = vst.msk [vmem:[%s170 + $0x1c0] sm:$0xff] %vm895, %v2247
      %2280 = vst.msk [vmem:[%s170 + $0x1c8] sm:$0xff] %vm895, %v2248
      %2281 = vst.msk [vmem:[%s170 + $0x1e0] sm:$0xff] %vm895, %v2249
      %2282 = vst.msk [vmem:[%s170 + $0x1e8] sm:$0xff] %vm895, %v2250
      %v2283 = vld [vmem:[%s249] sm:$0xff]
      %v2284 = vld [vmem:[%s249 + $0x8] sm:$0xff]
      %v2285 = vld [vmem:[%s249 + $0x18] sm:$0xff]
      %v2286 = vld [vmem:[%s249 + $0x20] sm:$0xff]
      %v2287 = vld [vmem:[%s249 + $0x30] sm:$0xff]
      %v2288 = vld [vmem:[%s249 + $0x38] sm:$0xff]
      %v2289 = vld [vmem:[%s249 + $0x48] sm:$0xff]
      %v2290 = vld [vmem:[%s249 + $0x50] sm:$0xff]
      %v2291 = vld [vmem:[%s249 + $0x60] sm:$0xff]
      %v2292 = vld [vmem:[%s249 + $0x68] sm:$0xff]
      %v2293 = vld [vmem:[%s249 + $0x78] sm:$0xff]
      %v2294 = vld [vmem:[%s249 + $0x80] sm:$0xff]
      %v2295 = vld [vmem:[%s249 + $0x90] sm:$0xff]
      %v2296 = vld [vmem:[%s249 + $0x98] sm:$0xff]
      %v2297 = vld [vmem:[%s249 + $0xa8] sm:$0xff]
      %v2298 = vld [vmem:[%s249 + $0xb0] sm:$0xff]
      %v2299 = vld [vmem:[%s249 + $0xc0] sm:$0xff]
      %v2300 = vld [vmem:[%s249 + $0xc8] sm:$0xff]
      %v2301 = vld [vmem:[%s249 + $0xd8] sm:$0xff]
      %v2302 = vld [vmem:[%s249 + $0xe0] sm:$0xff]
      %v2303 = vld [vmem:[%s249 + $0xf0] sm:$0xff]
      %v2304 = vld [vmem:[%s249 + $0xf8] sm:$0xff]
      %v2305 = vld [vmem:[%s249 + $0x108] sm:$0xff]
      %v2306 = vld [vmem:[%s249 + $0x110] sm:$0xff]
      %v2307 = vld [vmem:[%s249 + $0x120] sm:$0xff]
      %v2308 = vld [vmem:[%s249 + $0x128] sm:$0xff]
      %v2309 = vld [vmem:[%s249 + $0x138] sm:$0xff]
      %v2310 = vld [vmem:[%s249 + $0x140] sm:$0xff]
      %v2311 = vld [vmem:[%s249 + $0x150] sm:$0xff]
      %v2312 = vld [vmem:[%s249 + $0x158] sm:$0xff]
      %v2313 = vld [vmem:[%s249 + $0x168] sm:$0xff]
      %v2314 = vld [vmem:[%s249 + $0x170] sm:$0xff]
      %v2315 = vld [vmem:[%s249 + $0x1] sm:$0xff]
      %v2316 = vld [vmem:[%s249 + $0x9] sm:$0xff]
      %v2317 = vld [vmem:[%s249 + $0x19] sm:$0xff]
      %v2318 = vld [vmem:[%s249 + $0x21] sm:$0xff]
      %v2319 = vld [vmem:[%s249 + $0x31] sm:$0xff]
      %v2320 = vld [vmem:[%s249 + $0x39] sm:$0xff]
      %v2321 = vld [vmem:[%s249 + $0x49] sm:$0xff]
      %v2322 = vld [vmem:[%s249 + $0x51] sm:$0xff]
      %v2323 = vld [vmem:[%s249 + $0x61] sm:$0xff]
      %v2324 = vld [vmem:[%s249 + $0x69] sm:$0xff]
      %v2325 = vld [vmem:[%s249 + $0x79] sm:$0xff]
      %v2326 = vld [vmem:[%s249 + $0x81] sm:$0xff]
      %v2327 = vld [vmem:[%s249 + $0x91] sm:$0xff]
      %v2328 = vld [vmem:[%s249 + $0x99] sm:$0xff]
      %v2329 = vld [vmem:[%s249 + $0xa9] sm:$0xff]
      %v2330 = vld [vmem:[%s249 + $0xb1] sm:$0xff]
      %v2331 = vld [vmem:[%s249 + $0xc1] sm:$0xff]
      %v2332 = vld [vmem:[%s249 + $0xc9] sm:$0xff]
      %v2333 = vld [vmem:[%s249 + $0xd9] sm:$0xff]
      %v2334 = vld [vmem:[%s249 + $0xe1] sm:$0xff]
      %v2335 = vld [vmem:[%s249 + $0xf1] sm:$0xff]
      %v2336 = vld [vmem:[%s249 + $0xf9] sm:$0xff]
      %v2337 = vld [vmem:[%s249 + $0x109] sm:$0xff]
      %v2338 = vld [vmem:[%s249 + $0x111] sm:$0xff]
      %v2339 = vld [vmem:[%s249 + $0x121] sm:$0xff]
      %v2340 = vld [vmem:[%s249 + $0x129] sm:$0xff]
      %v2341 = vld [vmem:[%s249 + $0x139] sm:$0xff]
      %v2342 = vld [vmem:[%s249 + $0x141] sm:$0xff]
      %v2343 = vld [vmem:[%s249 + $0x151] sm:$0xff]
      %v2344 = vld [vmem:[%s249 + $0x159] sm:$0xff]
      %v2345 = vld [vmem:[%s249 + $0x169] sm:$0xff]
      %v2346 = vld [vmem:[%s249 + $0x171] sm:$0xff]
      %s2347 = scalar_lea.vmem [#allocation2], 48
      %v2348 = vld [vmem:[%s2347] sm:$0xff]
      %v2349 = vld [vmem:[%s2347 + $0x8] sm:$0xff]
      %v2350 = vld [vmem:[%s2347 + $0x18] sm:$0xff]
      %v2351 = vld [vmem:[%s2347 + $0x20] sm:$0xff]
      %v2352 = vld [vmem:[%s2347 + $0x30] sm:$0xff]
      %v2353 = vld [vmem:[%s2347 + $0x38] sm:$0xff]
      %v2354 = vld [vmem:[%s2347 + $0x48] sm:$0xff]
      %v2355 = vld [vmem:[%s2347 + $0x50] sm:$0xff]
      %v2356 = vld [vmem:[%s2347 + $0x60] sm:$0xff]
      %v2357 = vld [vmem:[%s2347 + $0x68] sm:$0xff]
      %v2358 = vld [vmem:[%s2347 + $0x78] sm:$0xff]
      %v2359 = vld [vmem:[%s2347 + $0x80] sm:$0xff]
      %v2360 = vld [vmem:[%s2347 + $0x90] sm:$0xff]
      %v2361 = vld [vmem:[%s2347 + $0x98] sm:$0xff]
      %v2362 = vld [vmem:[%s2347 + $0xa8] sm:$0xff]
      %v2363 = vld [vmem:[%s2347 + $0xb0] sm:$0xff]
      %v2364 = vld [vmem:[%s2347 + $0xc0] sm:$0xff]
      %v2365 = vld [vmem:[%s2347 + $0xc8] sm:$0xff]
      %v2366 = vld [vmem:[%s2347 + $0xd8] sm:$0xff]
      %v2367 = vld [vmem:[%s2347 + $0xe0] sm:$0xff]
      %v2368 = vld [vmem:[%s2347 + $0xf0] sm:$0xff]
      %v2369 = vld [vmem:[%s2347 + $0xf8] sm:$0xff]
      %v2370 = vld [vmem:[%s2347 + $0x108] sm:$0xff]
      %v2371 = vld [vmem:[%s2347 + $0x110] sm:$0xff]
      %v2372 = vld [vmem:[%s2347 + $0x120] sm:$0xff]
      %v2373 = vld [vmem:[%s2347 + $0x128] sm:$0xff]
      %v2374 = vld [vmem:[%s2347 + $0x138] sm:$0xff]
      %v2375 = vld [vmem:[%s2347 + $0x140] sm:$0xff]
      %v2376 = vld [vmem:[%s2347 + $0x150] sm:$0xff]
      %v2377 = vld [vmem:[%s2347 + $0x158] sm:$0xff]
      %v2378 = vld [vmem:[%s2347 + $0x168] sm:$0xff]
      %v2379 = vld [vmem:[%s2347 + $0x170] sm:$0xff]
      %v2380 = vld [vmem:[%s2347 + $0x1] sm:$0xff]
      %v2381 = vld [vmem:[%s2347 + $0x9] sm:$0xff]
      %v2382 = vld [vmem:[%s2347 + $0x19] sm:$0xff]
      %v2383 = vld [vmem:[%s2347 + $0x21] sm:$0xff]
      %v2384 = vld [vmem:[%s2347 + $0x31] sm:$0xff]
      %v2385 = vld [vmem:[%s2347 + $0x39] sm:$0xff]
      %v2386 = vld [vmem:[%s2347 + $0x49] sm:$0xff]
      %v2387 = vld [vmem:[%s2347 + $0x51] sm:$0xff]
      %v2388 = vld [vmem:[%s2347 + $0x61] sm:$0xff]
      %v2389 = vld [vmem:[%s2347 + $0x69] sm:$0xff]
      %v2390 = vld [vmem:[%s2347 + $0x79] sm:$0xff]
      %v2391 = vld [vmem:[%s2347 + $0x81] sm:$0xff]
      %v2392 = vld [vmem:[%s2347 + $0x91] sm:$0xff]
      %v2393 = vld [vmem:[%s2347 + $0x99] sm:$0xff]
      %v2394 = vld [vmem:[%s2347 + $0xa9] sm:$0xff]
      %v2395 = vld [vmem:[%s2347 + $0xb1] sm:$0xff]
      %v2396 = vld [vmem:[%s2347 + $0xc1] sm:$0xff]
      %v2397 = vld [vmem:[%s2347 + $0xc9] sm:$0xff]
      %v2398 = vld [vmem:[%s2347 + $0xd9] sm:$0xff]
      %v2399 = vld [vmem:[%s2347 + $0xe1] sm:$0xff]
      %v2400 = vld [vmem:[%s2347 + $0xf1] sm:$0xff]
      %v2401 = vld [vmem:[%s2347 + $0xf9] sm:$0xff]
      %v2402 = vld [vmem:[%s2347 + $0x109] sm:$0xff]
      %v2403 = vld [vmem:[%s2347 + $0x111] sm:$0xff]
      %v2404 = vld [vmem:[%s2347 + $0x121] sm:$0xff]
      %v2405 = vld [vmem:[%s2347 + $0x129] sm:$0xff]
      %v2406 = vld [vmem:[%s2347 + $0x139] sm:$0xff]
      %v2407 = vld [vmem:[%s2347 + $0x141] sm:$0xff]
      %v2408 = vld [vmem:[%s2347 + $0x151] sm:$0xff]
      %v2409 = vld [vmem:[%s2347 + $0x159] sm:$0xff]
      %v2410 = vld [vmem:[%s2347 + $0x169] sm:$0xff]
      %v2411 = vld [vmem:[%s2347 + $0x171] sm:$0xff]
      %2444 = vrot.lane.b32.xlu0 %v2315, 4
      %v2445 = vpop.permute.xlu0 %2444
      %2446 = vrot.lane.b32.xlu0 %v2316, 4
      %v2447 = vpop.permute.xlu0 %2446
      %2448 = vrot.lane.b32.xlu0 %v2317, 4
      %v2449 = vpop.permute.xlu0 %2448
      %2450 = vrot.lane.b32.xlu0 %v2318, 4
      %v2451 = vpop.permute.xlu0 %2450
      %2452 = vrot.lane.b32.xlu0 %v2319, 4
      %v2453 = vpop.permute.xlu0 %2452
      %2454 = vrot.lane.b32.xlu0 %v2320, 4
      %v2455 = vpop.permute.xlu0 %2454
      %2456 = vrot.lane.b32.xlu0 %v2321, 4
      %v2457 = vpop.permute.xlu0 %2456
      %2458 = vrot.lane.b32.xlu0 %v2322, 4
      %v2459 = vpop.permute.xlu0 %2458
      %2460 = vrot.lane.b32.xlu0 %v2323, 4
      %v2461 = vpop.permute.xlu0 %2460
      %2462 = vrot.lane.b32.xlu0 %v2324, 4
      %v2463 = vpop.permute.xlu0 %2462
      %2464 = vrot.lane.b32.xlu0 %v2325, 4
      %v2465 = vpop.permute.xlu0 %2464
      %2466 = vrot.lane.b32.xlu0 %v2326, 4
      %v2467 = vpop.permute.xlu0 %2466
      %2468 = vrot.lane.b32.xlu0 %v2327, 4
      %v2469 = vpop.permute.xlu0 %2468
      %2470 = vrot.lane.b32.xlu0 %v2328, 4
      %v2471 = vpop.permute.xlu0 %2470
      %2472 = vrot.lane.b32.xlu0 %v2329, 4
      %v2473 = vpop.permute.xlu0 %2472
      %2474 = vrot.lane.b32.xlu0 %v2330, 4
      %v2475 = vpop.permute.xlu0 %2474
      %2476 = vrot.lane.b32.xlu0 %v2331, 4
      %v2477 = vpop.permute.xlu0 %2476
      %2478 = vrot.lane.b32.xlu0 %v2332, 4
      %v2479 = vpop.permute.xlu0 %2478
      %2480 = vrot.lane.b32.xlu0 %v2333, 4
      %v2481 = vpop.permute.xlu0 %2480
      %2482 = vrot.lane.b32.xlu0 %v2334, 4
      %v2483 = vpop.permute.xlu0 %2482
      %2484 = vrot.lane.b32.xlu0 %v2335, 4
      %v2485 = vpop.permute.xlu0 %2484
      %2486 = vrot.lane.b32.xlu0 %v2336, 4
      %v2487 = vpop.permute.xlu0 %2486
      %2488 = vrot.lane.b32.xlu0 %v2337, 4
      %v2489 = vpop.permute.xlu0 %2488
      %2490 = vrot.lane.b32.xlu0 %v2338, 4
      %v2491 = vpop.permute.xlu0 %2490
      %2492 = vrot.lane.b32.xlu0 %v2339, 4
      %v2493 = vpop.permute.xlu0 %2492
      %2494 = vrot.lane.b32.xlu0 %v2340, 4
      %v2495 = vpop.permute.xlu0 %2494
      %2496 = vrot.lane.b32.xlu0 %v2341, 4
      %v2497 = vpop.permute.xlu0 %2496
      %2498 = vrot.lane.b32.xlu0 %v2342, 4
      %v2499 = vpop.permute.xlu0 %2498
      %2500 = vrot.lane.b32.xlu0 %v2343, 4
      %v2501 = vpop.permute.xlu0 %2500
      %2502 = vrot.lane.b32.xlu0 %v2344, 4
      %v2503 = vpop.permute.xlu0 %2502
      %2504 = vrot.lane.b32.xlu0 %v2345, 4
      %v2505 = vpop.permute.xlu0 %2504
      %2506 = vrot.lane.b32.xlu0 %v2346, 4
      %v2507 = vpop.permute.xlu0 %2506
      %2572 = vrot.lane.b32.xlu0 %v2348, 8
      %v2573 = vpop.permute.xlu0 %2572
      %2574 = vrot.lane.b32.xlu0 %v2349, 8
      %v2575 = vpop.permute.xlu0 %2574
      %2576 = vrot.lane.b32.xlu0 %v2350, 8
      %v2577 = vpop.permute.xlu0 %2576
      %2578 = vrot.lane.b32.xlu0 %v2351, 8
      %v2579 = vpop.permute.xlu0 %2578
      %2580 = vrot.lane.b32.xlu0 %v2352, 8
      %v2581 = vpop.permute.xlu0 %2580
      %2582 = vrot.lane.b32.xlu0 %v2353, 8
      %v2583 = vpop.permute.xlu0 %2582
      %2584 = vrot.lane.b32.xlu0 %v2354, 8
      %v2585 = vpop.permute.xlu0 %2584
      %2586 = vrot.lane.b32.xlu0 %v2355, 8
      %v2587 = vpop.permute.xlu0 %2586
      %2588 = vrot.lane.b32.xlu0 %v2356, 8
      %v2589 = vpop.permute.xlu0 %2588
      %2590 = vrot.lane.b32.xlu0 %v2357, 8
      %v2591 = vpop.permute.xlu0 %2590
      %2592 = vrot.lane.b32.xlu0 %v2358, 8
      %v2593 = vpop.permute.xlu0 %2592
      %2594 = vrot.lane.b32.xlu0 %v2359, 8
      %v2595 = vpop.permute.xlu0 %2594
      %2596 = vrot.lane.b32.xlu0 %v2360, 8
      %v2597 = vpop.permute.xlu0 %2596
      %2598 = vrot.lane.b32.xlu0 %v2361, 8
      %v2599 = vpop.permute.xlu0 %2598
      %2600 = vrot.lane.b32.xlu0 %v2362, 8
      %v2601 = vpop.permute.xlu0 %2600
      %2602 = vrot.lane.b32.xlu0 %v2363, 8
      %v2603 = vpop.permute.xlu0 %2602
      %2604 = vrot.lane.b32.xlu0 %v2364, 8
      %v2605 = vpop.permute.xlu0 %2604
      %2606 = vrot.lane.b32.xlu0 %v2365, 8
      %v2607 = vpop.permute.xlu0 %2606
      %2608 = vrot.lane.b32.xlu0 %v2366, 8
      %v2609 = vpop.permute.xlu0 %2608
      %2610 = vrot.lane.b32.xlu0 %v2367, 8
      %v2611 = vpop.permute.xlu0 %2610
      %2612 = vrot.lane.b32.xlu0 %v2368, 8
      %v2613 = vpop.permute.xlu0 %2612
      %2614 = vrot.lane.b32.xlu0 %v2369, 8
      %v2615 = vpop.permute.xlu0 %2614
      %2616 = vrot.lane.b32.xlu0 %v2370, 8
      %v2617 = vpop.permute.xlu0 %2616
      %2618 = vrot.lane.b32.xlu0 %v2371, 8
      %v2619 = vpop.permute.xlu0 %2618
      %2620 = vrot.lane.b32.xlu0 %v2372, 8
      %v2621 = vpop.permute.xlu0 %2620
      %2622 = vrot.lane.b32.xlu0 %v2373, 8
      %v2623 = vpop.permute.xlu0 %2622
      %2624 = vrot.lane.b32.xlu0 %v2374, 8
      %v2625 = vpop.permute.xlu0 %2624
      %2626 = vrot.lane.b32.xlu0 %v2375, 8
      %v2627 = vpop.permute.xlu0 %2626
      %2628 = vrot.lane.b32.xlu0 %v2376, 8
      %v2629 = vpop.permute.xlu0 %2628
      %2630 = vrot.lane.b32.xlu0 %v2377, 8
      %v2631 = vpop.permute.xlu0 %2630
      %2632 = vrot.lane.b32.xlu0 %v2378, 8
      %v2633 = vpop.permute.xlu0 %2632
      %2634 = vrot.lane.b32.xlu0 %v2379, 8
      %v2635 = vpop.permute.xlu0 %2634
      %2700 = vrot.lane.b32.xlu0 %v2380, 12
      %v2701 = vpop.permute.xlu0 %2700
      %2702 = vrot.lane.b32.xlu0 %v2381, 12
      %v2703 = vpop.permute.xlu0 %2702
      %2704 = vrot.lane.b32.xlu0 %v2382, 12
      %v2705 = vpop.permute.xlu0 %2704
      %2706 = vrot.lane.b32.xlu0 %v2383, 12
      %v2707 = vpop.permute.xlu0 %2706
      %2708 = vrot.lane.b32.xlu0 %v2384, 12
      %v2709 = vpop.permute.xlu0 %2708
      %2710 = vrot.lane.b32.xlu0 %v2385, 12
      %v2711 = vpop.permute.xlu0 %2710
      %2712 = vrot.lane.b32.xlu0 %v2386, 12
      %v2713 = vpop.permute.xlu0 %2712
      %2714 = vrot.lane.b32.xlu0 %v2387, 12
      %v2715 = vpop.permute.xlu0 %2714
      %2716 = vrot.lane.b32.xlu0 %v2388, 12
      %v2717 = vpop.permute.xlu0 %2716
      %2718 = vrot.lane.b32.xlu0 %v2389, 12
      %v2719 = vpop.permute.xlu0 %2718
      %2720 = vrot.lane.b32.xlu0 %v2390, 12
      %v2721 = vpop.permute.xlu0 %2720
      %2722 = vrot.lane.b32.xlu0 %v2391, 12
      %v2723 = vpop.permute.xlu0 %2722
      %2724 = vrot.lane.b32.xlu0 %v2392, 12
      %v2725 = vpop.permute.xlu0 %2724
      %2726 = vrot.lane.b32.xlu0 %v2393, 12
      %v2727 = vpop.permute.xlu0 %2726
      %2728 = vrot.lane.b32.xlu0 %v2394, 12
      %v2729 = vpop.permute.xlu0 %2728
      %2730 = vrot.lane.b32.xlu0 %v2395, 12
      %v2731 = vpop.permute.xlu0 %2730
      %2732 = vrot.lane.b32.xlu0 %v2396, 12
      %v2733 = vpop.permute.xlu0 %2732
      %2734 = vrot.lane.b32.xlu0 %v2397, 12
      %v2735 = vpop.permute.xlu0 %2734
      %2736 = vrot.lane.b32.xlu0 %v2398, 12
      %v2737 = vpop.permute.xlu0 %2736
      %2738 = vrot.lane.b32.xlu0 %v2399, 12
      %v2739 = vpop.permute.xlu0 %2738
      %2740 = vrot.lane.b32.xlu0 %v2400, 12
      %v2741 = vpop.permute.xlu0 %2740
      %2742 = vrot.lane.b32.xlu0 %v2401, 12
      %v2743 = vpop.permute.xlu0 %2742
      %2744 = vrot.lane.b32.xlu0 %v2402, 12
      %v2745 = vpop.permute.xlu0 %2744
      %2746 = vrot.lane.b32.xlu0 %v2403, 12
      %v2747 = vpop.permute.xlu0 %2746
      %2748 = vrot.lane.b32.xlu0 %v2404, 12
      %v2749 = vpop.permute.xlu0 %2748
      %2750 = vrot.lane.b32.xlu0 %v2405, 12
      %v2751 = vpop.permute.xlu0 %2750
      %2752 = vrot.lane.b32.xlu0 %v2406, 12
      %v2753 = vpop.permute.xlu0 %2752
      %2754 = vrot.lane.b32.xlu0 %v2407, 12
      %v2755 = vpop.permute.xlu0 %2754
      %2756 = vrot.lane.b32.xlu0 %v2408, 12
      %v2757 = vpop.permute.xlu0 %2756
      %2758 = vrot.lane.b32.xlu0 %v2409, 12
      %v2759 = vpop.permute.xlu0 %2758
      %2760 = vrot.lane.b32.xlu0 %v2410, 12
      %v2761 = vpop.permute.xlu0 %2760
      %2762 = vrot.lane.b32.xlu0 %v2411, 12
      %v2763 = vpop.permute.xlu0 %2762
      %v2796 = vsel %vm171, %v2283, %v2445
      %v2797 = vsel %vm171, %v2284, %v2447
      %v2798 = vsel %vm171, %v2285, %v2449
      %v2799 = vsel %vm171, %v2286, %v2451
      %v2800 = vsel %vm171, %v2287, %v2453
      %v2801 = vsel %vm171, %v2288, %v2455
      %v2802 = vsel %vm171, %v2289, %v2457
      %v2803 = vsel %vm171, %v2290, %v2459
      %v2804 = vsel %vm171, %v2291, %v2461
      %v2805 = vsel %vm171, %v2292, %v2463
      %v2806 = vsel %vm171, %v2293, %v2465
      %v2807 = vsel %vm171, %v2294, %v2467
      %v2808 = vsel %vm171, %v2295, %v2469
      %v2809 = vsel %vm171, %v2296, %v2471
      %v2810 = vsel %vm171, %v2297, %v2473
      %v2811 = vsel %vm171, %v2298, %v2475
      %v2812 = vsel %vm171, %v2299, %v2477
      %v2813 = vsel %vm171, %v2300, %v2479
      %v2814 = vsel %vm171, %v2301, %v2481
      %v2815 = vsel %vm171, %v2302, %v2483
      %v2816 = vsel %vm171, %v2303, %v2485
      %v2817 = vsel %vm171, %v2304, %v2487
      %v2818 = vsel %vm171, %v2305, %v2489
      %v2819 = vsel %vm171, %v2306, %v2491
      %v2820 = vsel %vm171, %v2307, %v2493
      %v2821 = vsel %vm171, %v2308, %v2495
      %v2822 = vsel %vm171, %v2309, %v2497
      %v2823 = vsel %vm171, %v2310, %v2499
      %v2824 = vsel %vm171, %v2311, %v2501
      %v2825 = vsel %vm171, %v2312, %v2503
      %v2826 = vsel %vm171, %v2313, %v2505
      %v2827 = vsel %vm171, %v2314, %v2507
      %v2828 = vsel %vm827, %v2796, %v2573
      %v2829 = vsel %vm827, %v2797, %v2575
      %v2830 = vsel %vm827, %v2798, %v2577
      %v2831 = vsel %vm827, %v2799, %v2579
      %v2832 = vsel %vm827, %v2800, %v2581
      %v2833 = vsel %vm827, %v2801, %v2583
      %v2834 = vsel %vm827, %v2802, %v2585
      %v2835 = vsel %vm827, %v2803, %v2587
      %v2836 = vsel %vm827, %v2804, %v2589
      %v2837 = vsel %vm827, %v2805, %v2591
      %v2838 = vsel %vm827, %v2806, %v2593
      %v2839 = vsel %vm827, %v2807, %v2595
      %v2840 = vsel %vm827, %v2808, %v2597
      %v2841 = vsel %vm827, %v2809, %v2599
      %v2842 = vsel %vm827, %v2810, %v2601
      %v2843 = vsel %vm827, %v2811, %v2603
      %v2844 = vsel %vm827, %v2812, %v2605
      %v2845 = vsel %vm827, %v2813, %v2607
      %v2846 = vsel %vm827, %v2814, %v2609
      %v2847 = vsel %vm827, %v2815, %v2611
      %v2848 = vsel %vm827, %v2816, %v2613
      %v2849 = vsel %vm827, %v2817, %v2615
      %v2850 = vsel %vm827, %v2818, %v2617
      %v2851 = vsel %vm827, %v2819, %v2619
      %v2852 = vsel %vm827, %v2820, %v2621
      %v2853 = vsel %vm827, %v2821, %v2623
      %v2854 = vsel %vm827, %v2822, %v2625
      %v2855 = vsel %vm827, %v2823, %v2627
      %v2856 = vsel %vm827, %v2824, %v2629
      %v2857 = vsel %vm827, %v2825, %v2631
      %v2858 = vsel %vm827, %v2826, %v2633
      %v2859 = vsel %vm827, %v2827, %v2635
      %v2860 = vsel %vm860, %v2828, %v2701
      %v2861 = vsel %vm860, %v2829, %v2703
      %v2862 = vsel %vm860, %v2830, %v2705
      %v2863 = vsel %vm860, %v2831, %v2707
      %v2864 = vsel %vm860, %v2832, %v2709
      %v2865 = vsel %vm860, %v2833, %v2711
      %v2866 = vsel %vm860, %v2834, %v2713
      %v2867 = vsel %vm860, %v2835, %v2715
      %v2868 = vsel %vm860, %v2836, %v2717
      %v2869 = vsel %vm860, %v2837, %v2719
      %v2870 = vsel %vm860, %v2838, %v2721
      %v2871 = vsel %vm860, %v2839, %v2723
      %v2872 = vsel %vm860, %v2840, %v2725
      %v2873 = vsel %vm860, %v2841, %v2727
      %v2874 = vsel %vm860, %v2842, %v2729
      %v2875 = vsel %vm860, %v2843, %v2731
      %v2876 = vsel %vm860, %v2844, %v2733
      %v2877 = vsel %vm860, %v2845, %v2735
      %v2878 = vsel %vm860, %v2846, %v2737
      %v2879 = vsel %vm860, %v2847, %v2739
      %v2880 = vsel %vm860, %v2848, %v2741
      %v2881 = vsel %vm860, %v2849, %v2743
      %v2882 = vsel %vm860, %v2850, %v2745
      %v2883 = vsel %vm860, %v2851, %v2747
      %v2884 = vsel %vm860, %v2852, %v2749
      %v2885 = vsel %vm860, %v2853, %v2751
      %v2886 = vsel %vm860, %v2854, %v2753
      %v2887 = vsel %vm860, %v2855, %v2755
      %v2888 = vsel %vm860, %v2856, %v2757
      %v2889 = vsel %vm860, %v2857, %v2759
      %v2890 = vsel %vm860, %v2858, %v2761
      %v2891 = vsel %vm860, %v2859, %v2763
      %s2892 = scalar_lea.vmem %s1, 32
      %v2893 = vld [vmem:[%s2892] sm:$0xff]
      %v2894 = vld [vmem:[%s2892 + $0x8] sm:$0xff]
      %v2896 = vsel %vm895, %v2860, 0
      %v2899 = vsel %vm895, %v2861, 0
      %v2902 = vsel %vm895, %v2862, 0
      %v2905 = vsel %vm895, %v2863, 0
      %v2908 = vsel %vm895, %v2864, 0
      %v2911 = vsel %vm895, %v2865, 0
      %v2914 = vsel %vm895, %v2866, 0
      %v2917 = vsel %vm895, %v2867, 0
      %v2920 = vsel %vm895, %v2868, 0
      %v2923 = vsel %vm895, %v2869, 0
      %v2926 = vsel %vm895, %v2870, 0
      %v2929 = vsel %vm895, %v2871, 0
      %v2932 = vsel %vm895, %v2872, 0
      %v2935 = vsel %vm895, %v2873, 0
      %v2938 = vsel %vm895, %v2874, 0
      %v2941 = vsel %vm895, %v2875, 0
      %v2944 = vsel %vm895, %v2876, 0
      %v2947 = vsel %vm895, %v2877, 0
      %v2950 = vsel %vm895, %v2878, 0
      %v2953 = vsel %vm895, %v2879, 0
      %v2956 = vsel %vm895, %v2880, 0
      %v2959 = vsel %vm895, %v2881, 0
      %v2962 = vsel %vm895, %v2882, 0
      %v2965 = vsel %vm895, %v2883, 0
      %v2968 = vsel %vm895, %v2884, 0
      %v2971 = vsel %vm895, %v2885, 0
      %v2974 = vsel %vm895, %v2886, 0
      %v2977 = vsel %vm895, %v2887, 0
      %v2980 = vsel %vm895, %v2888, 0
      %v2983 = vsel %vm895, %v2889, 0
      %v2986 = vsel %vm895, %v2890, 0
      %v2989 = vsel %vm895, %v2891, 0
      %2991 = vmatprep.subr.mxu0 0.0
      %2992 = vmatpush1.msra.mxu0 %v2893
      %2993 = vmatprep.subr.mxu0 0.0
      %2994 = vmatpush1.msra.mxu0 %v2894
      %2995 = vmatprep.subr.mxu0 0.0
      %2996 = vmatpush1.msra.mxu0 0.0
      %2997 = vmatprep.subr.mxu0 0.0
      %2998 = vmatpush1.msra.mxu0 0.0
      %2999 = vmatprep.subr.mxu0 0.0
      %3000 = vmatpush1.msra.mxu0 0.0
      %3001 = vmatprep.subr.mxu0 0.0
      %3002 = vmatpush1.msra.mxu0 0.0
      %3003 = vmatprep.subr.mxu0 0.0
      %3004 = vmatpush1.msra.mxu0 0.0
      %3005 = vmatprep.subr.mxu0 0.0
      %3006 = vmatpush1.msra.mxu0 0.0
      %3007 = vmatprep.subr.mxu0 0.0
      %3008 = vmatpush1.msra.mxu0 0.0
      %3009 = vmatprep.subr.mxu0 0.0
      %3010 = vmatpush1.msra.mxu0 0.0
      %3011 = vmatprep.subr.mxu0 0.0
      %3012 = vmatpush1.msra.mxu0 0.0
      %3013 = vmatprep.subr.mxu0 0.0
      %3014 = vmatpush1.msra.mxu0 0.0
      %3015 = vmatprep.subr.mxu0 0.0
      %3016 = vmatpush1.msra.mxu0 0.0
      %3017 = vmatprep.subr.mxu0 0.0
      %3018 = vmatpush1.msra.mxu0 0.0
      %3019 = vmatprep.subr.mxu0 0.0
      %3020 = vmatpush1.msra.mxu0 0.0
      %3021 = vmatprep.subr.mxu0 0.0
      %3022 = vmatpush1.msra.mxu0 0.0
      %3023 = vmatprep.subr.mxu0 0.0
      %3024 = vmatpush1.msra.mxu0 0.0
      %3025 = vmatprep.subr.mxu0 0.0
      %3026 = vmatpush1.msra.mxu0 0.0
      %3027 = vmatprep.subr.mxu0 0.0
      %3028 = vmatpush1.msra.mxu0 0.0
      %3029 = vmatprep.subr.mxu0 0.0
      %3030 = vmatpush1.msra.mxu0 0.0
      %3031 = vmatprep.subr.mxu0 0.0
      %3032 = vmatpush1.msra.mxu0 0.0
      %3033 = vmatprep.subr.mxu0 0.0
      %3034 = vmatpush1.msra.mxu0 0.0
      %3035 = vmatprep.subr.mxu0 0.0
      %3036 = vmatpush1.msra.mxu0 0.0
      %3037 = vmatprep.subr.mxu0 0.0
      %3038 = vmatpush1.msra.mxu0 0.0
      %3039 = vmatprep.subr.mxu0 0.0
      %3040 = vmatpush1.msra.mxu0 0.0
      %3041 = vmatprep.subr.mxu0 0.0
      %3042 = vmatpush1.msra.mxu0 0.0
      %3043 = vmatprep.subr.mxu0 0.0
      %3044 = vmatpush1.msra.mxu0 0.0
      %3045 = vmatprep.subr.mxu0 0.0
      %3046 = vmatpush1.msra.mxu0 0.0
      %3047 = vmatprep.subr.mxu0 0.0
      %3048 = vmatpush1.msra.mxu0 0.0
      %3049 = vmatprep.subr.mxu0 0.0
      %3050 = vmatpush1.msra.mxu0 0.0
      %3051 = vmatprep.subr.mxu0 0.0
      %3052 = vmatpush1.msra.mxu0 0.0
      %3053 = vmatprep.subr.mxu0 0.0
      %3054 = vmatpush1.msra.mxu0 0.0
      %3055 = vmatprep.mubr.f32.mxu0 0.0
      %3056 = vmatmul.mubr.f32.gmra.mrb[0].mxu0 %v2896
      %v3057 = vpop.f32.mrb[0].mxu0
      %v3058 = vadd.f32 0.0, %v3057
      %v3059 = vpop.f32.mrb[0].mxu0
      %3060 = vmatprep.mubr.f32.mxu0 0.0
      %3061 = vmatmul.mubr.f32.gmra.mrb[0].mxu0 %v2899
      %v3062 = vpop.f32.mrb[0].mxu0
      %v3063 = vadd.f32 0.0, %v3062
      %v3064 = vpop.f32.mrb[0].mxu0
      %3065 = vmatprep.mubr.f32.mxu0 0.0
      %3066 = vmatmul.mubr.f32.gmra.mrb[0].mxu0 %v2902
      %v3067 = vpop.f32.mrb[0].mxu0
      %v3068 = vadd.f32 0.0, %v3067
      %v3069 = vpop.f32.mrb[0].mxu0
      %3070 = vmatprep.mubr.f32.mxu0 0.0
      %3071 = vmatmul.mubr.f32.gmra.mrb[0].mxu0 %v2905
      %v3072 = vpop.f32.mrb[0].mxu0
      %v3073 = vadd.f32 0.0, %v3072
      %v3074 = vpop.f32.mrb[0].mxu0
      %3075 = vmatprep.mubr.f32.mxu0 0.0
      %3076 = vmatmul.mubr.f32.gmra.mrb[0].mxu0 %v2908
      %v3077 = vpop.f32.mrb[0].mxu0
      %v3078 = vadd.f32 0.0, %v3077
      %v3079 = vpop.f32.mrb[0].mxu0
      %3080 = vmatprep.mubr.f32.mxu0 0.0
      %3081 = vmatmul.mubr.f32.gmra.mrb[0].mxu0 %v2911
      %v3082 = vpop.f32.mrb[0].mxu0
      %v3083 = vadd.f32 0.0, %v3082
      %v3084 = vpop.f32.mrb[0].mxu0
      %3085 = vmatprep.mubr.f32.mxu0 0.0
      %3086 = vmatmul.mubr.f32.gmra.mrb[0].mxu0 %v2914
      %v3087 = vpop.f32.mrb[0].mxu0
      %v3088 = vadd.f32 0.0, %v3087
      %v3089 = vpop.f32.mrb[0].mxu0
      %3090 = vmatprep.mubr.f32.mxu0 0.0
      %3091 = vmatmul.mubr.f32.gmra.mrb[0].mxu0 %v2917
      %v3092 = vpop.f32.mrb[0].mxu0
      %v3093 = vadd.f32 0.0, %v3092
      %v3094 = vpop.f32.mrb[0].mxu0
      %3095 = vmatprep.mubr.f32.mxu0 0.0
      %3096 = vmatmul.mubr.f32.gmra.mrb[0].mxu0 %v2920
      %v3097 = vpop.f32.mrb[0].mxu0
      %v3098 = vadd.f32 0.0, %v3097
      %v3099 = vpop.f32.mrb[0].mxu0
      %3100 = vmatprep.mubr.f32.mxu0 0.0
      %3101 = vmatmul.mubr.f32.gmra.mrb[0].mxu0 %v2923
      %v3102 = vpop.f32.mrb[0].mxu0
      %v3103 = vadd.f32 0.0, %v3102
      %v3104 = vpop.f32.mrb[0].mxu0
      %3105 = vmatprep.mubr.f32.mxu0 0.0
      %3106 = vmatmul.mubr.f32.gmra.mrb[0].mxu0 %v2926
      %v3107 = vpop.f32.mrb[0].mxu0
      %v3108 = vadd.f32 0.0, %v3107
      %v3109 = vpop.f32.mrb[0].mxu0
      %3110 = vmatprep.mubr.f32.mxu0 0.0
      %3111 = vmatmul.mubr.f32.gmra.mrb[0].mxu0 %v2929
      %v3112 = vpop.f32.mrb[0].mxu0
      %v3113 = vadd.f32 0.0, %v3112
      %v3114 = vpop.f32.mrb[0].mxu0
      %3115 = vmatprep.mubr.f32.mxu0 0.0
      %3116 = vmatmul.mubr.f32.gmra.mrb[0].mxu0 %v2932
      %v3117 = vpop.f32.mrb[0].mxu0
      %v3118 = vadd.f32 0.0, %v3117
      %v3119 = vpop.f32.mrb[0].mxu0
      %3120 = vmatprep.mubr.f32.mxu0 0.0
      %3121 = vmatmul.mubr.f32.gmra.mrb[0].mxu0 %v2935
      %v3122 = vpop.f32.mrb[0].mxu0
      %v3123 = vadd.f32 0.0, %v3122
      %v3124 = vpop.f32.mrb[0].mxu0
      %3125 = vmatprep.mubr.f32.mxu0 0.0
      %3126 = vmatmul.mubr.f32.gmra.mrb[0].mxu0 %v2938
      %v3127 = vpop.f32.mrb[0].mxu0
      %v3128 = vadd.f32 0.0, %v3127
      %v3129 = vpop.f32.mrb[0].mxu0
      %3130 = vmatprep.mubr.f32.mxu0 0.0
      %3131 = vmatmul.mubr.f32.gmra.mrb[0].mxu0 %v2941
      %v3132 = vpop.f32.mrb[0].mxu0
      %v3133 = vadd.f32 0.0, %v3132
      %v3134 = vpop.f32.mrb[0].mxu0
      %3135 = vmatprep.mubr.f32.mxu0 0.0
      %3136 = vmatmul.mubr.f32.gmra.mrb[0].mxu0 %v2944
      %v3137 = vpop.f32.mrb[0].mxu0
      %v3138 = vadd.f32 0.0, %v3137
      %v3139 = vpop.f32.mrb[0].mxu0
      %3140 = vmatprep.mubr.f32.mxu0 0.0
      %3141 = vmatmul.mubr.f32.gmra.mrb[0].mxu0 %v2947
      %v3142 = vpop.f32.mrb[0].mxu0
      %v3143 = vadd.f32 0.0, %v3142
      %v3144 = vpop.f32.mrb[0].mxu0
      %3145 = vmatprep.mubr.f32.mxu0 0.0
      %3146 = vmatmul.mubr.f32.gmra.mrb[0].mxu0 %v2950
      %v3147 = vpop.f32.mrb[0].mxu0
      %v3148 = vadd.f32 0.0, %v3147
      %v3149 = vpop.f32.mrb[0].mxu0
      %3150 = vmatprep.mubr.f32.mxu0 0.0
      %3151 = vmatmul.mubr.f32.gmra.mrb[0].mxu0 %v2953
      %v3152 = vpop.f32.mrb[0].mxu0
      %v3153 = vadd.f32 0.0, %v3152
      %v3154 = vpop.f32.mrb[0].mxu0
      %3155 = vmatprep.mubr.f32.mxu0 0.0
      %3156 = vmatmul.mubr.f32.gmra.mrb[0].mxu0 %v2956
      %v3157 = vpop.f32.mrb[0].mxu0
      %v3158 = vadd.f32 0.0, %v3157
      %v3159 = vpop.f32.mrb[0].mxu0
      %3160 = vmatprep.mubr.f32.mxu0 0.0
      %3161 = vmatmul.mubr.f32.gmra.mrb[0].mxu0 %v2959
      %v3162 = vpop.f32.mrb[0].mxu0
      %v3163 = vadd.f32 0.0, %v3162
      %v3164 = vpop.f32.mrb[0].mxu0
      %3165 = vmatprep.mubr.f32.mxu0 0.0
      %3166 = vmatmul.mubr.f32.gmra.mrb[0].mxu0 %v2962
      %v3167 = vpop.f32.mrb[0].mxu0
      %v3168 = vadd.f32 0.0, %v3167
      %v3169 = vpop.f32.mrb[0].mxu0
      %3170 = vmatprep.mubr.f32.mxu0 0.0
      %3171 = vmatmul.mubr.f32.gmra.mrb[0].mxu0 %v2965
      %v3172 = vpop.f32.mrb[0].mxu0
      %v3173 = vadd.f32 0.0, %v3172
      %v3174 = vpop.f32.mrb[0].mxu0
      %3175 = vmatprep.mubr.f32.mxu0 0.0
      %3176 = vmatmul.mubr.f32.gmra.mrb[0].mxu0 %v2968
      %v3177 = vpop.f32.mrb[0].mxu0
      %v3178 = vadd.f32 0.0, %v3177
      %v3179 = vpop.f32.mrb[0].mxu0
      %3180 = vmatprep.mubr.f32.mxu0 0.0
      %3181 = vmatmul.mubr.f32.gmra.mrb[0].mxu0 %v2971
      %v3182 = vpop.f32.mrb[0].mxu0
      %v3183 = vadd.f32 0.0, %v3182
      %v3184 = vpop.f32.mrb[0].mxu0
      %3185 = vmatprep.mubr.f32.mxu0 0.0
      %3186 = vmatmul.mubr.f32.gmra.mrb[0].mxu0 %v2974
      %v3187 = vpop.f32.mrb[0].mxu0
      %v3188 = vadd.f32 0.0, %v3187
      %v3189 = vpop.f32.mrb[0].mxu0
      %3190 = vmatprep.mubr.f32.mxu0 0.0
      %3191 = vmatmul.mubr.f32.gmra.mrb[0].mxu0 %v2977
      %v3192 = vpop.f32.mrb[0].mxu0
      %v3193 = vadd.f32 0.0, %v3192
      %v3194 = vpop.f32.mrb[0].mxu0
      %3195 = vmatprep.mubr.f32.mxu0 0.0
      %3196 = vmatmul.mubr.f32.gmra.mrb[0].mxu0 %v2980
      %v3197 = vpop.f32.mrb[0].mxu0
      %v3198 = vadd.f32 0.0, %v3197
      %v3199 = vpop.f32.mrb[0].mxu0
      %3200 = vmatprep.mubr.f32.mxu0 0.0
      %3201 = vmatmul.mubr.f32.gmra.mrb[0].mxu0 %v2983
      %v3202 = vpop.f32.mrb[0].mxu0
      %v3203 = vadd.f32 0.0, %v3202
      %v3204 = vpop.f32.mrb[0].mxu0
      %3205 = vmatprep.mubr.f32.mxu0 0.0
      %3206 = vmatmul.mubr.f32.gmra.mrb[0].mxu0 %v2986
      %v3207 = vpop.f32.mrb[0].mxu0
      %v3208 = vadd.f32 0.0, %v3207
      %v3209 = vpop.f32.mrb[0].mxu0
      %3210 = vmatprep.mubr.f32.mxu0 0.0
      %3211 = vmatmul.mubr.f32.gmra.mrb[0].mxu0 %v2989
      %v3212 = vpop.f32.mrb[0].mxu0
      %v3213 = vadd.f32 0.0, %v3212
      %v3214 = vpop.f32.mrb[0].mxu0
      %3215 = vdwg.mxu0
      %v3216 = vld [vmem:[%s249 + $0x2] sm:$0xff]
      %v3217 = vld [vmem:[%s249 + $0xa] sm:$0xff]
      %v3218 = vld [vmem:[%s249 + $0x1a] sm:$0xff]
      %v3219 = vld [vmem:[%s249 + $0x22] sm:$0xff]
      %v3220 = vld [vmem:[%s249 + $0x32] sm:$0xff]
      %v3221 = vld [vmem:[%s249 + $0x3a] sm:$0xff]
      %v3222 = vld [vmem:[%s249 + $0x4a] sm:$0xff]
      %v3223 = vld [vmem:[%s249 + $0x52] sm:$0xff]
      %v3224 = vld [vmem:[%s249 + $0x62] sm:$0xff]
      %v3225 = vld [vmem:[%s249 + $0x6a] sm:$0xff]
      %v3226 = vld [vmem:[%s249 + $0x7a] sm:$0xff]
      %v3227 = vld [vmem:[%s249 + $0x82] sm:$0xff]
      %v3228 = vld [vmem:[%s249 + $0x92] sm:$0xff]
      %v3229 = vld [vmem:[%s249 + $0x9a] sm:$0xff]
      %v3230 = vld [vmem:[%s249 + $0xaa] sm:$0xff]
      %v3231 = vld [vmem:[%s249 + $0xb2] sm:$0xff]
      %v3232 = vld [vmem:[%s249 + $0xc2] sm:$0xff]
      %v3233 = vld [vmem:[%s249 + $0xca] sm:$0xff]
      %v3234 = vld [vmem:[%s249 + $0xda] sm:$0xff]
      %v3235 = vld [vmem:[%s249 + $0xe2] sm:$0xff]
      %v3236 = vld [vmem:[%s249 + $0xf2] sm:$0xff]
      %v3237 = vld [vmem:[%s249 + $0xfa] sm:$0xff]
      %v3238 = vld [vmem:[%s249 + $0x10a] sm:$0xff]
      %v3239 = vld [vmem:[%s249 + $0x112] sm:$0xff]
      %v3240 = vld [vmem:[%s249 + $0x122] sm:$0xff]
      %v3241 = vld [vmem:[%s249 + $0x12a] sm:$0xff]
      %v3242 = vld [vmem:[%s249 + $0x13a] sm:$0xff]
      %v3243 = vld [vmem:[%s249 + $0x142] sm:$0xff]
      %v3244 = vld [vmem:[%s249 + $0x152] sm:$0xff]
      %v3245 = vld [vmem:[%s249 + $0x15a] sm:$0xff]
      %v3246 = vld [vmem:[%s249 + $0x16a] sm:$0xff]
      %v3247 = vld [vmem:[%s249 + $0x172] sm:$0xff]
      %v3248 = vld [vmem:[%s2347 + $0x2] sm:$0xff]
      %v3249 = vld [vmem:[%s2347 + $0xa] sm:$0xff]
      %v3250 = vld [vmem:[%s2347 + $0x1a] sm:$0xff]
      %v3251 = vld [vmem:[%s2347 + $0x22] sm:$0xff]
      %v3252 = vld [vmem:[%s2347 + $0x32] sm:$0xff]
      %v3253 = vld [vmem:[%s2347 + $0x3a] sm:$0xff]
      %v3254 = vld [vmem:[%s2347 + $0x4a] sm:$0xff]
      %v3255 = vld [vmem:[%s2347 + $0x52] sm:$0xff]
      %v3256 = vld [vmem:[%s2347 + $0x62] sm:$0xff]
      %v3257 = vld [vmem:[%s2347 + $0x6a] sm:$0xff]
      %v3258 = vld [vmem:[%s2347 + $0x7a] sm:$0xff]
      %v3259 = vld [vmem:[%s2347 + $0x82] sm:$0xff]
      %v3260 = vld [vmem:[%s2347 + $0x92] sm:$0xff]
      %v3261 = vld [vmem:[%s2347 + $0x9a] sm:$0xff]
      %v3262 = vld [vmem:[%s2347 + $0xaa] sm:$0xff]
      %v3263 = vld [vmem:[%s2347 + $0xb2] sm:$0xff]
      %v3264 = vld [vmem:[%s2347 + $0xc2] sm:$0xff]
      %v3265 = vld [vmem:[%s2347 + $0xca] sm:$0xff]
      %v3266 = vld [vmem:[%s2347 + $0xda] sm:$0xff]
      %v3267 = vld [vmem:[%s2347 + $0xe2] sm:$0xff]
      %v3268 = vld [vmem:[%s2347 + $0xf2] sm:$0xff]
      %v3269 = vld [vmem:[%s2347 + $0xfa] sm:$0xff]
      %v3270 = vld [vmem:[%s2347 + $0x10a] sm:$0xff]
      %v3271 = vld [vmem:[%s2347 + $0x112] sm:$0xff]
      %v3272 = vld [vmem:[%s2347 + $0x122] sm:$0xff]
      %v3273 = vld [vmem:[%s2347 + $0x12a] sm:$0xff]
      %v3274 = vld [vmem:[%s2347 + $0x13a] sm:$0xff]
      %v3275 = vld [vmem:[%s2347 + $0x142] sm:$0xff]
      %v3276 = vld [vmem:[%s2347 + $0x152] sm:$0xff]
      %v3277 = vld [vmem:[%s2347 + $0x15a] sm:$0xff]
      %v3278 = vld [vmem:[%s2347 + $0x16a] sm:$0xff]
      %v3279 = vld [vmem:[%s2347 + $0x172] sm:$0xff]
      %3312 = vrot.lane.b32.xlu0 %v3216, 4
      %v3313 = vpop.permute.xlu0 %3312
      %3314 = vrot.lane.b32.xlu0 %v3217, 4
      %v3315 = vpop.permute.xlu0 %3314
      %3316 = vrot.lane.b32.xlu0 %v3218, 4
      %v3317 = vpop.permute.xlu0 %3316
      %3318 = vrot.lane.b32.xlu0 %v3219, 4
      %v3319 = vpop.permute.xlu0 %3318
      %3320 = vrot.lane.b32.xlu0 %v3220, 4
      %v3321 = vpop.permute.xlu0 %3320
      %3322 = vrot.lane.b32.xlu0 %v3221, 4
      %v3323 = vpop.permute.xlu0 %3322
      %3324 = vrot.lane.b32.xlu0 %v3222, 4
      %v3325 = vpop.permute.xlu0 %3324
      %3326 = vrot.lane.b32.xlu0 %v3223, 4
      %v3327 = vpop.permute.xlu0 %3326
      %3328 = vrot.lane.b32.xlu0 %v3224, 4
      %v3329 = vpop.permute.xlu0 %3328
      %3330 = vrot.lane.b32.xlu0 %v3225, 4
      %v3331 = vpop.permute.xlu0 %3330
      %3332 = vrot.lane.b32.xlu0 %v3226, 4
      %v3333 = vpop.permute.xlu0 %3332
      %3334 = vrot.lane.b32.xlu0 %v3227, 4
      %v3335 = vpop.permute.xlu0 %3334
      %3336 = vrot.lane.b32.xlu0 %v3228, 4
      %v3337 = vpop.permute.xlu0 %3336
      %3338 = vrot.lane.b32.xlu0 %v3229, 4
      %v3339 = vpop.permute.xlu0 %3338
      %3340 = vrot.lane.b32.xlu0 %v3230, 4
      %v3341 = vpop.permute.xlu0 %3340
      %3342 = vrot.lane.b32.xlu0 %v3231, 4
      %v3343 = vpop.permute.xlu0 %3342
      %3344 = vrot.lane.b32.xlu0 %v3232, 4
      %v3345 = vpop.permute.xlu0 %3344
      %3346 = vrot.lane.b32.xlu0 %v3233, 4
      %v3347 = vpop.permute.xlu0 %3346
      %3348 = vrot.lane.b32.xlu0 %v3234, 4
      %v3349 = vpop.permute.xlu0 %3348
      %3350 = vrot.lane.b32.xlu0 %v3235, 4
      %v3351 = vpop.permute.xlu0 %3350
      %3352 = vrot.lane.b32.xlu0 %v3236, 4
      %v3353 = vpop.permute.xlu0 %3352
      %3354 = vrot.lane.b32.xlu0 %v3237, 4
      %v3355 = vpop.permute.xlu0 %3354
      %3356 = vrot.lane.b32.xlu0 %v3238, 4
      %v3357 = vpop.permute.xlu0 %3356
      %3358 = vrot.lane.b32.xlu0 %v3239, 4
      %v3359 = vpop.permute.xlu0 %3358
      %3360 = vrot.lane.b32.xlu0 %v3240, 4
      %v3361 = vpop.permute.xlu0 %3360
      %3362 = vrot.lane.b32.xlu0 %v3241, 4
      %v3363 = vpop.permute.xlu0 %3362
      %3364 = vrot.lane.b32.xlu0 %v3242, 4
      %v3365 = vpop.permute.xlu0 %3364
      %3366 = vrot.lane.b32.xlu0 %v3243, 4
      %v3367 = vpop.permute.xlu0 %3366
      %3368 = vrot.lane.b32.xlu0 %v3244, 4
      %v3369 = vpop.permute.xlu0 %3368
      %3370 = vrot.lane.b32.xlu0 %v3245, 4
      %v3371 = vpop.permute.xlu0 %3370
      %3372 = vrot.lane.b32.xlu0 %v3246, 4
      %v3373 = vpop.permute.xlu0 %3372
      %3374 = vrot.lane.b32.xlu0 %v3247, 4
      %v3375 = vpop.permute.xlu0 %3374
      %3408 = vrot.lane.b32.xlu0 %v2380, 8
      %v3409 = vpop.permute.xlu0 %3408
      %3410 = vrot.lane.b32.xlu0 %v2381, 8
      %v3411 = vpop.permute.xlu0 %3410
      %3412 = vrot.lane.b32.xlu0 %v2382, 8
      %v3413 = vpop.permute.xlu0 %3412
      %3414 = vrot.lane.b32.xlu0 %v2383, 8
      %v3415 = vpop.permute.xlu0 %3414
      %3416 = vrot.lane.b32.xlu0 %v2384, 8
      %v3417 = vpop.permute.xlu0 %3416
      %3418 = vrot.lane.b32.xlu0 %v2385, 8
      %v3419 = vpop.permute.xlu0 %3418
      %3420 = vrot.lane.b32.xlu0 %v2386, 8
      %v3421 = vpop.permute.xlu0 %3420
      %3422 = vrot.lane.b32.xlu0 %v2387, 8
      %v3423 = vpop.permute.xlu0 %3422
      %3424 = vrot.lane.b32.xlu0 %v2388, 8
      %v3425 = vpop.permute.xlu0 %3424
      %3426 = vrot.lane.b32.xlu0 %v2389, 8
      %v3427 = vpop.permute.xlu0 %3426
      %3428 = vrot.lane.b32.xlu0 %v2390, 8
      %v3429 = vpop.permute.xlu0 %3428
      %3430 = vrot.lane.b32.xlu0 %v2391, 8
      %v3431 = vpop.permute.xlu0 %3430
      %3432 = vrot.lane.b32.xlu0 %v2392, 8
      %v3433 = vpop.permute.xlu0 %3432
      %3434 = vrot.lane.b32.xlu0 %v2393, 8
      %v3435 = vpop.permute.xlu0 %3434
      %3436 = vrot.lane.b32.xlu0 %v2394, 8
      %v3437 = vpop.permute.xlu0 %3436
      %3438 = vrot.lane.b32.xlu0 %v2395, 8
      %v3439 = vpop.permute.xlu0 %3438
      %3440 = vrot.lane.b32.xlu0 %v2396, 8
      %v3441 = vpop.permute.xlu0 %3440
      %3442 = vrot.lane.b32.xlu0 %v2397, 8
      %v3443 = vpop.permute.xlu0 %3442
      %3444 = vrot.lane.b32.xlu0 %v2398, 8
      %v3445 = vpop.permute.xlu0 %3444
      %3446 = vrot.lane.b32.xlu0 %v2399, 8
      %v3447 = vpop.permute.xlu0 %3446
      %3448 = vrot.lane.b32.xlu0 %v2400, 8
      %v3449 = vpop.permute.xlu0 %3448
      %3450 = vrot.lane.b32.xlu0 %v2401, 8
      %v3451 = vpop.permute.xlu0 %3450
      %3452 = vrot.lane.b32.xlu0 %v2402, 8
      %v3453 = vpop.permute.xlu0 %3452
      %3454 = vrot.lane.b32.xlu0 %v2403, 8
      %v3455 = vpop.permute.xlu0 %3454
      %3456 = vrot.lane.b32.xlu0 %v2404, 8
      %v3457 = vpop.permute.xlu0 %3456
      %3458 = vrot.lane.b32.xlu0 %v2405, 8
      %v3459 = vpop.permute.xlu0 %3458
      %3460 = vrot.lane.b32.xlu0 %v2406, 8
      %v3461 = vpop.permute.xlu0 %3460
      %3462 = vrot.lane.b32.xlu0 %v2407, 8
      %v3463 = vpop.permute.xlu0 %3462
      %3464 = vrot.lane.b32.xlu0 %v2408, 8
      %v3465 = vpop.permute.xlu0 %3464
      %3466 = vrot.lane.b32.xlu0 %v2409, 8
      %v3467 = vpop.permute.xlu0 %3466
      %3468 = vrot.lane.b32.xlu0 %v2410, 8
      %v3469 = vpop.permute.xlu0 %3468
      %3470 = vrot.lane.b32.xlu0 %v2411, 8
      %v3471 = vpop.permute.xlu0 %3470
      %3536 = vrot.lane.b32.xlu0 %v3248, 12
      %v3537 = vpop.permute.xlu0 %3536
      %3538 = vrot.lane.b32.xlu0 %v3249, 12
      %v3539 = vpop.permute.xlu0 %3538
      %3540 = vrot.lane.b32.xlu0 %v3250, 12
      %v3541 = vpop.permute.xlu0 %3540
      %3542 = vrot.lane.b32.xlu0 %v3251, 12
      %v3543 = vpop.permute.xlu0 %3542
      %3544 = vrot.lane.b32.xlu0 %v3252, 12
      %v3545 = vpop.permute.xlu0 %3544
      %3546 = vrot.lane.b32.xlu0 %v3253, 12
      %v3547 = vpop.permute.xlu0 %3546
      %3548 = vrot.lane.b32.xlu0 %v3254, 12
      %v3549 = vpop.permute.xlu0 %3548
      %3550 = vrot.lane.b32.xlu0 %v3255, 12
      %v3551 = vpop.permute.xlu0 %3550
      %3552 = vrot.lane.b32.xlu0 %v3256, 12
      %v3553 = vpop.permute.xlu0 %3552
      %3554 = vrot.lane.b32.xlu0 %v3257, 12
      %v3555 = vpop.permute.xlu0 %3554
      %3556 = vrot.lane.b32.xlu0 %v3258, 12
      %v3557 = vpop.permute.xlu0 %3556
      %3558 = vrot.lane.b32.xlu0 %v3259, 12
      %v3559 = vpop.permute.xlu0 %3558
      %3560 = vrot.lane.b32.xlu0 %v3260, 12
      %v3561 = vpop.permute.xlu0 %3560
      %3562 = vrot.lane.b32.xlu0 %v3261, 12
      %v3563 = vpop.permute.xlu0 %3562
      %3564 = vrot.lane.b32.xlu0 %v3262, 12
      %v3565 = vpop.permute.xlu0 %3564
      %3566 = vrot.lane.b32.xlu0 %v3263, 12
      %v3567 = vpop.permute.xlu0 %3566
      %3568 = vrot.lane.b32.xlu0 %v3264, 12
      %v3569 = vpop.permute.xlu0 %3568
      %3570 = vrot.lane.b32.xlu0 %v3265, 12
      %v3571 = vpop.permute.xlu0 %3570
      %3572 = vrot.lane.b32.xlu0 %v3266, 12
      %v3573 = vpop.permute.xlu0 %3572
      %3574 = vrot.lane.b32.xlu0 %v3267, 12
      %v3575 = vpop.permute.xlu0 %3574
      %3576 = vrot.lane.b32.xlu0 %v3268, 12
      %v3577 = vpop.permute.xlu0 %3576
      %3578 = vrot.lane.b32.xlu0 %v3269, 12
      %v3579 = vpop.permute.xlu0 %3578
      %3580 = vrot.lane.b32.xlu0 %v3270, 12
      %v3581 = vpop.permute.xlu0 %3580
      %3582 = vrot.lane.b32.xlu0 %v3271, 12
      %v3583 = vpop.permute.xlu0 %3582
      %3584 = vrot.lane.b32.xlu0 %v3272, 12
      %v3585 = vpop.permute.xlu0 %3584
      %3586 = vrot.lane.b32.xlu0 %v3273, 12
      %v3587 = vpop.permute.xlu0 %3586
      %3588 = vrot.lane.b32.xlu0 %v3274, 12
      %v3589 = vpop.permute.xlu0 %3588
      %3590 = vrot.lane.b32.xlu0 %v3275, 12
      %v3591 = vpop.permute.xlu0 %3590
      %3592 = vrot.lane.b32.xlu0 %v3276, 12
      %v3593 = vpop.permute.xlu0 %3592
      %3594 = vrot.lane.b32.xlu0 %v3277, 12
      %v3595 = vpop.permute.xlu0 %3594
      %3596 = vrot.lane.b32.xlu0 %v3278, 12
      %v3597 = vpop.permute.xlu0 %3596
      %3598 = vrot.lane.b32.xlu0 %v3279, 12
      %v3599 = vpop.permute.xlu0 %3598
      %v3632 = vsel %vm171, %v2315, %v3313
      %v3633 = vsel %vm171, %v2316, %v3315
      %v3634 = vsel %vm171, %v2317, %v3317
      %v3635 = vsel %vm171, %v2318, %v3319
      %v3636 = vsel %vm171, %v2319, %v3321
      %v3637 = vsel %vm171, %v2320, %v3323
      %v3638 = vsel %vm171, %v2321, %v3325
      %v3639 = vsel %vm171, %v2322, %v3327
      %v3640 = vsel %vm171, %v2323, %v3329
      %v3641 = vsel %vm171, %v2324, %v3331
      %v3642 = vsel %vm171, %v2325, %v3333
      %v3643 = vsel %vm171, %v2326, %v3335
      %v3644 = vsel %vm171, %v2327, %v3337
      %v3645 = vsel %vm171, %v2328, %v3339
      %v3646 = vsel %vm171, %v2329, %v3341
      %v3647 = vsel %vm171, %v2330, %v3343
      %v3648 = vsel %vm171, %v2331, %v3345
      %v3649 = vsel %vm171, %v2332, %v3347
      %v3650 = vsel %vm171, %v2333, %v3349
      %v3651 = vsel %vm171, %v2334, %v3351
      %v3652 = vsel %vm171, %v2335, %v3353
      %v3653 = vsel %vm171, %v2336, %v3355
      %v3654 = vsel %vm171, %v2337, %v3357
      %v3655 = vsel %vm171, %v2338, %v3359
      %v3656 = vsel %vm171, %v2339, %v3361
      %v3657 = vsel %vm171, %v2340, %v3363
      %v3658 = vsel %vm171, %v2341, %v3365
      %v3659 = vsel %vm171, %v2342, %v3367
      %v3660 = vsel %vm171, %v2343, %v3369
      %v3661 = vsel %vm171, %v2344, %v3371
      %v3662 = vsel %vm171, %v2345, %v3373
      %v3663 = vsel %vm171, %v2346, %v3375
      %v3664 = vsel %vm827, %v3632, %v3409
      %v3665 = vsel %vm827, %v3633, %v3411
      %v3666 = vsel %vm827, %v3634, %v3413
      %v3667 = vsel %vm827, %v3635, %v3415
      %v3668 = vsel %vm827, %v3636, %v3417
      %v3669 = vsel %vm827, %v3637, %v3419
      %v3670 = vsel %vm827, %v3638, %v3421
      %v3671 = vsel %vm827, %v3639, %v3423
      %v3672 = vsel %vm827, %v3640, %v3425
      %v3673 = vsel %vm827, %v3641, %v3427
      %v3674 = vsel %vm827, %v3642, %v3429
      %v3675 = vsel %vm827, %v3643, %v3431
      %v3676 = vsel %vm827, %v3644, %v3433
      %v3677 = vsel %vm827, %v3645, %v3435
      %v3678 = vsel %vm827, %v3646, %v3437
      %v3679 = vsel %vm827, %v3647, %v3439
      %v3680 = vsel %vm827, %v3648, %v3441
      %v3681 = vsel %vm827, %v3649, %v3443
      %v3682 = vsel %vm827, %v3650, %v3445
      %v3683 = vsel %vm827, %v3651, %v3447
      %v3684 = vsel %vm827, %v3652, %v3449
      %v3685 = vsel %vm827, %v3653, %v3451
      %v3686 = vsel %vm827, %v3654, %v3453
      %v3687 = vsel %vm827, %v3655, %v3455
      %v3688 = vsel %vm827, %v3656, %v3457
      %v3689 = vsel %vm827, %v3657, %v3459
      %v3690 = vsel %vm827, %v3658, %v3461
      %v3691 = vsel %vm827, %v3659, %v3463
      %v3692 = vsel %vm827, %v3660, %v3465
      %v3693 = vsel %vm827, %v3661, %v3467
      %v3694 = vsel %vm827, %v3662, %v3469
      %v3695 = vsel %vm827, %v3663, %v3471
      %v3696 = vsel %vm860, %v3664, %v3537
      %v3697 = vsel %vm860, %v3665, %v3539
      %v3698 = vsel %vm860, %v3666, %v3541
      %v3699 = vsel %vm860, %v3667, %v3543
      %v3700 = vsel %vm860, %v3668, %v3545
      %v3701 = vsel %vm860, %v3669, %v3547
      %v3702 = vsel %vm860, %v3670, %v3549
      %v3703 = vsel %vm860, %v3671, %v3551
      %v3704 = vsel %vm860, %v3672, %v3553
      %v3705 = vsel %vm860, %v3673, %v3555
      %v3706 = vsel %vm860, %v3674, %v3557
      %v3707 = vsel %vm860, %v3675, %v3559
      %v3708 = vsel %vm860, %v3676, %v3561
      %v3709 = vsel %vm860, %v3677, %v3563
      %v3710 = vsel %vm860, %v3678, %v3565
      %v3711 = vsel %vm860, %v3679, %v3567
      %v3712 = vsel %vm860, %v3680, %v3569
      %v3713 = vsel %vm860, %v3681, %v3571
      %v3714 = vsel %vm860, %v3682, %v3573
      %v3715 = vsel %vm860, %v3683, %v3575
      %v3716 = vsel %vm860, %v3684, %v3577
      %v3717 = vsel %vm860, %v3685, %v3579
      %v3718 = vsel %vm860, %v3686, %v3581
      %v3719 = vsel %vm860, %v3687, %v3583
      %v3720 = vsel %vm860, %v3688, %v3585
      %v3721 = vsel %vm860, %v3689, %v3587
      %v3722 = vsel %vm860, %v3690, %v3589
      %v3723 = vsel %vm860, %v3691, %v3591
      %v3724 = vsel %vm860, %v3692, %v3593
      %v3725 = vsel %vm860, %v3693, %v3595
      %v3726 = vsel %vm860, %v3694, %v3597
      %v3727 = vsel %vm860, %v3695, %v3599
      %s3728 = scalar_lea.vmem %s1, 48
      %v3729 = vld [vmem:[%s3728] sm:$0xff]
      %v3730 = vld [vmem:[%s3728 + $0x8] sm:$0xff]
      %v3732 = vsel %vm895, %v3696, 0
      %v3735 = vsel %vm895, %v3697, 0
      %v3738 = vsel %vm895, %v3698, 0
      %v3741 = vsel %vm895, %v3699, 0
      %v3744 = vsel %vm895, %v3700, 0
      %v3747 = vsel %vm895, %v3701, 0
      %v3750 = vsel %vm895, %v3702, 0
      %v3753 = vsel %vm895, %v3703, 0
      %v3756 = vsel %vm895, %v3704, 0
      %v3759 = vsel %vm895, %v3705, 0
      %v3762 = vsel %vm895, %v3706, 0
      %v3765 = vsel %vm895, %v3707, 0
      %v3768 = vsel %vm895, %v3708, 0
      %v3771 = vsel %vm895, %v3709, 0
      %v3774 = vsel %vm895, %v3710, 0
      %v3777 = vsel %vm895, %v3711, 0
      %v3780 = vsel %vm895, %v3712, 0
      %v3783 = vsel %vm895, %v3713, 0
      %v3786 = vsel %vm895, %v3714, 0
      %v3789 = vsel %vm895, %v3715, 0
      %v3792 = vsel %vm895, %v3716, 0
      %v3795 = vsel %vm895, %v3717, 0
      %v3798 = vsel %vm895, %v3718, 0
      %v3801 = vsel %vm895, %v3719, 0
      %v3804 = vsel %vm895, %v3720, 0
      %v3807 = vsel %vm895, %v3721, 0
      %v3810 = vsel %vm895, %v3722, 0
      %v3813 = vsel %vm895, %v3723, 0
      %v3816 = vsel %vm895, %v3724, 0
      %v3819 = vsel %vm895, %v3725, 0
      %v3822 = vsel %vm895, %v3726, 0
      %v3825 = vsel %vm895, %v3727, 0
      %3827 = vmatprep.subr.mxu0 0.0
      %3828 = vmatpush1.msra.mxu0 %v3729
      %3829 = vmatprep.subr.mxu0 0.0
      %3830 = vmatpush1.msra.mxu0 %v3730
      %3831 = vmatprep.subr.mxu0 0.0
      %3832 = vmatpush1.msra.mxu0 0.0
      %3833 = vmatprep.subr.mxu0 0.0
      %3834 = vmatpush1.msra.mxu0 0.0
      %3835 = vmatprep.subr.mxu0 0.0
      %3836 = vmatpush1.msra.mxu0 0.0
      %3837 = vmatprep.subr.mxu0 0.0
      %3838 = vmatpush1.msra.mxu0 0.0
      %3839 = vmatprep.subr.mxu0 0.0
      %3840 = vmatpush1.msra.mxu0 0.0
      %3841 = vmatprep.subr.mxu0 0.0
      %3842 = vmatpush1.msra.mxu0 0.0
      %3843 = vmatprep.subr.mxu0 0.0
      %3844 = vmatpush1.msra.mxu0 0.0
      %3845 = vmatprep.subr.mxu0 0.0
      %3846 = vmatpush1.msra.mxu0 0.0
      %3847 = vmatprep.subr.mxu0 0.0
      %3848 = vmatpush1.msra.mxu0 0.0
      %3849 = vmatprep.subr.mxu0 0.0
      %3850 = vmatpush1.msra.mxu0 0.0
      %3851 = vmatprep.subr.mxu0 0.0
      %3852 = vmatpush1.msra.mxu0 0.0
      %3853 = vmatprep.subr.mxu0 0.0
      %3854 = vmatpush1.msra.mxu0 0.0
      %3855 = vmatprep.subr.mxu0 0.0
      %3856 = vmatpush1.msra.mxu0 0.0
      %3857 = vmatprep.subr.mxu0 0.0
      %3858 = vmatpush1.msra.mxu0 0.0
      %3859 = vmatprep.subr.mxu0 0.0
      %3860 = vmatpush1.msra.mxu0 0.0
      %3861 = vmatprep.subr.mxu0 0.0
      %3862 = vmatpush1.msra.mxu0 0.0
      %3863 = vmatprep.subr.mxu0 0.0
      %3864 = vmatpush1.msra.mxu0 0.0
      %3865 = vmatprep.subr.mxu0 0.0
      %3866 = vmatpush1.msra.mxu0 0.0
      %3867 = vmatprep.subr.mxu0 0.0
      %3868 = vmatpush1.msra.mxu0 0.0
      %3869 = vmatprep.subr.mxu0 0.0
      %3870 = vmatpush1.msra.mxu0 0.0
      %3871 = vmatprep.subr.mxu0 0.0
      %3872 = vmatpush1.msra.mxu0 0.0
      %3873 = vmatprep.subr.mxu0 0.0
      %3874 = vmatpush1.msra.mxu0 0.0
      %3875 = vmatprep.subr.mxu0 0.0
      %3876 = vmatpush1.msra.mxu0 0.0
      %3877 = vmatprep.subr.mxu0 0.0
      %3878 = vmatpush1.msra.mxu0 0.0
      %3879 = vmatprep.subr.mxu0 0.0
      %3880 = vmatpush1.msra.mxu0 0.0
      %3881 = vmatprep.subr.mxu0 0.0
      %3882 = vmatpush1.msra.mxu0 0.0
      %3883 = vmatprep.subr.mxu0 0.0
      %3884 = vmatpush1.msra.mxu0 0.0
      %3885 = vmatprep.subr.mxu0 0.0
      %3886 = vmatpush1.msra.mxu0 0.0
      %3887 = vmatprep.subr.mxu0 0.0
      %3888 = vmatpush1.msra.mxu0 0.0
      %3889 = vmatprep.subr.mxu0 0.0
      %3890 = vmatpush1.msra.mxu0 0.0
      %3891 = vmatprep.mubr.f32.mxu0 0.0
      %3892 = vmatmul.mubr.f32.gmra.mrb[0].mxu0 %v3732
      %v3893 = vpop.f32.mrb[0].mxu0
      %v3894 = vadd.f32 0.0, %v3893
      %v3895 = vpop.f32.mrb[0].mxu0
      %3896 = vmatprep.mubr.f32.mxu0 0.0
      %3897 = vmatmul.mubr.f32.gmra.mrb[0].mxu0 %v3735
      %v3898 = vpop.f32.mrb[0].mxu0
      %v3899 = vadd.f32 0.0, %v3898
      %v3900 = vpop.f32.mrb[0].mxu0
      %3901 = vmatprep.mubr.f32.mxu0 0.0
      %3902 = vmatmul.mubr.f32.gmra.mrb[0].mxu0 %v3738
      %v3903 = vpop.f32.mrb[0].mxu0
      %v3904 = vadd.f32 0.0, %v3903
      %v3905 = vpop.f32.mrb[0].mxu0
      %3906 = vmatprep.mubr.f32.mxu0 0.0
      %3907 = vmatmul.mubr.f32.gmra.mrb[0].mxu0 %v3741
      %v3908 = vpop.f32.mrb[0].mxu0
      %v3909 = vadd.f32 0.0, %v3908
      %v3910 = vpop.f32.mrb[0].mxu0
      %3911 = vmatprep.mubr.f32.mxu0 0.0
      %3912 = vmatmul.mubr.f32.gmra.mrb[0].mxu0 %v3744
      %v3913 = vpop.f32.mrb[0].mxu0
      %v3914 = vadd.f32 0.0, %v3913
      %v3915 = vpop.f32.mrb[0].mxu0
      %3916 = vmatprep.mubr.f32.mxu0 0.0
      %3917 = vmatmul.mubr.f32.gmra.mrb[0].mxu0 %v3747
      %v3918 = vpop.f32.mrb[0].mxu0
      %v3919 = vadd.f32 0.0, %v3918
      %v3920 = vpop.f32.mrb[0].mxu0
      %3921 = vmatprep.mubr.f32.mxu0 0.0
      %3922 = vmatmul.mubr.f32.gmra.mrb[0].mxu0 %v3750
      %v3923 = vpop.f32.mrb[0].mxu0
      %v3924 = vadd.f32 0.0, %v3923
      %v3925 = vpop.f32.mrb[0].mxu0
      %3926 = vmatprep.mubr.f32.mxu0 0.0
      %3927 = vmatmul.mubr.f32.gmra.mrb[0].mxu0 %v3753
      %v3928 = vpop.f32.mrb[0].mxu0
      %v3929 = vadd.f32 0.0, %v3928
      %v3930 = vpop.f32.mrb[0].mxu0
      %3931 = vmatprep.mubr.f32.mxu0 0.0
      %3932 = vmatmul.mubr.f32.gmra.mrb[0].mxu0 %v3756
      %v3933 = vpop.f32.mrb[0].mxu0
      %v3934 = vadd.f32 0.0, %v3933
      %v3935 = vpop.f32.mrb[0].mxu0
      %3936 = vmatprep.mubr.f32.mxu0 0.0
      %3937 = vmatmul.mubr.f32.gmra.mrb[0].mxu0 %v3759
      %v3938 = vpop.f32.mrb[0].mxu0
      %v3939 = vadd.f32 0.0, %v3938
      %v3940 = vpop.f32.mrb[0].mxu0
      %3941 = vmatprep.mubr.f32.mxu0 0.0
      %3942 = vmatmul.mubr.f32.gmra.mrb[0].mxu0 %v3762
      %v3943 = vpop.f32.mrb[0].mxu0
      %v3944 = vadd.f32 0.0, %v3943
      %v3945 = vpop.f32.mrb[0].mxu0
      %3946 = vmatprep.mubr.f32.mxu0 0.0
      %3947 = vmatmul.mubr.f32.gmra.mrb[0].mxu0 %v3765
      %v3948 = vpop.f32.mrb[0].mxu0
      %v3949 = vadd.f32 0.0, %v3948
      %v3950 = vpop.f32.mrb[0].mxu0
      %3951 = vmatprep.mubr.f32.mxu0 0.0
      %3952 = vmatmul.mubr.f32.gmra.mrb[0].mxu0 %v3768
      %v3953 = vpop.f32.mrb[0].mxu0
      %v3954 = vadd.f32 0.0, %v3953
      %v3955 = vpop.f32.mrb[0].mxu0
      %3956 = vmatprep.mubr.f32.mxu0 0.0
      %3957 = vmatmul.mubr.f32.gmra.mrb[0].mxu0 %v3771
      %v3958 = vpop.f32.mrb[0].mxu0
      %v3959 = vadd.f32 0.0, %v3958
      %v3960 = vpop.f32.mrb[0].mxu0
      %3961 = vmatprep.mubr.f32.mxu0 0.0
      %3962 = vmatmul.mubr.f32.gmra.mrb[0].mxu0 %v3774
      %v3963 = vpop.f32.mrb[0].mxu0
      %v3964 = vadd.f32 0.0, %v3963
      %v3965 = vpop.f32.mrb[0].mxu0
      %3966 = vmatprep.mubr.f32.mxu0 0.0
      %3967 = vmatmul.mubr.f32.gmra.mrb[0].mxu0 %v3777
      %v3968 = vpop.f32.mrb[0].mxu0
      %v3969 = vadd.f32 0.0, %v3968
      %v3970 = vpop.f32.mrb[0].mxu0
      %3971 = vmatprep.mubr.f32.mxu0 0.0
      %3972 = vmatmul.mubr.f32.gmra.mrb[0].mxu0 %v3780
      %v3973 = vpop.f32.mrb[0].mxu0
      %v3974 = vadd.f32 0.0, %v3973
      %v3975 = vpop.f32.mrb[0].mxu0
      %3976 = vmatprep.mubr.f32.mxu0 0.0
      %3977 = vmatmul.mubr.f32.gmra.mrb[0].mxu0 %v3783
      %v3978 = vpop.f32.mrb[0].mxu0
      %v3979 = vadd.f32 0.0, %v3978
      %v3980 = vpop.f32.mrb[0].mxu0
      %3981 = vmatprep.mubr.f32.mxu0 0.0
      %3982 = vmatmul.mubr.f32.gmra.mrb[0].mxu0 %v3786
      %v3983 = vpop.f32.mrb[0].mxu0
      %v3984 = vadd.f32 0.0, %v3983
      %v3985 = vpop.f32.mrb[0].mxu0
      %3986 = vmatprep.mubr.f32.mxu0 0.0
      %3987 = vmatmul.mubr.f32.gmra.mrb[0].mxu0 %v3789
      %v3988 = vpop.f32.mrb[0].mxu0
      %v3989 = vadd.f32 0.0, %v3988
      %v3990 = vpop.f32.mrb[0].mxu0
      %3991 = vmatprep.mubr.f32.mxu0 0.0
      %3992 = vmatmul.mubr.f32.gmra.mrb[0].mxu0 %v3792
      %v3993 = vpop.f32.mrb[0].mxu0
      %v3994 = vadd.f32 0.0, %v3993
      %v3995 = vpop.f32.mrb[0].mxu0
      %3996 = vmatprep.mubr.f32.mxu0 0.0
      %3997 = vmatmul.mubr.f32.gmra.mrb[0].mxu0 %v3795
      %v3998 = vpop.f32.mrb[0].mxu0
      %v3999 = vadd.f32 0.0, %v3998
      %v4000 = vpop.f32.mrb[0].mxu0
      %4001 = vmatprep.mubr.f32.mxu0 0.0
      %4002 = vmatmul.mubr.f32.gmra.mrb[0].mxu0 %v3798
      %v4003 = vpop.f32.mrb[0].mxu0
      %v4004 = vadd.f32 0.0, %v4003
      %v4005 = vpop.f32.mrb[0].mxu0
      %4006 = vmatprep.mubr.f32.mxu0 0.0
      %4007 = vmatmul.mubr.f32.gmra.mrb[0].mxu0 %v3801
      %v4008 = vpop.f32.mrb[0].mxu0
      %v4009 = vadd.f32 0.0, %v4008
      %v4010 = vpop.f32.mrb[0].mxu0
      %4011 = vmatprep.mubr.f32.mxu0 0.0
      %4012 = vmatmul.mubr.f32.gmra.mrb[0].mxu0 %v3804
      %v4013 = vpop.f32.mrb[0].mxu0
      %v4014 = vadd.f32 0.0, %v4013
      %v4015 = vpop.f32.mrb[0].mxu0
      %4016 = vmatprep.mubr.f32.mxu0 0.0
      %4017 = vmatmul.mubr.f32.gmra.mrb[0].mxu0 %v3807
      %v4018 = vpop.f32.mrb[0].mxu0
      %v4019 = vadd.f32 0.0, %v4018
      %v4020 = vpop.f32.mrb[0].mxu0
      %4021 = vmatprep.mubr.f32.mxu0 0.0
      %4022 = vmatmul.mubr.f32.gmra.mrb[0].mxu0 %v3810
      %v4023 = vpop.f32.mrb[0].mxu0
      %v4024 = vadd.f32 0.0, %v4023
      %v4025 = vpop.f32.mrb[0].mxu0
      %4026 = vmatprep.mubr.f32.mxu0 0.0
      %4027 = vmatmul.mubr.f32.gmra.mrb[0].mxu0 %v3813
      %v4028 = vpop.f32.mrb[0].mxu0
      %v4029 = vadd.f32 0.0, %v4028
      %v4030 = vpop.f32.mrb[0].mxu0
      %4031 = vmatprep.mubr.f32.mxu0 0.0
      %4032 = vmatmul.mubr.f32.gmra.mrb[0].mxu0 %v3816
      %v4033 = vpop.f32.mrb[0].mxu0
      %v4034 = vadd.f32 0.0, %v4033
      %v4035 = vpop.f32.mrb[0].mxu0
      %4036 = vmatprep.mubr.f32.mxu0 0.0
      %4037 = vmatmul.mubr.f32.gmra.mrb[0].mxu0 %v3819
      %v4038 = vpop.f32.mrb[0].mxu0
      %v4039 = vadd.f32 0.0, %v4038
      %v4040 = vpop.f32.mrb[0].mxu0
      %4041 = vmatprep.mubr.f32.mxu0 0.0
      %4042 = vmatmul.mubr.f32.gmra.mrb[0].mxu0 %v3822
      %v4043 = vpop.f32.mrb[0].mxu0
      %v4044 = vadd.f32 0.0, %v4043
      %v4045 = vpop.f32.mrb[0].mxu0
      %4046 = vmatprep.mubr.f32.mxu0 0.0
      %4047 = vmatmul.mubr.f32.gmra.mrb[0].mxu0 %v3825
      %v4048 = vpop.f32.mrb[0].mxu0
      %v4049 = vadd.f32 0.0, %v4048
      %v4050 = vpop.f32.mrb[0].mxu0
      %4051 = vdwg.mxu0
      %4084 = vrot.lane.b32.xlu0 %v3894, 8
      %v4085 = vpop.permute.xlu0 %4084
      %4086 = vrot.lane.b32.xlu0 %v3899, 8
      %v4087 = vpop.permute.xlu0 %4086
      %4088 = vrot.lane.b32.xlu0 %v3904, 8
      %v4089 = vpop.permute.xlu0 %4088
      %4090 = vrot.lane.b32.xlu0 %v3909, 8
      %v4091 = vpop.permute.xlu0 %4090
      %4092 = vrot.lane.b32.xlu0 %v3914, 8
      %v4093 = vpop.permute.xlu0 %4092
      %4094 = vrot.lane.b32.xlu0 %v3919, 8
      %v4095 = vpop.permute.xlu0 %4094
      %4096 = vrot.lane.b32.xlu0 %v3924, 8
      %v4097 = vpop.permute.xlu0 %4096
      %4098 = vrot.lane.b32.xlu0 %v3929, 8
      %v4099 = vpop.permute.xlu0 %4098
      %4100 = vrot.lane.b32.xlu0 %v3934, 8
      %v4101 = vpop.permute.xlu0 %4100
      %4102 = vrot.lane.b32.xlu0 %v3939, 8
      %v4103 = vpop.permute.xlu0 %4102
      %4104 = vrot.lane.b32.xlu0 %v3944, 8
      %v4105 = vpop.permute.xlu0 %4104
      %4106 = vrot.lane.b32.xlu0 %v3949, 8
      %v4107 = vpop.permute.xlu0 %4106
      %4108 = vrot.lane.b32.xlu0 %v3954, 8
      %v4109 = vpop.permute.xlu0 %4108
      %4110 = vrot.lane.b32.xlu0 %v3959, 8
      %v4111 = vpop.permute.xlu0 %4110
      %4112 = vrot.lane.b32.xlu0 %v3964, 8
      %v4113 = vpop.permute.xlu0 %4112
      %4114 = vrot.lane.b32.xlu0 %v3969, 8
      %v4115 = vpop.permute.xlu0 %4114
      %4116 = vrot.lane.b32.xlu0 %v3974, 8
      %v4117 = vpop.permute.xlu0 %4116
      %4118 = vrot.lane.b32.xlu0 %v3979, 8
      %v4119 = vpop.permute.xlu0 %4118
      %4120 = vrot.lane.b32.xlu0 %v3984, 8
      %v4121 = vpop.permute.xlu0 %4120
      %4122 = vrot.lane.b32.xlu0 %v3989, 8
      %v4123 = vpop.permute.xlu0 %4122
      %4124 = vrot.lane.b32.xlu0 %v3994, 8
      %v4125 = vpop.permute.xlu0 %4124
      %4126 = vrot.lane.b32.xlu0 %v3999, 8
      %v4127 = vpop.permute.xlu0 %4126
      %4128 = vrot.lane.b32.xlu0 %v4004, 8
      %v4129 = vpop.permute.xlu0 %4128
      %4130 = vrot.lane.b32.xlu0 %v4009, 8
      %v4131 = vpop.permute.xlu0 %4130
      %4132 = vrot.lane.b32.xlu0 %v4014, 8
      %v4133 = vpop.permute.xlu0 %4132
      %4134 = vrot.lane.b32.xlu0 %v4019, 8
      %v4135 = vpop.permute.xlu0 %4134
      %4136 = vrot.lane.b32.xlu0 %v4024, 8
      %v4137 = vpop.permute.xlu0 %4136
      %4138 = vrot.lane.b32.xlu0 %v4029, 8
      %v4139 = vpop.permute.xlu0 %4138
      %4140 = vrot.lane.b32.xlu0 %v4034, 8
      %v4141 = vpop.permute.xlu0 %4140
      %4142 = vrot.lane.b32.xlu0 %v4039, 8
      %v4143 = vpop.permute.xlu0 %4142
      %4144 = vrot.lane.b32.xlu0 %v4044, 8
      %v4145 = vpop.permute.xlu0 %4144
      %4146 = vrot.lane.b32.xlu0 %v4049, 8
      %v4147 = vpop.permute.xlu0 %4146
      %v4180 = vsel %vm827, %v3058, %v4085
      %v4181 = vsel %vm827, %v3063, %v4087
      %v4182 = vsel %vm827, %v3068, %v4089
      %v4183 = vsel %vm827, %v3073, %v4091
      %v4184 = vsel %vm827, %v3078, %v4093
      %v4185 = vsel %vm827, %v3083, %v4095
      %v4186 = vsel %vm827, %v3088, %v4097
      %v4187 = vsel %vm827, %v3093, %v4099
      %v4188 = vsel %vm827, %v3098, %v4101
      %v4189 = vsel %vm827, %v3103, %v4103
      %v4190 = vsel %vm827, %v3108, %v4105
      %v4191 = vsel %vm827, %v3113, %v4107
      %v4192 = vsel %vm827, %v3118, %v4109
      %v4193 = vsel %vm827, %v3123, %v4111
      %v4194 = vsel %vm827, %v3128, %v4113
      %v4195 = vsel %vm827, %v3133, %v4115
      %v4196 = vsel %vm827, %v3138, %v4117
      %v4197 = vsel %vm827, %v3143, %v4119
      %v4198 = vsel %vm827, %v3148, %v4121
      %v4199 = vsel %vm827, %v3153, %v4123
      %v4200 = vsel %vm827, %v3158, %v4125
      %v4201 = vsel %vm827, %v3163, %v4127
      %v4202 = vsel %vm827, %v3168, %v4129
      %v4203 = vsel %vm827, %v3173, %v4131
      %v4204 = vsel %vm827, %v3178, %v4133
      %v4205 = vsel %vm827, %v3183, %v4135
      %v4206 = vsel %vm827, %v3188, %v4137
      %v4207 = vsel %vm827, %v3193, %v4139
      %v4208 = vsel %vm827, %v3198, %v4141
      %v4209 = vsel %vm827, %v3203, %v4143
      %v4210 = vsel %vm827, %v3208, %v4145
      %v4211 = vsel %vm827, %v3213, %v4147
      %v4212 = vadd.f32 %v4180, %v2217
      %v4213 = vadd.f32 %v4181, %v2217
      %v4214 = vadd.f32 %v4182, %v2217
      %v4215 = vadd.f32 %v4183, %v2217
      %v4216 = vadd.f32 %v4184, %v2217
      %v4217 = vadd.f32 %v4185, %v2217
      %v4218 = vadd.f32 %v4186, %v2217
      %v4219 = vadd.f32 %v4187, %v2217
      %v4220 = vadd.f32 %v4188, %v2217
      %v4221 = vadd.f32 %v4189, %v2217
      %v4222 = vadd.f32 %v4190, %v2217
      %v4223 = vadd.f32 %v4191, %v2217
      %v4224 = vadd.f32 %v4192, %v2217
      %v4225 = vadd.f32 %v4193, %v2217
      %v4226 = vadd.f32 %v4194, %v2217
      %v4227 = vadd.f32 %v4195, %v2217
      %v4228 = vadd.f32 %v4196, %v2217
      %v4229 = vadd.f32 %v4197, %v2217
      %v4230 = vadd.f32 %v4198, %v2217
      %v4231 = vadd.f32 %v4199, %v2217
      %v4232 = vadd.f32 %v4200, %v2217
      %v4233 = vadd.f32 %v4201, %v2217
      %v4234 = vadd.f32 %v4202, %v2217
      %v4235 = vadd.f32 %v4203, %v2217
      %v4236 = vadd.f32 %v4204, %v2217
      %v4237 = vadd.f32 %v4205, %v2217
      %v4238 = vadd.f32 %v4206, %v2217
      %v4239 = vadd.f32 %v4207, %v2217
      %v4240 = vadd.f32 %v4208, %v2217
      %v4241 = vadd.f32 %v4209, %v2217
      %v4242 = vadd.f32 %v4210, %v2217
      %v4243 = vadd.f32 %v4211, %v2217
      %s4244 = scalar_lea.vmem %s170, 16
      %4245 = vst.msk [vmem:[%s4244] sm:$0xff] %vm895, %v4212
      %4246 = vst.msk [vmem:[%s4244 + $0x8] sm:$0xff] %vm895, %v4213
      %4247 = vst.msk [vmem:[%s4244 + $0x20] sm:$0xff] %vm895, %v4214
      %4248 = vst.msk [vmem:[%s4244 + $0x28] sm:$0xff] %vm895, %v4215
      %4249 = vst.msk [vmem:[%s4244 + $0x40] sm:$0xff] %vm895, %v4216
      %4250 = vst.msk [vmem:[%s4244 + $0x48] sm:$0xff] %vm895, %v4217
      %4251 = vst.msk [vmem:[%s4244 + $0x60] sm:$0xff] %vm895, %v4218
      %4252 = vst.msk [vmem:[%s4244 + $0x68] sm:$0xff] %vm895, %v4219
      %4253 = vst.msk [vmem:[%s4244 + $0x80] sm:$0xff] %vm895, %v4220
      %4254 = vst.msk [vmem:[%s4244 + $0x88] sm:$0xff] %vm895, %v4221
      %4255 = vst.msk [vmem:[%s4244 + $0xa0] sm:$0xff] %vm895, %v4222
      %4256 = vst.msk [vmem:[%s4244 + $0xa8] sm:$0xff] %vm895, %v4223
      %4257 = vst.msk [vmem:[%s4244 + $0xc0] sm:$0xff] %vm895, %v4224
      %4258 = vst.msk [vmem:[%s4244 + $0xc8] sm:$0xff] %vm895, %v4225
      %4259 = vst.msk [vmem:[%s4244 + $0xe0] sm:$0xff] %vm895, %v4226
      %4260 = vst.msk [vmem:[%s4244 + $0xe8] sm:$0xff] %vm895, %v4227
      %4261 = vst.msk [vmem:[%s4244 + $0x100] sm:$0xff] %vm895, %v4228
      %4262 = vst.msk [vmem:[%s4244 + $0x108] sm:$0xff] %vm895, %v4229
      %4263 = vst.msk [vmem:[%s4244 + $0x120] sm:$0xff] %vm895, %v4230
      %4264 = vst.msk [vmem:[%s4244 + $0x128] sm:$0xff] %vm895, %v4231
      %4265 = vst.msk [vmem:[%s4244 + $0x140] sm:$0xff] %vm895, %v4232
      %4266 = vst.msk [vmem:[%s4244 + $0x148] sm:$0xff] %vm895, %v4233
      %4267 = vst.msk [vmem:[%s4244 + $0x160] sm:$0xff] %vm895, %v4234
      %4268 = vst.msk [vmem:[%s4244 + $0x168] sm:$0xff] %vm895, %v4235
      %4269 = vst.msk [vmem:[%s4244 + $0x180] sm:$0xff] %vm895, %v4236
      %4270 = vst.msk [vmem:[%s4244 + $0x188] sm:$0xff] %vm895, %v4237
      %4271 = vst.msk [vmem:[%s4244 + $0x1a0] sm:$0xff] %vm895, %v4238
      %4272 = vst.msk [vmem:[%s4244 + $0x1a8] sm:$0xff] %vm895, %v4239
      %4273 = vst.msk [vmem:[%s4244 + $0x1c0] sm:$0xff] %vm895, %v4240
      %4274 = vst.msk [vmem:[%s4244 + $0x1c8] sm:$0xff] %vm895, %v4241
      %4275 = vst.msk [vmem:[%s4244 + $0x1e0] sm:$0xff] %vm895, %v4242
      %4276 = vst.msk [vmem:[%s4244 + $0x1e8] sm:$0xff] %vm895, %v4243
      %p4277 = scmp.lt.s32.totalorder %s14, 1
      %s4278 = scalar_select %p4277, %s14, 1
      %s4279 = smul.addr %s4278, 64
      %s4280 = smul.addr %s4279, 8
      %s4281 = scalar_lea.vmem %s3, %s4280
      // Predicated region
      $region33: #{upsample_layer_conv.1} parent=31 // pred_check
        %p4282 = pneg %p100
      $region34: #{upsample_layer_conv.1} parent=31 // pred_check_branch
        %4284 = sbr.rel (%p4282) target = $region36
      $region35: #{upsample_layer_conv.1} parent=31 // pred_region
        _
      $region36: #{upsample_layer_conv.1} parent=31 // pred_fallthru
        _
    $region32: #{upsample_layer_conv.1} parent=5 // pred_fallthru
      _
    %p4285 = scmp.le.s32.totalorder 2, %s9
    // Predicated region
    $region37: #{upsample_layer_conv.1} parent=5 // pred_check
      %p4286 = pneg %p4285
    $region38: #{upsample_layer_conv.1} parent=5 // pred_check_branch
      %4288 = sbr.rel (%p4286) target = $region40
    $region39: #{upsample_layer_conv.1} parent=5 // pred_region
      %s4289 = ssub.s32 %s9, 2
      // Predicated region
      $region41: #{upsample_layer_conv.1} parent=39 // pred_check
        %p4290 = pneg %p106
      $region42: #{upsample_layer_conv.1} parent=39 // pred_check_branch
        %4292 = sbr.rel (%p4290) target = $region44
      $region43: #{upsample_layer_conv.1} parent=39 // pred_region
        %p4293 = scmp.lt.s32.totalorder %s15, 1
        %s4294 = scalar_select %p4293, %s15, 1
        %s4295 = smul.addr %s4294, 64
        %s4296 = smul.addr %s4295, 8
        %s4297 = scalar_lea.vmem %s3, %s4296
      $region44: #{upsample_layer_conv.1} parent=39 // pred_fallthru
        _
    $region40: #{upsample_layer_conv.1} parent=5 // pred_fallthru
      _
  $region6: #{upsample_layer_conv.1} parent=0 // loop_footer
    %s13 = sadd.s32 1, %s9
  $region7: #{upsample_layer_conv.1} parent=0 // loop_footer_branch
    %8 = sbr.rel target = $region3
  $region8: #{upsample_layer_conv.1} parent=0 // loop_exit
    _

</llo_original>
